<compile_context>
chip_gen: v5e
topology: v5e:2x2
jax: 0.10.0
libtpu: 0.0.40
codegen_flags: <defaults>
</compile_context>

<pallas_src>
import jax
import jax.numpy as jnp
from jax.experimental import pallas as pl
from jax.experimental.pallas import tpu as pltpu

EPS = 1e-5
K_IN = 28 * 28      # 784 input features (unpadded; full-extent block)
H1 = 256
H2 = 64             # logical width of the second hidden layer
H2_PAD = 128        # lane-dense padded width used inside the kernel
N_OUT = 10
N_PAD = 128         # lane-dense padded output width
MAX_BATCH = 2048    # whole-batch-in-VMEM fast path (see TODO above)


def mlp_kernel(x_ref,                       # (B, 784)    f32
               w1_ref, g1_ref, be1_ref,     # (784, 256) bf16, (1, 256) f32 x2
               w2_ref, g2_ref, be2_ref,     # (256, 128) bf16, (1, 128) f32 x2
               w3_ref, b3_ref,              # (128, 128) bf16, (1, 128) f32
               o_ref):                      # (B, 128)    f32
    """Entire forward pass in one grid step; everything VMEM-resident."""
    inv_b = 1.0 / x_ref.shape[0]

    def bn_relu(h, g_ref, be_ref):
        # Training-mode BatchNorm1d: biased variance over the batch, centered
        # (two-pass) for numerical parity with PyTorch, then affine + ReLU.
        mean = jnp.sum(h, axis=0, keepdims=True) * inv_b
        c = h - mean
        var = jnp.sum(c * c, axis=0, keepdims=True) * inv_b
        scale = g_ref[...] * jax.lax.rsqrt(var + EPS)
        return jnp.maximum(c * scale + be_ref[...], 0.0)

    # Layer 1: Linear(784->256).  The Linear bias is dropped: a constant
    # per-feature shift before training-mode BN is cancelled by the mean
    # subtraction.  bf16 MXU operands, f32 accumulation.
    h1 = jnp.dot(x_ref[...].astype(jnp.bfloat16), w1_ref[...],
                 preferred_element_type=jnp.float32)
    a1 = bn_relu(h1, g1_ref, be1_ref)

    # Layer 2: Linear(256->64) padded to 128 lanes (bias dropped, cancelled by
    # BN2).  Padded columns have zero weights/gamma/beta -> stay exactly zero.
    h2 = jnp.dot(a1.astype(jnp.bfloat16), w2_ref[...],
                 preferred_element_type=jnp.float32)
    a2 = bn_relu(h2, g2_ref, be2_ref)

    # Layer 3: Linear(64->10) padded to 128 output lanes; bias kept (no BN).
    o_ref[...] = jnp.dot(a2.astype(jnp.bfloat16), w3_ref[...],
                         preferred_element_type=jnp.float32) + b3_ref[...]


def mlp_forward(x, p):
    """x: (B, 784) float32, p: prepare_params output.

    Returns the lane-dense padded logits slab (B, N_PAD); columns
    N_OUT..N_PAD-1 are zero.  Slice [:, :N_OUT] downstream if needed.
    """
    B, F = x.shape
    assert F == K_IN, f"expected {K_IN} input features, got {F}"
    assert B <= MAX_BATCH, (
        f"batch {B} > {MAX_BATCH}: whole-batch VMEM path would risk VMEM OOM "
        "(64 MiB on v7x); use a batch-tiled variant instead")

    return pl.pallas_call(
        mlp_kernel,
        out_shape=jax.ShapeDtypeStruct((B, N_PAD), jnp.float32),
        compiler_params=pltpu.CompilerParams(
            vmem_limit_bytes=32 * 1024 * 1024,
        ),
    )(x,
      p["w1"], p["g1"], p["be1"],
      p["w2"], p["g2"], p["be2"],
      p["w3"], p["b3"])


def init_params(key):
    """Deterministic synthetic parameters matching the PyTorch module shapes."""
    ks = jax.random.split(key, 6)

    def linear(kw, kb, fan_in, fan_out):
        bound = 1.0 / jnp.sqrt(jnp.float32(fan_in))
        w = jax.random.uniform(kw, (fan_in, fan_out), jnp.float32, -bound, bound)
        b = jax.random.uniform(kb, (1, fan_out), jnp.float32, -bound, bound)
        return w, b

    w1, b1 = linear(ks[0], ks[1], K_IN, H1)
    w2, b2 = linear(ks[2], ks[3], H1, H2)
    w3, b3 = linear(ks[4], ks[5], H2, N_OUT)
    return {
        "w1": w1, "b1": b1,
        "g1": jnp.ones((1, H1), jnp.float32), "be1": jnp.zeros((1, H1), jnp.float32),
        "w2": w2, "b2": b2,
        "g2": jnp.ones((1, H2), jnp.float32), "be2": jnp.zeros((1, H2), jnp.float32),
        "w3": w3, "b3": b3,
    }


def prepare_params(params):
    """Kernel-ready params: bf16 matmul weights, H2 padded 64->128,
    output padded 10->128.  b1/b2 are intentionally dropped (cancelled by BN)."""
    p = {}
    p["w1"] = params["w1"].astype(jnp.bfloat16)                                    # (784, 256)
    p["g1"] = params["g1"]                                                         # (1, 256)
    p["be1"] = params["be1"]                                                       # (1, 256)
    p["w2"] = jnp.pad(params["w2"], ((0, 0), (0, H2_PAD - H2))).astype(jnp.bfloat16)   # (256, 128)
    p["g2"] = jnp.pad(params["g2"], ((0, 0), (0, H2_PAD - H2)))                    # (1, 128)
    p["be2"] = jnp.pad(params["be2"], ((0, 0), (0, H2_PAD - H2)))                  # (1, 128)
    p["w3"] = jnp.pad(params["w3"],
                      ((0, H2_PAD - H2), (0, N_PAD - N_OUT))).astype(jnp.bfloat16)  # (128, 128)
    p["b3"] = jnp.pad(params["b3"], ((0, 0), (0, N_PAD - N_OUT)))                  # (1, 128)
    return p


def reference_forward(x, p):
    """Pure-JAX reference with full PyTorch semantics (biases included, centered
    biased variance); bf16 matmuls to mirror kernel precision."""
    def dot_bf16(a, b):
        return jnp.dot(a.astype(jnp.bfloat16), b.astype(jnp.bfloat16),
                       preferred_element_type=jnp.float32)

    def bn_relu(h, g, be):
        mean = jnp.mean(h, axis=0, keepdims=True)
        var = jnp.mean((h - mean) ** 2, axis=0, keepdims=True)
        return jnp.maximum((h - mean) * (g * jax.lax.rsqrt(var + EPS)) + be, 0.0)

    h1 = dot_bf16(x, p["w1"]) + p["b1"]
    a1 = bn_relu(h1, p["g1"], p["be1"])
    h2 = dot_bf16(a1, p["w2"]) + p["b2"]
    a2 = bn_relu(h2, p["g2"], p["be2"])
    return dot_bf16(a2, p["w3"]) + p["b3"]


if __name__ == "__main__":
    key = jax.random.PRNGKey(0)
    k_x, k_p = jax.random.split(key)

    B = 256
    x = jax.random.normal(k_x, (B, K_IN), dtype=jnp.float32)

    params = init_params(k_p)
    prepped = prepare_params(params)

    out_padded = jax.block_until_ready(mlp_forward(x, prepped))
    assert out_padded.shape == (B, N_PAD)
    out = out_padded[:, :N_OUT]

    ref = reference_forward(x, params)
    max_err = float(jnp.max(jnp.abs(out - ref)))
    assert jnp.allclose(out, ref, atol=2e-2, rtol=2e-2), \
        f"mismatch vs JAX reference: max_err={max_err}"

    print("KERNEL_OK")
</pallas_src>

<mosaic_0001>
module attributes {stable_mosaic.version = 11 : i64} {
  func.func @mlp_kernel(%arg0: memref<256x784xf32, #tpu.memory_space<vmem>>, %arg1: memref<784x256xbf16, #tpu.memory_space<vmem>>, %arg2: memref<1x256xf32, #tpu.memory_space<vmem>>, %arg3: memref<1x256xf32, #tpu.memory_space<vmem>>, %arg4: memref<256x128xbf16, #tpu.memory_space<vmem>>, %arg5: memref<1x128xf32, #tpu.memory_space<vmem>>, %arg6: memref<1x128xf32, #tpu.memory_space<vmem>>, %arg7: memref<128x128xbf16, #tpu.memory_space<vmem>>, %arg8: memref<1x128xf32, #tpu.memory_space<vmem>>, %arg9: memref<256x128xf32, #tpu.memory_space<vmem>>) attributes {dimension_semantics = [], scalar_prefetch = 0 : i64, scratch_operands = 0 : i64, tpu.core_type = #tpu.core_type<tc>} {
    %c0 = arith.constant 0 : index
    %c0_0 = arith.constant 0 : index
    %0 = vector.load %arg0[%c0, %c0_0] : memref<256x784xf32, #tpu.memory_space<vmem>>, vector<256x784xf32>
    %1 = arith.truncf %0 : vector<256x784xf32> to vector<256x784xbf16>
    %c0_1 = arith.constant 0 : index
    %c0_2 = arith.constant 0 : index
    %2 = vector.load %arg1[%c0_1, %c0_2] : memref<784x256xbf16, #tpu.memory_space<vmem>>, vector<784x256xbf16>
    %cst = arith.constant dense<0.000000e+00> : vector<256x256xf32>
    %3 = tpu.matmul %1, %2, %cst {dimension_numbers = #tpu.dot_dimension_numbers<[1], [0], [0], [1], [0, 0, 1, 1], [], []>} : vector<256x784xbf16>, vector<784x256xbf16>, vector<256x256xf32> -> vector<256x256xf32>
    %cst_3 = arith.constant dense<0.000000e+00> : vector<256xf32>
    %4 = vector.multi_reduction <add>, %3, %cst_3 [0] : vector<256x256xf32> to vector<256xf32>
    %5 = vector.shape_cast %4 : vector<256xf32> to vector<1x256xf32>
    %cst_4 = arith.constant 3.906250e-03 : f32
    %6 = vector.broadcast %cst_4 : f32 to vector<1x256xf32>
    %7 = arith.mulf %5, %6 : vector<1x256xf32>
    %8 = vector.broadcast %7 : vector<1x256xf32> to vector<256x256xf32>
    %9 = arith.subf %3, %8 : vector<256x256xf32>
    %10 = arith.mulf %9, %9 : vector<256x256xf32>
    %cst_5 = arith.constant dense<0.000000e+00> : vector<256xf32>
    %11 = vector.multi_reduction <add>, %10, %cst_5 [0] : vector<256x256xf32> to vector<256xf32>
    %12 = vector.shape_cast %11 : vector<256xf32> to vector<1x256xf32>
    %cst_6 = arith.constant 3.906250e-03 : f32
    %13 = vector.broadcast %cst_6 : f32 to vector<1x256xf32>
    %14 = arith.mulf %12, %13 : vector<1x256xf32>
    %c0_7 = arith.constant 0 : index
    %c0_8 = arith.constant 0 : index
    %15 = vector.load %arg2[%c0_7, %c0_8] : memref<1x256xf32, #tpu.memory_space<vmem>>, vector<1x256xf32>
    %cst_9 = arith.constant 9.99999974E-6 : f32
    %16 = vector.broadcast %cst_9 : f32 to vector<1x256xf32>
    %17 = arith.addf %14, %16 : vector<1x256xf32>
    %18 = math.rsqrt %17 : vector<1x256xf32>
    %19 = arith.mulf %15, %18 : vector<1x256xf32>
    %20 = vector.broadcast %19 : vector<1x256xf32> to vector<256x256xf32>
    %21 = arith.mulf %9, %20 : vector<256x256xf32>
    %c0_10 = arith.constant 0 : index
    %c0_11 = arith.constant 0 : index
    %22 = vector.load %arg3[%c0_10, %c0_11] : memref<1x256xf32, #tpu.memory_space<vmem>>, vector<1x256xf32>
    %23 = vector.broadcast %22 : vector<1x256xf32> to vector<256x256xf32>
    %24 = arith.addf %21, %23 : vector<256x256xf32>
    %cst_12 = arith.constant 0.000000e+00 : f32
    %25 = vector.broadcast %cst_12 : f32 to vector<256x256xf32>
    %26 = arith.maximumf %24, %25 : vector<256x256xf32>
    %27 = arith.truncf %26 : vector<256x256xf32> to vector<256x256xbf16>
    %c0_13 = arith.constant 0 : index
    %c0_14 = arith.constant 0 : index
    %28 = vector.load %arg4[%c0_13, %c0_14] : memref<256x128xbf16, #tpu.memory_space<vmem>>, vector<256x128xbf16>
    %cst_15 = arith.constant dense<0.000000e+00> : vector<256x128xf32>
    %29 = tpu.matmul %27, %28, %cst_15 {dimension_numbers = #tpu.dot_dimension_numbers<[1], [0], [0], [1], [0, 0, 1, 1], [], []>} : vector<256x256xbf16>, vector<256x128xbf16>, vector<256x128xf32> -> vector<256x128xf32>
    %cst_16 = arith.constant dense<0.000000e+00> : vector<128xf32>
    %30 = vector.multi_reduction <add>, %29, %cst_16 [0] : vector<256x128xf32> to vector<128xf32>
    %31 = vector.shape_cast %30 : vector<128xf32> to vector<1x128xf32>
    %cst_17 = arith.constant 3.906250e-03 : f32
    %32 = vector.broadcast %cst_17 : f32 to vector<1x128xf32>
    %33 = arith.mulf %31, %32 : vector<1x128xf32>
    %34 = vector.broadcast %33 : vector<1x128xf32> to vector<256x128xf32>
    %35 = arith.subf %29, %34 : vector<256x128xf32>
    %36 = arith.mulf %35, %35 : vector<256x128xf32>
    %cst_18 = arith.constant dense<0.000000e+00> : vector<128xf32>
    %37 = vector.multi_reduction <add>, %36, %cst_18 [0] : vector<256x128xf32> to vector<128xf32>
    %38 = vector.shape_cast %37 : vector<128xf32> to vector<1x128xf32>
    %cst_19 = arith.constant 3.906250e-03 : f32
    %39 = vector.broadcast %cst_19 : f32 to vector<1x128xf32>
    %40 = arith.mulf %38, %39 : vector<1x128xf32>
    %c0_20 = arith.constant 0 : index
    %c0_21 = arith.constant 0 : index
    %41 = vector.load %arg5[%c0_20, %c0_21] : memref<1x128xf32, #tpu.memory_space<vmem>>, vector<1x128xf32>
    %cst_22 = arith.constant 9.99999974E-6 : f32
    %42 = vector.broadcast %cst_22 : f32 to vector<1x128xf32>
    %43 = arith.addf %40, %42 : vector<1x128xf32>
    %44 = math.rsqrt %43 : vector<1x128xf32>
    %45 = arith.mulf %41, %44 : vector<1x128xf32>
    %46 = vector.broadcast %45 : vector<1x128xf32> to vector<256x128xf32>
    %47 = arith.mulf %35, %46 : vector<256x128xf32>
    %c0_23 = arith.constant 0 : index
    %c0_24 = arith.constant 0 : index
    %48 = vector.load %arg6[%c0_23, %c0_24] : memref<1x128xf32, #tpu.memory_space<vmem>>, vector<1x128xf32>
    %49 = vector.broadcast %48 : vector<1x128xf32> to vector<256x128xf32>
    %50 = arith.addf %47, %49 : vector<256x128xf32>
    %cst_25 = arith.constant 0.000000e+00 : f32
    %51 = vector.broadcast %cst_25 : f32 to vector<256x128xf32>
    %52 = arith.maximumf %50, %51 : vector<256x128xf32>
    %53 = arith.truncf %52 : vector<256x128xf32> to vector<256x128xbf16>
    %c0_26 = arith.constant 0 : index
    %c0_27 = arith.constant 0 : index
    %54 = vector.load %arg7[%c0_26, %c0_27] : memref<128x128xbf16, #tpu.memory_space<vmem>>, vector<128x128xbf16>
    %cst_28 = arith.constant dense<0.000000e+00> : vector<256x128xf32>
    %55 = tpu.matmul %53, %54, %cst_28 {dimension_numbers = #tpu.dot_dimension_numbers<[1], [0], [0], [1], [0, 0, 1, 1], [], []>} : vector<256x128xbf16>, vector<128x128xbf16>, vector<256x128xf32> -> vector<256x128xf32>
    %c0_29 = arith.constant 0 : index
    %c0_30 = arith.constant 0 : index
    %56 = vector.load %arg8[%c0_29, %c0_30] : memref<1x128xf32, #tpu.memory_space<vmem>>, vector<1x128xf32>
    %57 = vector.broadcast %56 : vector<1x128xf32> to vector<256x128xf32>
    %58 = arith.addf %55, %57 : vector<256x128xf32>
    %c0_31 = arith.constant 0 : index
    %c0_32 = arith.constant 0 : index
    %59 = vector.load %arg9[%c0_31, %c0_32] : memref<256x128xf32, #tpu.memory_space<vmem>>, vector<256x128xf32>
    tpu.vector_store %arg9[%c0_31, %c0_32], %58 {strides = array<i32>} : memref<256x128xf32, #tpu.memory_space<vmem>>, vector<256x128xf32>,
    return
  }
}

</mosaic_0001>

<llo_original>
// kernel: tpu_custom_call.1
$region0: #{tpu_custom_call.1}
  #allocation0 [shape = 'u32[]', space=smem, size = 0x4, offset = 0x4, fixed_abs, tag = 'smem constant byte address 0x4 - core index']
  #allocation1 [shape = 'u32[72,128]{1,0:T(1,128)}', space=vmem, size = 0x9000, scoped, tag = 'internal scratch']
  %s0 = inlined_call_operand.vmem [shape: f32[256,784], index: 0, kind: input, shape index: {}]
  %s1 = inlined_call_operand.vmem [shape: bf16[784,256], index: 1, kind: input, shape index: {}]
  %s2 = inlined_call_operand.vmem [shape: f32[1,256], index: 2, kind: input, shape index: {}]
  %s3 = inlined_call_operand.vmem [shape: f32[1,256], index: 3, kind: input, shape index: {}]
  %s4 = inlined_call_operand.vmem [shape: bf16[256,128], index: 4, kind: input, shape index: {}]
  %s5 = inlined_call_operand.vmem [shape: f32[1,128], index: 5, kind: input, shape index: {}]
  %s6 = inlined_call_operand.vmem [shape: f32[1,128], index: 6, kind: input, shape index: {}]
  %s7 = inlined_call_operand.vmem [shape: bf16[128,128], index: 7, kind: input, shape index: {}]
  %s8 = inlined_call_operand.vmem [shape: f32[1,128], index: 8, kind: input, shape index: {}]
  %s9 = inlined_call_operand.hbm [shape: f32[256,128], index: 9, kind: output, shape index: {}]
  %s10 = sld [smem:[#allocation0]]
  $region46: #{tpu_custom_call.1} parent=0
    _
  %s12 = ssub.s32 1, %s10
  %s13 = scalar_select 0, %s12, %s10
  $region1: #{tpu_custom_call.1} parent=0
    #allocation2 [shape = 'u8[131072]{0}', space=vmem, size = 0x20000, scoped, tag = 'output window, operand 0, single buffered']
    #allocation3 [shape = 's32[1]{0}', space=sflag, size = 0x4, scoped, tag = 'scoped memory for tpu_custom_call.1']
    %14 = vsyncpa [#allocation3], 0
    // Predicated region
    $region2: #{tpu_custom_call.1} parent=1 // pred_check
      _
    $region3: #{tpu_custom_call.1} parent=1 // pred_check_branch
      %16 = sbr.rel (0) target = $region5
    $region4: #{tpu_custom_call.1} parent=1 // pred_region
      _
    $region5: #{tpu_custom_call.1} parent=1 // pred_fallthru
      _
    // Predicated region
    $region6: #{tpu_custom_call.1} parent=1 // pred_check
      _
    $region7: #{tpu_custom_call.1} parent=1 // pred_check_branch
      %18 = sbr.rel (0) target = $region9
    $region8: #{tpu_custom_call.1} parent=1 // pred_region
      _
    $region9: #{tpu_custom_call.1} parent=1 // pred_fallthru
      _
    // Predicated region
    $region10: #{tpu_custom_call.1} parent=1 // pred_check
      _
    $region11: #{tpu_custom_call.1} parent=1 // pred_check_branch
      %20 = sbr.rel (0) target = $region13
    $region12: #{tpu_custom_call.1} parent=1 // pred_region
      _
    $region13: #{tpu_custom_call.1} parent=1 // pred_fallthru
      _
    // Predicated region
    $region14: #{tpu_custom_call.1} parent=1 // pred_check
      _
    $region15: #{tpu_custom_call.1} parent=1 // pred_check_branch
      %22 = sbr.rel (0) target = $region17
    $region16: #{tpu_custom_call.1} parent=1 // pred_region
      _
    $region17: #{tpu_custom_call.1} parent=1 // pred_fallthru
      _
    // Predicated region
    $region18: #{tpu_custom_call.1} parent=1 // pred_check
      _
    $region19: #{tpu_custom_call.1} parent=1 // pred_check_branch
      %24 = sbr.rel (0) target = $region21
    $region20: #{tpu_custom_call.1} parent=1 // pred_region
      _
    $region21: #{tpu_custom_call.1} parent=1 // pred_fallthru
      _
    // Predicated region
    $region22: #{tpu_custom_call.1} parent=1 // pred_check
      _
    $region23: #{tpu_custom_call.1} parent=1 // pred_check_branch
      %26 = sbr.rel (0) target = $region25
    $region24: #{tpu_custom_call.1} parent=1 // pred_region
      _
    $region25: #{tpu_custom_call.1} parent=1 // pred_fallthru
      _
    // Predicated region
    $region26: #{tpu_custom_call.1} parent=1 // pred_check
      _
    $region27: #{tpu_custom_call.1} parent=1 // pred_check_branch
      %28 = sbr.rel (0) target = $region29
    $region28: #{tpu_custom_call.1} parent=1 // pred_region
      _
    $region29: #{tpu_custom_call.1} parent=1 // pred_fallthru
      _
    // Predicated region
    $region30: #{tpu_custom_call.1} parent=1 // pred_check
      _
    $region31: #{tpu_custom_call.1} parent=1 // pred_check_branch
      %30 = sbr.rel (0) target = $region33
    $region32: #{tpu_custom_call.1} parent=1 // pred_region
      _
    $region33: #{tpu_custom_call.1} parent=1 // pred_fallthru
      _
    // Predicated region
    $region34: #{tpu_custom_call.1} parent=1 // pred_check
      _
    $region35: #{tpu_custom_call.1} parent=1 // pred_check_branch
      %32 = sbr.rel (0) target = $region37
    $region36: #{tpu_custom_call.1} parent=1 // pred_region
      _
    $region37: #{tpu_custom_call.1} parent=1 // pred_fallthru
      _
    %v34 = vld [vmem:[%s0] sm:$0xff]
    %v35 = vld [vmem:[%s0 + $0x8] sm:$0xff]
    %v36 = vld [vmem:[%s0 + $0x10] sm:$0xff]
    %v37 = vld [vmem:[%s0 + $0x18] sm:$0xff]
    %v38 = vld [vmem:[%s0 + $0x20] sm:$0xff]
    %v39 = vld [vmem:[%s0 + $0x28] sm:$0xff]
    %v40 = vld [vmem:[%s0 + $0x30] sm:$0xff]
    %v41 = vld [vmem:[%s0 + $0x38] sm:$0xff]
    %v42 = vld [vmem:[%s0 + $0x40] sm:$0xff]
    %v43 = vld [vmem:[%s0 + $0x48] sm:$0xff]
    %v44 = vld [vmem:[%s0 + $0x50] sm:$0xff]
    %v45 = vld [vmem:[%s0 + $0x58] sm:$0xff]
    %v46 = vld [vmem:[%s0 + $0x60] sm:$0xff]
    %v47 = vld [vmem:[%s0 + $0x68] sm:$0xff]
    %v48 = vld [vmem:[%s0 + $0x70] sm:$0xff]
    %v49 = vld [vmem:[%s0 + $0x78] sm:$0xff]
    %v50 = vld [vmem:[%s0 + $0x80] sm:$0xff]
    %v51 = vld [vmem:[%s0 + $0x88] sm:$0xff]
    %v52 = vld [vmem:[%s0 + $0x90] sm:$0xff]
    %v53 = vld [vmem:[%s0 + $0x98] sm:$0xff]
    %v54 = vld [vmem:[%s0 + $0xa0] sm:$0xff]
    %v55 = vld [vmem:[%s0 + $0xa8] sm:$0xff]
    %v56 = vld [vmem:[%s0 + $0xb0] sm:$0xff]
    %v57 = vld [vmem:[%s0 + $0xb8] sm:$0xff]
    %v58 = vld [vmem:[%s0 + $0xc0] sm:$0xff]
    %v59 = vld [vmem:[%s0 + $0xc8] sm:$0xff]
    %v60 = vld [vmem:[%s0 + $0xd0] sm:$0xff]
    %v61 = vld [vmem:[%s0 + $0xd8] sm:$0xff]
    %v62 = vld [vmem:[%s0 + $0xe0] sm:$0xff]
    %v63 = vld [vmem:[%s0 + $0xe8] sm:$0xff]
    %v64 = vld [vmem:[%s0 + $0xf0] sm:$0xff]
    %v65 = vld [vmem:[%s0 + $0xf8] sm:$0xff]
    %v66 = vld [vmem:[%s0 + $0x100] sm:$0xff]
    %v67 = vld [vmem:[%s0 + $0x108] sm:$0xff]
    %v68 = vld [vmem:[%s0 + $0x110] sm:$0xff]
    %v69 = vld [vmem:[%s0 + $0x118] sm:$0xff]
    %v70 = vld [vmem:[%s0 + $0x120] sm:$0xff]
    %v71 = vld [vmem:[%s0 + $0x128] sm:$0xff]
    %v72 = vld [vmem:[%s0 + $0x130] sm:$0xff]
    %v73 = vld [vmem:[%s0 + $0x138] sm:$0xff]
    %v74 = vld [vmem:[%s0 + $0x140] sm:$0xff]
    %v75 = vld [vmem:[%s0 + $0x148] sm:$0xff]
    %v76 = vld [vmem:[%s0 + $0x150] sm:$0xff]
    %v77 = vld [vmem:[%s0 + $0x158] sm:$0xff]
    %v78 = vld [vmem:[%s0 + $0x160] sm:$0xff]
    %v79 = vld [vmem:[%s0 + $0x168] sm:$0xff]
    %v80 = vld [vmem:[%s0 + $0x170] sm:$0xff]
    %v81 = vld [vmem:[%s0 + $0x178] sm:$0xff]
    %v82 = vld [vmem:[%s0 + $0x180] sm:$0xff]
    %v83 = vld [vmem:[%s0 + $0x188] sm:$0xff]
    %v84 = vld [vmem:[%s0 + $0x190] sm:$0xff]
    %v85 = vld [vmem:[%s0 + $0x198] sm:$0xff]
    %v86 = vld [vmem:[%s0 + $0x1a0] sm:$0xff]
    %v87 = vld [vmem:[%s0 + $0x1a8] sm:$0xff]
    %v88 = vld [vmem:[%s0 + $0x1b0] sm:$0xff]
    %v89 = vld [vmem:[%s0 + $0x1b8] sm:$0xff]
    %v90 = vld [vmem:[%s0 + $0x1c0] sm:$0xff]
    %v91 = vld [vmem:[%s0 + $0x1c8] sm:$0xff]
    %v92 = vld [vmem:[%s0 + $0x1d0] sm:$0xff]
    %v93 = vld [vmem:[%s0 + $0x1d8] sm:$0xff]
    %v94 = vld [vmem:[%s0 + $0x1e0] sm:$0xff]
    %v95 = vld [vmem:[%s0 + $0x1e8] sm:$0xff]
    %v96 = vld [vmem:[%s0 + $0x1f0] sm:$0xff]
    %v97 = vld [vmem:[%s0 + $0x1f8] sm:$0xff]
    %v98 = vld [vmem:[%s0 + $0x200] sm:$0xff]
    %v99 = vld [vmem:[%s0 + $0x208] sm:$0xff]
    %v100 = vld [vmem:[%s0 + $0x210] sm:$0xff]
    %v101 = vld [vmem:[%s0 + $0x218] sm:$0xff]
    %v102 = vld [vmem:[%s0 + $0x220] sm:$0xff]
    %v103 = vld [vmem:[%s0 + $0x228] sm:$0xff]
    %v104 = vld [vmem:[%s0 + $0x230] sm:$0xff]
    %v105 = vld [vmem:[%s0 + $0x238] sm:$0xff]
    %v106 = vld [vmem:[%s0 + $0x240] sm:$0xff]
    %v107 = vld [vmem:[%s0 + $0x248] sm:$0xff]
    %v108 = vld [vmem:[%s0 + $0x250] sm:$0xff]
    %v109 = vld [vmem:[%s0 + $0x258] sm:$0xff]
    %v110 = vld [vmem:[%s0 + $0x260] sm:$0xff]
    %v111 = vld [vmem:[%s0 + $0x268] sm:$0xff]
    %v112 = vld [vmem:[%s0 + $0x270] sm:$0xff]
    %v113 = vld [vmem:[%s0 + $0x278] sm:$0xff]
    %v114 = vld [vmem:[%s0 + $0x280] sm:$0xff]
    %v115 = vld [vmem:[%s0 + $0x288] sm:$0xff]
    %v116 = vld [vmem:[%s0 + $0x290] sm:$0xff]
    %v117 = vld [vmem:[%s0 + $0x298] sm:$0xff]
    %v118 = vld [vmem:[%s0 + $0x2a0] sm:$0xff]
    %v119 = vld [vmem:[%s0 + $0x2a8] sm:$0xff]
    %v120 = vld [vmem:[%s0 + $0x2b0] sm:$0xff]
    %v121 = vld [vmem:[%s0 + $0x2b8] sm:$0xff]
    %v122 = vld [vmem:[%s0 + $0x2c0] sm:$0xff]
    %v123 = vld [vmem:[%s0 + $0x2c8] sm:$0xff]
    %v124 = vld [vmem:[%s0 + $0x2d0] sm:$0xff]
    %v125 = vld [vmem:[%s0 + $0x2d8] sm:$0xff]
    %v126 = vld [vmem:[%s0 + $0x2e0] sm:$0xff]
    %v127 = vld [vmem:[%s0 + $0x2e8] sm:$0xff]
    %v128 = vld [vmem:[%s0 + $0x2f0] sm:$0xff]
    %v129 = vld [vmem:[%s0 + $0x2f8] sm:$0xff]
    %v130 = vld [vmem:[%s0 + $0x300] sm:$0xff]
    %v131 = vld [vmem:[%s0 + $0x308] sm:$0xff]
    %v132 = vld [vmem:[%s0 + $0x310] sm:$0xff]
    %v133 = vld [vmem:[%s0 + $0x318] sm:$0xff]
    %v134 = vld [vmem:[%s0 + $0x320] sm:$0xff]
    %v135 = vld [vmem:[%s0 + $0x328] sm:$0xff]
    %v136 = vld [vmem:[%s0 + $0x330] sm:$0xff]
    %v137 = vld [vmem:[%s0 + $0x338] sm:$0xff]
    %v138 = vld [vmem:[%s0 + $0x340] sm:$0xff]
    %v139 = vld [vmem:[%s0 + $0x348] sm:$0xff]
    %v140 = vld [vmem:[%s0 + $0x350] sm:$0xff]
    %v141 = vld [vmem:[%s0 + $0x358] sm:$0xff]
    %v142 = vld [vmem:[%s0 + $0x360] sm:$0xff]
    %v143 = vld [vmem:[%s0 + $0x368] sm:$0xff]
    %v144 = vld [vmem:[%s0 + $0x370] sm:$0xff]
    %v145 = vld [vmem:[%s0 + $0x378] sm:$0xff]
    %v146 = vld [vmem:[%s0 + $0x380] sm:$0xff]
    %v147 = vld [vmem:[%s0 + $0x388] sm:$0xff]
    %v148 = vld [vmem:[%s0 + $0x390] sm:$0xff]
    %v149 = vld [vmem:[%s0 + $0x398] sm:$0xff]
    %v150 = vld [vmem:[%s0 + $0x3a0] sm:$0xff]
    %v151 = vld [vmem:[%s0 + $0x3a8] sm:$0xff]
    %v152 = vld [vmem:[%s0 + $0x3b0] sm:$0xff]
    %v153 = vld [vmem:[%s0 + $0x3b8] sm:$0xff]
    %v154 = vld [vmem:[%s0 + $0x3c0] sm:$0xff]
    %v155 = vld [vmem:[%s0 + $0x3c8] sm:$0xff]
    %v156 = vld [vmem:[%s0 + $0x3d0] sm:$0xff]
    %v157 = vld [vmem:[%s0 + $0x3d8] sm:$0xff]
    %v158 = vld [vmem:[%s0 + $0x3e0] sm:$0xff]
    %v159 = vld [vmem:[%s0 + $0x3e8] sm:$0xff]
    %v160 = vld [vmem:[%s0 + $0x3f0] sm:$0xff]
    %v161 = vld [vmem:[%s0 + $0x3f8] sm:$0xff]
    %v162 = vld [vmem:[%s0 + $0x400] sm:$0xff]
    %v163 = vld [vmem:[%s0 + $0x408] sm:$0xff]
    %v164 = vld [vmem:[%s0 + $0x410] sm:$0xff]
    %v165 = vld [vmem:[%s0 + $0x418] sm:$0xff]
    %v166 = vld [vmem:[%s0 + $0x420] sm:$0xff]
    %v167 = vld [vmem:[%s0 + $0x428] sm:$0xff]
    %v168 = vld [vmem:[%s0 + $0x430] sm:$0xff]
    %v169 = vld [vmem:[%s0 + $0x438] sm:$0xff]
    %v170 = vld [vmem:[%s0 + $0x440] sm:$0xff]
    %v171 = vld [vmem:[%s0 + $0x448] sm:$0xff]
    %v172 = vld [vmem:[%s0 + $0x450] sm:$0xff]
    %v173 = vld [vmem:[%s0 + $0x458] sm:$0xff]
    %v174 = vld [vmem:[%s0 + $0x460] sm:$0xff]
    %v175 = vld [vmem:[%s0 + $0x468] sm:$0xff]
    %v176 = vld [vmem:[%s0 + $0x470] sm:$0xff]
    %v177 = vld [vmem:[%s0 + $0x478] sm:$0xff]
    %v178 = vld [vmem:[%s0 + $0x480] sm:$0xff]
    %v179 = vld [vmem:[%s0 + $0x488] sm:$0xff]
    %v180 = vld [vmem:[%s0 + $0x490] sm:$0xff]
    %v181 = vld [vmem:[%s0 + $0x498] sm:$0xff]
    %v182 = vld [vmem:[%s0 + $0x4a0] sm:$0xff]
    %v183 = vld [vmem:[%s0 + $0x4a8] sm:$0xff]
    %v184 = vld [vmem:[%s0 + $0x4b0] sm:$0xff]
    %v185 = vld [vmem:[%s0 + $0x4b8] sm:$0xff]
    %v186 = vld [vmem:[%s0 + $0x4c0] sm:$0xff]
    %v187 = vld [vmem:[%s0 + $0x4c8] sm:$0xff]
    %v188 = vld [vmem:[%s0 + $0x4d0] sm:$0xff]
    %v189 = vld [vmem:[%s0 + $0x4d8] sm:$0xff]
    %v190 = vld [vmem:[%s0 + $0x4e0] sm:$0xff]
    %v191 = vld [vmem:[%s0 + $0x4e8] sm:$0xff]
    %v192 = vld [vmem:[%s0 + $0x4f0] sm:$0xff]
    %v193 = vld [vmem:[%s0 + $0x4f8] sm:$0xff]
    %v194 = vld [vmem:[%s0 + $0x500] sm:$0xff]
    %v195 = vld [vmem:[%s0 + $0x508] sm:$0xff]
    %v196 = vld [vmem:[%s0 + $0x510] sm:$0xff]
    %v197 = vld [vmem:[%s0 + $0x518] sm:$0xff]
    %v198 = vld [vmem:[%s0 + $0x520] sm:$0xff]
    %v199 = vld [vmem:[%s0 + $0x528] sm:$0xff]
    %v200 = vld [vmem:[%s0 + $0x530] sm:$0xff]
    %v201 = vld [vmem:[%s0 + $0x538] sm:$0xff]
    %v202 = vld [vmem:[%s0 + $0x540] sm:$0xff]
    %v203 = vld [vmem:[%s0 + $0x548] sm:$0xff]
    %v204 = vld [vmem:[%s0 + $0x550] sm:$0xff]
    %v205 = vld [vmem:[%s0 + $0x558] sm:$0xff]
    %v206 = vld [vmem:[%s0 + $0x560] sm:$0xff]
    %v207 = vld [vmem:[%s0 + $0x568] sm:$0xff]
    %v208 = vld [vmem:[%s0 + $0x570] sm:$0xff]
    %v209 = vld [vmem:[%s0 + $0x578] sm:$0xff]
    %v210 = vld [vmem:[%s0 + $0x580] sm:$0xff]
    %v211 = vld [vmem:[%s0 + $0x588] sm:$0xff]
    %v212 = vld [vmem:[%s0 + $0x590] sm:$0xff]
    %v213 = vld [vmem:[%s0 + $0x598] sm:$0xff]
    %v214 = vld [vmem:[%s0 + $0x5a0] sm:$0xff]
    %v215 = vld [vmem:[%s0 + $0x5a8] sm:$0xff]
    %v216 = vld [vmem:[%s0 + $0x5b0] sm:$0xff]
    %v217 = vld [vmem:[%s0 + $0x5b8] sm:$0xff]
    %v218 = vld [vmem:[%s0 + $0x5c0] sm:$0xff]
    %v219 = vld [vmem:[%s0 + $0x5c8] sm:$0xff]
    %v220 = vld [vmem:[%s0 + $0x5d0] sm:$0xff]
    %v221 = vld [vmem:[%s0 + $0x5d8] sm:$0xff]
    %v222 = vld [vmem:[%s0 + $0x5e0] sm:$0xff]
    %v223 = vld [vmem:[%s0 + $0x5e8] sm:$0xff]
    %v224 = vld [vmem:[%s0 + $0x5f0] sm:$0xff]
    %v225 = vld [vmem:[%s0 + $0x5f8] sm:$0xff]
    %v226 = vld [vmem:[%s0 + $0x600] sm:$0xff]
    %v227 = vld [vmem:[%s0 + $0x608] sm:$0xff]
    %v228 = vld [vmem:[%s0 + $0x610] sm:$0xff]
    %v229 = vld [vmem:[%s0 + $0x618] sm:$0xff]
    %v230 = vld [vmem:[%s0 + $0x620] sm:$0xff]
    %v231 = vld [vmem:[%s0 + $0x628] sm:$0xff]
    %v232 = vld [vmem:[%s0 + $0x630] sm:$0xff]
    %v233 = vld [vmem:[%s0 + $0x638] sm:$0xff]
    %v234 = vld [vmem:[%s0 + $0x640] sm:$0xff]
    %v235 = vld [vmem:[%s0 + $0x648] sm:$0xff]
    %v236 = vld [vmem:[%s0 + $0x650] sm:$0xff]
    %v237 = vld [vmem:[%s0 + $0x658] sm:$0xff]
    %v238 = vld [vmem:[%s0 + $0x660] sm:$0xff]
    %v239 = vld [vmem:[%s0 + $0x668] sm:$0xff]
    %v240 = vld [vmem:[%s0 + $0x670] sm:$0xff]
    %v241 = vld [vmem:[%s0 + $0x678] sm:$0xff]
    %v242 = vld [vmem:[%s0 + $0x680] sm:$0xff]
    %v243 = vld [vmem:[%s0 + $0x688] sm:$0xff]
    %v244 = vld [vmem:[%s0 + $0x690] sm:$0xff]
    %v245 = vld [vmem:[%s0 + $0x698] sm:$0xff]
    %v246 = vld [vmem:[%s0 + $0x6a0] sm:$0xff]
    %v247 = vld [vmem:[%s0 + $0x6a8] sm:$0xff]
    %v248 = vld [vmem:[%s0 + $0x6b0] sm:$0xff]
    %v249 = vld [vmem:[%s0 + $0x6b8] sm:$0xff]
    %v250 = vld [vmem:[%s0 + $0x6c0] sm:$0xff]
    %v251 = vld [vmem:[%s0 + $0x6c8] sm:$0xff]
    %v252 = vld [vmem:[%s0 + $0x6d0] sm:$0xff]
    %v253 = vld [vmem:[%s0 + $0x6d8] sm:$0xff]
    %v254 = vld [vmem:[%s0 + $0x6e0] sm:$0xff]
    %v255 = vld [vmem:[%s0 + $0x6e8] sm:$0xff]
    %v256 = vld [vmem:[%s0 + $0x6f0] sm:$0xff]
    %v257 = vld [vmem:[%s0 + $0x6f8] sm:$0xff]
    %v258 = vpack.c.bf16 %v41, %v34
    %v259 = vpack.c.bf16 %v42, %v35
    %v260 = vpack.c.bf16 %v43, %v36
    %v261 = vpack.c.bf16 %v44, %v37
    %v262 = vpack.c.bf16 %v45, %v38
    %v263 = vpack.c.bf16 %v46, %v39
    %v264 = vpack.c.bf16 %v47, %v40
    %v265 = vpack.c.bf16 %v55, %v48
    %v266 = vpack.c.bf16 %v56, %v49
    %v267 = vpack.c.bf16 %v57, %v50
    %v268 = vpack.c.bf16 %v58, %v51
    %v269 = vpack.c.bf16 %v59, %v52
    %v270 = vpack.c.bf16 %v60, %v53
    %v271 = vpack.c.bf16 %v61, %v54
    %v272 = vpack.c.bf16 %v69, %v62
    %v273 = vpack.c.bf16 %v70, %v63
    %v274 = vpack.c.bf16 %v71, %v64
    %v275 = vpack.c.bf16 %v72, %v65
    %v276 = vpack.c.bf16 %v73, %v66
    %v277 = vpack.c.bf16 %v74, %v67
    %v278 = vpack.c.bf16 %v75, %v68
    %v279 = vpack.c.bf16 %v83, %v76
    %v280 = vpack.c.bf16 %v84, %v77
    %v281 = vpack.c.bf16 %v85, %v78
    %v282 = vpack.c.bf16 %v86, %v79
    %v283 = vpack.c.bf16 %v87, %v80
    %v284 = vpack.c.bf16 %v88, %v81
    %v285 = vpack.c.bf16 %v89, %v82
    %v286 = vpack.c.bf16 %v97, %v90
    %v287 = vpack.c.bf16 %v98, %v91
    %v288 = vpack.c.bf16 %v99, %v92
    %v289 = vpack.c.bf16 %v100, %v93
    %v290 = vpack.c.bf16 %v101, %v94
    %v291 = vpack.c.bf16 %v102, %v95
    %v292 = vpack.c.bf16 %v103, %v96
    %v293 = vpack.c.bf16 %v111, %v104
    %v294 = vpack.c.bf16 %v112, %v105
    %v295 = vpack.c.bf16 %v113, %v106
    %v296 = vpack.c.bf16 %v114, %v107
    %v297 = vpack.c.bf16 %v115, %v108
    %v298 = vpack.c.bf16 %v116, %v109
    %v299 = vpack.c.bf16 %v117, %v110
    %v300 = vpack.c.bf16 %v125, %v118
    %v301 = vpack.c.bf16 %v126, %v119
    %v302 = vpack.c.bf16 %v127, %v120
    %v303 = vpack.c.bf16 %v128, %v121
    %v304 = vpack.c.bf16 %v129, %v122
    %v305 = vpack.c.bf16 %v130, %v123
    %v306 = vpack.c.bf16 %v131, %v124
    %v307 = vpack.c.bf16 %v139, %v132
    %v308 = vpack.c.bf16 %v140, %v133
    %v309 = vpack.c.bf16 %v141, %v134
    %v310 = vpack.c.bf16 %v142, %v135
    %v311 = vpack.c.bf16 %v143, %v136
    %v312 = vpack.c.bf16 %v144, %v137
    %v313 = vpack.c.bf16 %v145, %v138
    %v314 = vpack.c.bf16 %v153, %v146
    %v315 = vpack.c.bf16 %v154, %v147
    %v316 = vpack.c.bf16 %v155, %v148
    %v317 = vpack.c.bf16 %v156, %v149
    %v318 = vpack.c.bf16 %v157, %v150
    %v319 = vpack.c.bf16 %v158, %v151
    %v320 = vpack.c.bf16 %v159, %v152
    %v321 = vpack.c.bf16 %v167, %v160
    %v322 = vpack.c.bf16 %v168, %v161
    %v323 = vpack.c.bf16 %v169, %v162
    %v324 = vpack.c.bf16 %v170, %v163
    %v325 = vpack.c.bf16 %v171, %v164
    %v326 = vpack.c.bf16 %v172, %v165
    %v327 = vpack.c.bf16 %v173, %v166
    %v328 = vpack.c.bf16 %v181, %v174
    %v329 = vpack.c.bf16 %v182, %v175
    %v330 = vpack.c.bf16 %v183, %v176
    %v331 = vpack.c.bf16 %v184, %v177
    %v332 = vpack.c.bf16 %v185, %v178
    %v333 = vpack.c.bf16 %v186, %v179
    %v334 = vpack.c.bf16 %v187, %v180
    %v335 = vpack.c.bf16 %v195, %v188
    %v336 = vpack.c.bf16 %v196, %v189
    %v337 = vpack.c.bf16 %v197, %v190
    %v338 = vpack.c.bf16 %v198, %v191
    %v339 = vpack.c.bf16 %v199, %v192
    %v340 = vpack.c.bf16 %v200, %v193
    %v341 = vpack.c.bf16 %v201, %v194
    %v342 = vpack.c.bf16 %v209, %v202
    %v343 = vpack.c.bf16 %v210, %v203
    %v344 = vpack.c.bf16 %v211, %v204
    %v345 = vpack.c.bf16 %v212, %v205
    %v346 = vpack.c.bf16 %v213, %v206
    %v347 = vpack.c.bf16 %v214, %v207
    %v348 = vpack.c.bf16 %v215, %v208
    %v349 = vpack.c.bf16 %v223, %v216
    %v350 = vpack.c.bf16 %v224, %v217
    %v351 = vpack.c.bf16 %v225, %v218
    %v352 = vpack.c.bf16 %v226, %v219
    %v353 = vpack.c.bf16 %v227, %v220
    %v354 = vpack.c.bf16 %v228, %v221
    %v355 = vpack.c.bf16 %v229, %v222
    %v356 = vpack.c.bf16 %v237, %v230
    %v357 = vpack.c.bf16 %v238, %v231
    %v358 = vpack.c.bf16 %v239, %v232
    %v359 = vpack.c.bf16 %v240, %v233
    %v360 = vpack.c.bf16 %v241, %v234
    %v361 = vpack.c.bf16 %v242, %v235
    %v362 = vpack.c.bf16 %v243, %v236
    %v363 = vpack.c.bf16 %v251, %v244
    %v364 = vpack.c.bf16 %v252, %v245
    %v365 = vpack.c.bf16 %v253, %v246
    %v366 = vpack.c.bf16 %v254, %v247
    %v367 = vpack.c.bf16 %v255, %v248
    %v368 = vpack.c.bf16 %v256, %v249
    %v369 = vpack.c.bf16 %v257, %v250
    %v370 = vld [vmem:[%s1] sm:$0xff]
    %v371 = vld [vmem:[%s1 + $0x8] sm:$0xff]
    %v372 = vld [vmem:[%s1 + $0x10] sm:$0xff]
    %v373 = vld [vmem:[%s1 + $0x18] sm:$0xff]
    %v374 = vld [vmem:[%s1 + $0x20] sm:$0xff]
    %v375 = vld [vmem:[%s1 + $0x28] sm:$0xff]
    %v376 = vld [vmem:[%s1 + $0x30] sm:$0xff]
    %v377 = vld [vmem:[%s1 + $0x38] sm:$0xff]
    %v378 = vld [vmem:[%s1 + $0x40] sm:$0xff]
    %v379 = vld [vmem:[%s1 + $0x48] sm:$0xff]
    %v380 = vld [vmem:[%s1 + $0x50] sm:$0xff]
    %v381 = vld [vmem:[%s1 + $0x58] sm:$0xff]
    %v382 = vld [vmem:[%s1 + $0x60] sm:$0xff]
    %v383 = vld [vmem:[%s1 + $0x68] sm:$0xff]
    %v384 = vld [vmem:[%s1 + $0x70] sm:$0xff]
    %v385 = vld [vmem:[%s1 + $0x78] sm:$0xff]
    %v386 = vld [vmem:[%s1 + $0x80] sm:$0xff]
    %v387 = vld [vmem:[%s1 + $0x88] sm:$0xff]
    %v388 = vld [vmem:[%s1 + $0x90] sm:$0xff]
    %v389 = vld [vmem:[%s1 + $0x98] sm:$0xff]
    %v390 = vld [vmem:[%s1 + $0xa0] sm:$0xff]
    %v391 = vld [vmem:[%s1 + $0xa8] sm:$0xff]
    %v392 = vld [vmem:[%s1 + $0xb0] sm:$0xff]
    %v393 = vld [vmem:[%s1 + $0xb8] sm:$0xff]
    %v394 = vld [vmem:[%s1 + $0xc0] sm:$0xff]
    %v395 = vld [vmem:[%s1 + $0xc8] sm:$0xff]
    %v396 = vld [vmem:[%s1 + $0xd0] sm:$0xff]
    %v397 = vld [vmem:[%s1 + $0xd8] sm:$0xff]
    %v398 = vld [vmem:[%s1 + $0xe0] sm:$0xff]
    %v399 = vld [vmem:[%s1 + $0xe8] sm:$0xff]
    %v400 = vld [vmem:[%s1 + $0xf0] sm:$0xff]
    %v401 = vld [vmem:[%s1 + $0xf8] sm:$0xff]
    %v402 = vld [vmem:[%s1 + $0x100] sm:$0xff]
    %v403 = vld [vmem:[%s1 + $0x108] sm:$0xff]
    %v404 = vld [vmem:[%s1 + $0x110] sm:$0xff]
    %v405 = vld [vmem:[%s1 + $0x118] sm:$0xff]
    %v406 = vld [vmem:[%s1 + $0x120] sm:$0xff]
    %v407 = vld [vmem:[%s1 + $0x128] sm:$0xff]
    %v408 = vld [vmem:[%s1 + $0x130] sm:$0xff]
    %v409 = vld [vmem:[%s1 + $0x138] sm:$0xff]
    %v410 = vld [vmem:[%s1 + $0x140] sm:$0xff]
    %v411 = vld [vmem:[%s1 + $0x148] sm:$0xff]
    %v412 = vld [vmem:[%s1 + $0x150] sm:$0xff]
    %v413 = vld [vmem:[%s1 + $0x158] sm:$0xff]
    %v414 = vld [vmem:[%s1 + $0x160] sm:$0xff]
    %v415 = vld [vmem:[%s1 + $0x168] sm:$0xff]
    %v416 = vld [vmem:[%s1 + $0x170] sm:$0xff]
    %v417 = vld [vmem:[%s1 + $0x178] sm:$0xff]
    %v418 = vld [vmem:[%s1 + $0x180] sm:$0xff]
    %v419 = vld [vmem:[%s1 + $0x188] sm:$0xff]
    %v420 = vld [vmem:[%s1 + $0x190] sm:$0xff]
    %v421 = vld [vmem:[%s1 + $0x198] sm:$0xff]
    %v422 = vld [vmem:[%s1 + $0x1a0] sm:$0xff]
    %v423 = vld [vmem:[%s1 + $0x1a8] sm:$0xff]
    %v424 = vld [vmem:[%s1 + $0x1b0] sm:$0xff]
    %v425 = vld [vmem:[%s1 + $0x1b8] sm:$0xff]
    %v426 = vld [vmem:[%s1 + $0x1c0] sm:$0xff]
    %v427 = vld [vmem:[%s1 + $0x1c8] sm:$0xff]
    %v428 = vld [vmem:[%s1 + $0x1d0] sm:$0xff]
    %v429 = vld [vmem:[%s1 + $0x1d8] sm:$0xff]
    %v430 = vld [vmem:[%s1 + $0x1e0] sm:$0xff]
    %v431 = vld [vmem:[%s1 + $0x1e8] sm:$0xff]
    %v432 = vld [vmem:[%s1 + $0x1f0] sm:$0xff]
    %v433 = vld [vmem:[%s1 + $0x1f8] sm:$0xff]
    %v434 = vld [vmem:[%s1 + $0x200] sm:$0xff]
    %v435 = vld [vmem:[%s1 + $0x208] sm:$0xff]
    %v436 = vld [vmem:[%s1 + $0x210] sm:$0xff]
    %v437 = vld [vmem:[%s1 + $0x218] sm:$0xff]
    %v438 = vld [vmem:[%s1 + $0x220] sm:$0xff]
    %v439 = vld [vmem:[%s1 + $0x228] sm:$0xff]
    %v440 = vld [vmem:[%s1 + $0x230] sm:$0xff]
    %v441 = vld [vmem:[%s1 + $0x238] sm:$0xff]
    %v442 = vld [vmem:[%s1 + $0x240] sm:$0xff]
    %v443 = vld [vmem:[%s1 + $0x248] sm:$0xff]
    %v444 = vld [vmem:[%s1 + $0x250] sm:$0xff]
    %v445 = vld [vmem:[%s1 + $0x258] sm:$0xff]
    %v446 = vld [vmem:[%s1 + $0x260] sm:$0xff]
    %v447 = vld [vmem:[%s1 + $0x268] sm:$0xff]
    %v448 = vld [vmem:[%s1 + $0x270] sm:$0xff]
    %v449 = vld [vmem:[%s1 + $0x278] sm:$0xff]
    %v450 = vld [vmem:[%s1 + $0x280] sm:$0xff]
    %v451 = vld [vmem:[%s1 + $0x288] sm:$0xff]
    %v452 = vld [vmem:[%s1 + $0x290] sm:$0xff]
    %v453 = vld [vmem:[%s1 + $0x298] sm:$0xff]
    %v454 = vld [vmem:[%s1 + $0x2a0] sm:$0xff]
    %v455 = vld [vmem:[%s1 + $0x2a8] sm:$0xff]
    %v456 = vld [vmem:[%s1 + $0x2b0] sm:$0xff]
    %v457 = vld [vmem:[%s1 + $0x2b8] sm:$0xff]
    %v458 = vld [vmem:[%s1 + $0x2c0] sm:$0xff]
    %v459 = vld [vmem:[%s1 + $0x2c8] sm:$0xff]
    %v460 = vld [vmem:[%s1 + $0x2d0] sm:$0xff]
    %v461 = vld [vmem:[%s1 + $0x2d8] sm:$0xff]
    %v462 = vld [vmem:[%s1 + $0x2e0] sm:$0xff]
    %v463 = vld [vmem:[%s1 + $0x2e8] sm:$0xff]
    %v464 = vld [vmem:[%s1 + $0x2f0] sm:$0xff]
    %v465 = vld [vmem:[%s1 + $0x2f8] sm:$0xff]
    %v466 = vld [vmem:[%s1 + $0x300] sm:$0xff]
    %v467 = vld [vmem:[%s1 + $0x308] sm:$0xff]
    %v566 = vunpack.c.l.b16 %v370
    %v567 = vunpack.c.h.b16 %v370
    %v568 = vunpack.c.l.b16 %v371
    %v569 = vunpack.c.h.b16 %v371
    %v570 = vunpack.c.l.b16 %v372
    %v571 = vunpack.c.h.b16 %v372
    %v572 = vunpack.c.l.b16 %v373
    %v573 = vunpack.c.h.b16 %v373
    %v574 = vunpack.c.l.b16 %v374
    %v575 = vunpack.c.h.b16 %v374
    %v576 = vunpack.c.l.b16 %v375
    %v577 = vunpack.c.h.b16 %v375
    %v578 = vunpack.c.l.b16 %v376
    %v579 = vunpack.c.h.b16 %v376
    %v580 = vunpack.c.l.b16 %v377
    %v581 = vunpack.c.h.b16 %v377
    %v582 = vunpack.c.l.b16 %v378
    %v583 = vunpack.c.h.b16 %v378
    %v584 = vunpack.c.l.b16 %v379
    %v585 = vunpack.c.h.b16 %v379
    %v586 = vunpack.c.l.b16 %v380
    %v587 = vunpack.c.h.b16 %v380
    %v588 = vunpack.c.l.b16 %v381
    %v589 = vunpack.c.h.b16 %v381
    %v590 = vunpack.c.l.b16 %v382
    %v591 = vunpack.c.h.b16 %v382
    %v592 = vunpack.c.l.b16 %v383
    %v593 = vunpack.c.h.b16 %v383
    %v594 = vunpack.c.l.b16 %v384
    %v595 = vunpack.c.h.b16 %v384
    %v596 = vunpack.c.l.b16 %v385
    %v597 = vunpack.c.h.b16 %v385
    %v598 = vunpack.c.l.b16 %v386
    %v599 = vunpack.c.h.b16 %v386
    %v600 = vunpack.c.l.b16 %v387
    %v601 = vunpack.c.h.b16 %v387
    %v602 = vunpack.c.l.b16 %v388
    %v603 = vunpack.c.h.b16 %v388
    %v604 = vunpack.c.l.b16 %v389
    %v605 = vunpack.c.h.b16 %v389
    %v606 = vunpack.c.l.b16 %v390
    %v607 = vunpack.c.h.b16 %v390
    %v608 = vunpack.c.l.b16 %v391
    %v609 = vunpack.c.h.b16 %v391
    %v610 = vunpack.c.l.b16 %v392
    %v611 = vunpack.c.h.b16 %v392
    %v612 = vunpack.c.l.b16 %v393
    %v613 = vunpack.c.h.b16 %v393
    %v614 = vunpack.c.l.b16 %v394
    %v615 = vunpack.c.h.b16 %v394
    %v616 = vunpack.c.l.b16 %v395
    %v617 = vunpack.c.h.b16 %v395
    %v618 = vunpack.c.l.b16 %v396
    %v619 = vunpack.c.h.b16 %v396
    %v620 = vunpack.c.l.b16 %v397
    %v621 = vunpack.c.h.b16 %v397
    %v622 = vunpack.c.l.b16 %v398
    %v623 = vunpack.c.h.b16 %v398
    %v624 = vunpack.c.l.b16 %v399
    %v625 = vunpack.c.h.b16 %v399
    %v626 = vunpack.c.l.b16 %v400
    %v627 = vunpack.c.h.b16 %v400
    %v628 = vunpack.c.l.b16 %v401
    %v629 = vunpack.c.h.b16 %v401
    %v630 = vunpack.c.l.b16 %v402
    %v631 = vunpack.c.h.b16 %v402
    %v632 = vunpack.c.l.b16 %v403
    %v633 = vunpack.c.h.b16 %v403
    %v634 = vunpack.c.l.b16 %v404
    %v635 = vunpack.c.h.b16 %v404
    %v636 = vunpack.c.l.b16 %v405
    %v637 = vunpack.c.h.b16 %v405
    %v638 = vunpack.c.l.b16 %v406
    %v639 = vunpack.c.h.b16 %v406
    %v640 = vunpack.c.l.b16 %v407
    %v641 = vunpack.c.h.b16 %v407
    %v642 = vunpack.c.l.b16 %v408
    %v643 = vunpack.c.h.b16 %v408
    %v644 = vunpack.c.l.b16 %v409
    %v645 = vunpack.c.h.b16 %v409
    %v646 = vunpack.c.l.b16 %v410
    %v647 = vunpack.c.h.b16 %v410
    %v648 = vunpack.c.l.b16 %v411
    %v649 = vunpack.c.h.b16 %v411
    %v650 = vunpack.c.l.b16 %v412
    %v651 = vunpack.c.h.b16 %v412
    %v652 = vunpack.c.l.b16 %v413
    %v653 = vunpack.c.h.b16 %v413
    %v654 = vunpack.c.l.b16 %v414
    %v655 = vunpack.c.h.b16 %v414
    %v656 = vunpack.c.l.b16 %v415
    %v657 = vunpack.c.h.b16 %v415
    %v658 = vunpack.c.l.b16 %v416
    %v659 = vunpack.c.h.b16 %v416
    %v660 = vunpack.c.l.b16 %v417
    %v661 = vunpack.c.h.b16 %v417
    %v662 = vunpack.c.l.b16 %v418
    %v663 = vunpack.c.h.b16 %v418
    %v664 = vunpack.c.l.b16 %v419
    %v665 = vunpack.c.h.b16 %v419
    %v666 = vunpack.c.l.b16 %v420
    %v667 = vunpack.c.h.b16 %v420
    %v668 = vunpack.c.l.b16 %v421
    %v669 = vunpack.c.h.b16 %v421
    %v670 = vunpack.c.l.b16 %v422
    %v671 = vunpack.c.h.b16 %v422
    %v672 = vunpack.c.l.b16 %v423
    %v673 = vunpack.c.h.b16 %v423
    %v674 = vunpack.c.l.b16 %v424
    %v675 = vunpack.c.h.b16 %v424
    %v676 = vunpack.c.l.b16 %v425
    %v677 = vunpack.c.h.b16 %v425
    %v678 = vunpack.c.l.b16 %v426
    %v679 = vunpack.c.h.b16 %v426
    %v680 = vunpack.c.l.b16 %v427
    %v681 = vunpack.c.h.b16 %v427
    %v682 = vunpack.c.l.b16 %v428
    %v683 = vunpack.c.h.b16 %v428
    %v684 = vunpack.c.l.b16 %v429
    %v685 = vunpack.c.h.b16 %v429
    %v686 = vunpack.c.l.b16 %v430
    %v687 = vunpack.c.h.b16 %v430
    %v688 = vunpack.c.l.b16 %v431
    %v689 = vunpack.c.h.b16 %v431
    %v690 = vunpack.c.l.b16 %v432
    %v691 = vunpack.c.h.b16 %v432
    %v692 = vunpack.c.l.b16 %v433
    %v693 = vunpack.c.h.b16 %v433
    %v694 = vunpack.c.l.b16 %v434
    %v695 = vunpack.c.h.b16 %v434
    %v696 = vunpack.c.l.b16 %v435
    %v697 = vunpack.c.h.b16 %v435
    %v698 = vunpack.c.l.b16 %v436
    %v699 = vunpack.c.h.b16 %v436
    %v700 = vunpack.c.l.b16 %v437
    %v701 = vunpack.c.h.b16 %v437
    %v702 = vunpack.c.l.b16 %v438
    %v703 = vunpack.c.h.b16 %v438
    %v704 = vunpack.c.l.b16 %v439
    %v705 = vunpack.c.h.b16 %v439
    %v706 = vunpack.c.l.b16 %v440
    %v707 = vunpack.c.h.b16 %v440
    %v708 = vunpack.c.l.b16 %v441
    %v709 = vunpack.c.h.b16 %v441
    %v710 = vunpack.c.l.b16 %v442
    %v711 = vunpack.c.h.b16 %v442
    %v712 = vunpack.c.l.b16 %v443
    %v713 = vunpack.c.h.b16 %v443
    %v714 = vunpack.c.l.b16 %v444
    %v715 = vunpack.c.h.b16 %v444
    %v716 = vunpack.c.l.b16 %v445
    %v717 = vunpack.c.h.b16 %v445
    %v718 = vunpack.c.l.b16 %v446
    %v719 = vunpack.c.h.b16 %v446
    %v720 = vunpack.c.l.b16 %v447
    %v721 = vunpack.c.h.b16 %v447
    %v722 = vunpack.c.l.b16 %v448
    %v723 = vunpack.c.h.b16 %v448
    %v724 = vunpack.c.l.b16 %v449
    %v725 = vunpack.c.h.b16 %v449
    %v726 = vunpack.c.l.b16 %v450
    %v727 = vunpack.c.h.b16 %v450
    %v728 = vunpack.c.l.b16 %v451
    %v729 = vunpack.c.h.b16 %v451
    %v730 = vunpack.c.l.b16 %v452
    %v731 = vunpack.c.h.b16 %v452
    %v732 = vunpack.c.l.b16 %v453
    %v733 = vunpack.c.h.b16 %v453
    %v734 = vunpack.c.l.b16 %v454
    %v735 = vunpack.c.h.b16 %v454
    %v736 = vunpack.c.l.b16 %v455
    %v737 = vunpack.c.h.b16 %v455
    %v738 = vunpack.c.l.b16 %v456
    %v739 = vunpack.c.h.b16 %v456
    %v740 = vunpack.c.l.b16 %v457
    %v741 = vunpack.c.h.b16 %v457
    %v742 = vunpack.c.l.b16 %v458
    %v743 = vunpack.c.h.b16 %v458
    %v744 = vunpack.c.l.b16 %v459
    %v745 = vunpack.c.h.b16 %v459
    %v746 = vunpack.c.l.b16 %v460
    %v747 = vunpack.c.h.b16 %v460
    %v748 = vunpack.c.l.b16 %v461
    %v749 = vunpack.c.h.b16 %v461
    %v750 = vunpack.c.l.b16 %v462
    %v751 = vunpack.c.h.b16 %v462
    %v752 = vunpack.c.l.b16 %v463
    %v753 = vunpack.c.h.b16 %v463
    %v754 = vunpack.c.l.b16 %v464
    %v755 = vunpack.c.h.b16 %v464
    %v756 = vunpack.c.l.b16 %v465
    %v757 = vunpack.c.h.b16 %v465
    %v758 = vunpack.c.l.b16 %v466
    %v759 = vunpack.c.h.b16 %v466
    %v760 = vunpack.c.l.b16 %v467
    %v761 = vunpack.c.h.b16 %v467
    %v762 = vpack.c.b16 %v568, %v566
    %v763 = vpack.c.b16 %v569, %v567
    %v764 = vpack.c.b16 %v572, %v570
    %v765 = vpack.c.b16 %v573, %v571
    %v766 = vpack.c.b16 %v576, %v574
    %v767 = vpack.c.b16 %v577, %v575
    %v768 = vpack.c.b16 %v580, %v578
    %v769 = vpack.c.b16 %v581, %v579
    %v770 = vpack.c.b16 %v584, %v582
    %v771 = vpack.c.b16 %v585, %v583
    %v772 = vpack.c.b16 %v588, %v586
    %v773 = vpack.c.b16 %v589, %v587
    %v774 = vpack.c.b16 %v592, %v590
    %v775 = vpack.c.b16 %v593, %v591
    %v776 = vpack.c.b16 %v596, %v594
    %v777 = vpack.c.b16 %v597, %v595
    %v778 = vpack.c.b16 %v600, %v598
    %v779 = vpack.c.b16 %v601, %v599
    %v780 = vpack.c.b16 %v604, %v602
    %v781 = vpack.c.b16 %v605, %v603
    %v782 = vpack.c.b16 %v608, %v606
    %v783 = vpack.c.b16 %v609, %v607
    %v784 = vpack.c.b16 %v612, %v610
    %v785 = vpack.c.b16 %v613, %v611
    %v786 = vpack.c.b16 %v616, %v614
    %v787 = vpack.c.b16 %v617, %v615
    %v788 = vpack.c.b16 %v620, %v618
    %v789 = vpack.c.b16 %v621, %v619
    %v790 = vpack.c.b16 %v624, %v622
    %v791 = vpack.c.b16 %v625, %v623
    %v792 = vpack.c.b16 %v628, %v626
    %v793 = vpack.c.b16 %v629, %v627
    %v794 = vpack.c.b16 %v632, %v630
    %v795 = vpack.c.b16 %v633, %v631
    %v796 = vpack.c.b16 %v636, %v634
    %v797 = vpack.c.b16 %v637, %v635
    %v798 = vpack.c.b16 %v640, %v638
    %v799 = vpack.c.b16 %v641, %v639
    %v800 = vpack.c.b16 %v644, %v642
    %v801 = vpack.c.b16 %v645, %v643
    %v802 = vpack.c.b16 %v648, %v646
    %v803 = vpack.c.b16 %v649, %v647
    %v804 = vpack.c.b16 %v652, %v650
    %v805 = vpack.c.b16 %v653, %v651
    %v806 = vpack.c.b16 %v656, %v654
    %v807 = vpack.c.b16 %v657, %v655
    %v808 = vpack.c.b16 %v660, %v658
    %v809 = vpack.c.b16 %v661, %v659
    %v810 = vpack.c.b16 %v664, %v662
    %v811 = vpack.c.b16 %v665, %v663
    %v812 = vpack.c.b16 %v668, %v666
    %v813 = vpack.c.b16 %v669, %v667
    %v814 = vpack.c.b16 %v672, %v670
    %v815 = vpack.c.b16 %v673, %v671
    %v816 = vpack.c.b16 %v676, %v674
    %v817 = vpack.c.b16 %v677, %v675
    %v818 = vpack.c.b16 %v680, %v678
    %v819 = vpack.c.b16 %v681, %v679
    %v820 = vpack.c.b16 %v684, %v682
    %v821 = vpack.c.b16 %v685, %v683
    %v822 = vpack.c.b16 %v688, %v686
    %v823 = vpack.c.b16 %v689, %v687
    %v824 = vpack.c.b16 %v692, %v690
    %v825 = vpack.c.b16 %v693, %v691
    %v826 = vpack.c.b16 %v696, %v694
    %v827 = vpack.c.b16 %v697, %v695
    %v828 = vpack.c.b16 %v700, %v698
    %v829 = vpack.c.b16 %v701, %v699
    %v830 = vpack.c.b16 %v704, %v702
    %v831 = vpack.c.b16 %v705, %v703
    %v832 = vpack.c.b16 %v708, %v706
    %v833 = vpack.c.b16 %v709, %v707
    %v834 = vpack.c.b16 %v712, %v710
    %v835 = vpack.c.b16 %v713, %v711
    %v836 = vpack.c.b16 %v716, %v714
    %v837 = vpack.c.b16 %v717, %v715
    %v838 = vpack.c.b16 %v720, %v718
    %v839 = vpack.c.b16 %v721, %v719
    %v840 = vpack.c.b16 %v724, %v722
    %v841 = vpack.c.b16 %v725, %v723
    %v842 = vpack.c.b16 %v728, %v726
    %v843 = vpack.c.b16 %v729, %v727
    %v844 = vpack.c.b16 %v732, %v730
    %v845 = vpack.c.b16 %v733, %v731
    %v846 = vpack.c.b16 %v736, %v734
    %v847 = vpack.c.b16 %v737, %v735
    %v848 = vpack.c.b16 %v740, %v738
    %v849 = vpack.c.b16 %v741, %v739
    %v850 = vpack.c.b16 %v744, %v742
    %v851 = vpack.c.b16 %v745, %v743
    %v852 = vpack.c.b16 %v748, %v746
    %v853 = vpack.c.b16 %v749, %v747
    %v854 = vpack.c.b16 %v752, %v750
    %v855 = vpack.c.b16 %v753, %v751
    %v856 = vpack.c.b16 %v756, %v754
    %v857 = vpack.c.b16 %v757, %v755
    %v858 = vpack.c.b16 %v760, %v758
    %v859 = vpack.c.b16 %v761, %v759
    %vm958 = vcmask 130048
    %v960 = vsel %vm958, %v264, 0
    %v963 = vsel %vm958, %v271, 0
    %v966 = vsel %vm958, %v278, 0
    %v969 = vsel %vm958, %v285, 0
    %v972 = vsel %vm958, %v292, 0
    %v975 = vsel %vm958, %v299, 0
    %v978 = vsel %vm958, %v306, 0
    %v981 = vsel %vm958, %v313, 0
    %v984 = vsel %vm958, %v320, 0
    %v987 = vsel %vm958, %v327, 0
    %v990 = vsel %vm958, %v334, 0
    %v993 = vsel %vm958, %v341, 0
    %v996 = vsel %vm958, %v348, 0
    %v999 = vsel %vm958, %v355, 0
    %v1002 = vsel %vm958, %v362, 0
    %v1005 = vsel %vm958, %v369, 0
    %1007 = vmatpush.bf16.msra.mxu0 %v776
    %1008 = vmatpush.bf16.msra.mxu0 %v774
    %1009 = vmatpush.bf16.msra.mxu0 %v772
    %1010 = vmatpush.bf16.msra.mxu0 %v770
    %1011 = vmatpush.bf16.msra.mxu0 %v768
    %1012 = vmatpush.bf16.msra.mxu0 %v766
    %1013 = vmatpush.bf16.msra.mxu0 %v764
    %1014 = vmatpush.bf16.msra.mxu0 %v762
    %1015 = vmatmul.bf16.gmra.mxu0 %v258
    %v1016 = vpop.f32.mrf.mxu0
    %v1017 = vadd.f32 0.0, %v1016
    %v1018 = vpop.f32.mrf.mxu0
    %v1019 = vadd.f32 0.0, %v1018
    %1020 = vmatmul.bf16.gmra.mxu0 %v265
    %v1021 = vpop.f32.mrf.mxu0
    %v1022 = vadd.f32 0.0, %v1021
    %v1023 = vpop.f32.mrf.mxu0
    %v1024 = vadd.f32 0.0, %v1023
    %1025 = vmatmul.bf16.gmra.mxu0 %v272
    %v1026 = vpop.f32.mrf.mxu0
    %v1027 = vadd.f32 0.0, %v1026
    %v1028 = vpop.f32.mrf.mxu0
    %v1029 = vadd.f32 0.0, %v1028
    %1030 = vmatmul.bf16.gmra.mxu0 %v279
    %v1031 = vpop.f32.mrf.mxu0
    %v1032 = vadd.f32 0.0, %v1031
    %v1033 = vpop.f32.mrf.mxu0
    %v1034 = vadd.f32 0.0, %v1033
    %1035 = vmatmul.bf16.gmra.mxu0 %v286
    %v1036 = vpop.f32.mrf.mxu0
    %v1037 = vadd.f32 0.0, %v1036
    %v1038 = vpop.f32.mrf.mxu0
    %v1039 = vadd.f32 0.0, %v1038
    %1040 = vmatmul.bf16.gmra.mxu0 %v293
    %v1041 = vpop.f32.mrf.mxu0
    %v1042 = vadd.f32 0.0, %v1041
    %v1043 = vpop.f32.mrf.mxu0
    %v1044 = vadd.f32 0.0, %v1043
    %1045 = vmatmul.bf16.gmra.mxu0 %v300
    %v1046 = vpop.f32.mrf.mxu0
    %v1047 = vadd.f32 0.0, %v1046
    %v1048 = vpop.f32.mrf.mxu0
    %v1049 = vadd.f32 0.0, %v1048
    %1050 = vmatmul.bf16.gmra.mxu0 %v307
    %v1051 = vpop.f32.mrf.mxu0
    %v1052 = vadd.f32 0.0, %v1051
    %v1053 = vpop.f32.mrf.mxu0
    %v1054 = vadd.f32 0.0, %v1053
    %1055 = vmatmul.bf16.gmra.mxu0 %v314
    %v1056 = vpop.f32.mrf.mxu0
    %v1057 = vadd.f32 0.0, %v1056
    %v1058 = vpop.f32.mrf.mxu0
    %v1059 = vadd.f32 0.0, %v1058
    %1060 = vmatmul.bf16.gmra.mxu0 %v321
    %v1061 = vpop.f32.mrf.mxu0
    %v1062 = vadd.f32 0.0, %v1061
    %v1063 = vpop.f32.mrf.mxu0
    %v1064 = vadd.f32 0.0, %v1063
    %1065 = vmatmul.bf16.gmra.mxu0 %v328
    %v1066 = vpop.f32.mrf.mxu0
    %v1067 = vadd.f32 0.0, %v1066
    %v1068 = vpop.f32.mrf.mxu0
    %v1069 = vadd.f32 0.0, %v1068
    %1070 = vmatmul.bf16.gmra.mxu0 %v335
    %v1071 = vpop.f32.mrf.mxu0
    %v1072 = vadd.f32 0.0, %v1071
    %v1073 = vpop.f32.mrf.mxu0
    %v1074 = vadd.f32 0.0, %v1073
    %1075 = vmatmul.bf16.gmra.mxu0 %v342
    %v1076 = vpop.f32.mrf.mxu0
    %v1077 = vadd.f32 0.0, %v1076
    %v1078 = vpop.f32.mrf.mxu0
    %v1079 = vadd.f32 0.0, %v1078
    %1080 = vmatmul.bf16.gmra.mxu0 %v349
    %v1081 = vpop.f32.mrf.mxu0
    %v1082 = vadd.f32 0.0, %v1081
    %v1083 = vpop.f32.mrf.mxu0
    %v1084 = vadd.f32 0.0, %v1083
    %1085 = vmatmul.bf16.gmra.mxu0 %v356
    %v1086 = vpop.f32.mrf.mxu0
    %v1087 = vadd.f32 0.0, %v1086
    %v1088 = vpop.f32.mrf.mxu0
    %v1089 = vadd.f32 0.0, %v1088
    %1090 = vmatmul.bf16.gmra.mxu0 %v363
    %v1091 = vpop.f32.mrf.mxu0
    %v1092 = vadd.f32 0.0, %v1091
    %v1093 = vpop.f32.mrf.mxu0
    %v1094 = vadd.f32 0.0, %v1093
    %1095 = vdwg.mxu0
    %1096 = vmatpush.bf16.msra.mxu0 %v792
    %1097 = vmatpush.bf16.msra.mxu0 %v790
    %1098 = vmatpush.bf16.msra.mxu0 %v788
    %1099 = vmatpush.bf16.msra.mxu0 %v786
    %1100 = vmatpush.bf16.msra.mxu0 %v784
    %1101 = vmatpush.bf16.msra.mxu0 %v782
    %1102 = vmatpush.bf16.msra.mxu0 %v780
    %1103 = vmatpush.bf16.msra.mxu0 %v778
    %1104 = vmatmul.bf16.gmra.mxu0 %v259
    %v1105 = vpop.f32.mrf.mxu0
    %v1106 = vadd.f32 %v1017, %v1105
    %v1107 = vpop.f32.mrf.mxu0
    %v1108 = vadd.f32 %v1019, %v1107
    %1109 = vmatmul.bf16.gmra.mxu0 %v266
    %v1110 = vpop.f32.mrf.mxu0
    %v1111 = vadd.f32 %v1022, %v1110
    %v1112 = vpop.f32.mrf.mxu0
    %v1113 = vadd.f32 %v1024, %v1112
    %1114 = vmatmul.bf16.gmra.mxu0 %v273
    %v1115 = vpop.f32.mrf.mxu0
    %v1116 = vadd.f32 %v1027, %v1115
    %v1117 = vpop.f32.mrf.mxu0
    %v1118 = vadd.f32 %v1029, %v1117
    %1119 = vmatmul.bf16.gmra.mxu0 %v280
    %v1120 = vpop.f32.mrf.mxu0
    %v1121 = vadd.f32 %v1032, %v1120
    %v1122 = vpop.f32.mrf.mxu0
    %v1123 = vadd.f32 %v1034, %v1122
    %1124 = vmatmul.bf16.gmra.mxu0 %v287
    %v1125 = vpop.f32.mrf.mxu0
    %v1126 = vadd.f32 %v1037, %v1125
    %v1127 = vpop.f32.mrf.mxu0
    %v1128 = vadd.f32 %v1039, %v1127
    %1129 = vmatmul.bf16.gmra.mxu0 %v294
    %v1130 = vpop.f32.mrf.mxu0
    %v1131 = vadd.f32 %v1042, %v1130
    %v1132 = vpop.f32.mrf.mxu0
    %v1133 = vadd.f32 %v1044, %v1132
    %1134 = vmatmul.bf16.gmra.mxu0 %v301
    %v1135 = vpop.f32.mrf.mxu0
    %v1136 = vadd.f32 %v1047, %v1135
    %v1137 = vpop.f32.mrf.mxu0
    %v1138 = vadd.f32 %v1049, %v1137
    %1139 = vmatmul.bf16.gmra.mxu0 %v308
    %v1140 = vpop.f32.mrf.mxu0
    %v1141 = vadd.f32 %v1052, %v1140
    %v1142 = vpop.f32.mrf.mxu0
    %v1143 = vadd.f32 %v1054, %v1142
    %1144 = vmatmul.bf16.gmra.mxu0 %v315
    %v1145 = vpop.f32.mrf.mxu0
    %v1146 = vadd.f32 %v1057, %v1145
    %v1147 = vpop.f32.mrf.mxu0
    %v1148 = vadd.f32 %v1059, %v1147
    %1149 = vmatmul.bf16.gmra.mxu0 %v322
    %v1150 = vpop.f32.mrf.mxu0
    %v1151 = vadd.f32 %v1062, %v1150
    %v1152 = vpop.f32.mrf.mxu0
    %v1153 = vadd.f32 %v1064, %v1152
    %1154 = vmatmul.bf16.gmra.mxu0 %v329
    %v1155 = vpop.f32.mrf.mxu0
    %v1156 = vadd.f32 %v1067, %v1155
    %v1157 = vpop.f32.mrf.mxu0
    %v1158 = vadd.f32 %v1069, %v1157
    %1159 = vmatmul.bf16.gmra.mxu0 %v336
    %v1160 = vpop.f32.mrf.mxu0
    %v1161 = vadd.f32 %v1072, %v1160
    %v1162 = vpop.f32.mrf.mxu0
    %v1163 = vadd.f32 %v1074, %v1162
    %1164 = vmatmul.bf16.gmra.mxu0 %v343
    %v1165 = vpop.f32.mrf.mxu0
    %v1166 = vadd.f32 %v1077, %v1165
    %v1167 = vpop.f32.mrf.mxu0
    %v1168 = vadd.f32 %v1079, %v1167
    %1169 = vmatmul.bf16.gmra.mxu0 %v350
    %v1170 = vpop.f32.mrf.mxu0
    %v1171 = vadd.f32 %v1082, %v1170
    %v1172 = vpop.f32.mrf.mxu0
    %v1173 = vadd.f32 %v1084, %v1172
    %1174 = vmatmul.bf16.gmra.mxu0 %v357
    %v1175 = vpop.f32.mrf.mxu0
    %v1176 = vadd.f32 %v1087, %v1175
    %v1177 = vpop.f32.mrf.mxu0
    %v1178 = vadd.f32 %v1089, %v1177
    %1179 = vmatmul.bf16.gmra.mxu0 %v364
    %v1180 = vpop.f32.mrf.mxu0
    %v1181 = vadd.f32 %v1092, %v1180
    %v1182 = vpop.f32.mrf.mxu0
    %v1183 = vadd.f32 %v1094, %v1182
    %1184 = vdwg.mxu0
    %1185 = vmatpush.bf16.msra.mxu0 %v808
    %1186 = vmatpush.bf16.msra.mxu0 %v806
    %1187 = vmatpush.bf16.msra.mxu0 %v804
    %1188 = vmatpush.bf16.msra.mxu0 %v802
    %1189 = vmatpush.bf16.msra.mxu0 %v800
    %1190 = vmatpush.bf16.msra.mxu0 %v798
    %1191 = vmatpush.bf16.msra.mxu0 %v796
    %1192 = vmatpush.bf16.msra.mxu0 %v794
    %1193 = vmatmul.bf16.gmra.mxu0 %v260
    %v1194 = vpop.f32.mrf.mxu0
    %v1195 = vadd.f32 %v1106, %v1194
    %v1196 = vpop.f32.mrf.mxu0
    %v1197 = vadd.f32 %v1108, %v1196
    %1198 = vmatmul.bf16.gmra.mxu0 %v267
    %v1199 = vpop.f32.mrf.mxu0
    %v1200 = vadd.f32 %v1111, %v1199
    %v1201 = vpop.f32.mrf.mxu0
    %v1202 = vadd.f32 %v1113, %v1201
    %1203 = vmatmul.bf16.gmra.mxu0 %v274
    %v1204 = vpop.f32.mrf.mxu0
    %v1205 = vadd.f32 %v1116, %v1204
    %v1206 = vpop.f32.mrf.mxu0
    %v1207 = vadd.f32 %v1118, %v1206
    %1208 = vmatmul.bf16.gmra.mxu0 %v281
    %v1209 = vpop.f32.mrf.mxu0
    %v1210 = vadd.f32 %v1121, %v1209
    %v1211 = vpop.f32.mrf.mxu0
    %v1212 = vadd.f32 %v1123, %v1211
    %1213 = vmatmul.bf16.gmra.mxu0 %v288
    %v1214 = vpop.f32.mrf.mxu0
    %v1215 = vadd.f32 %v1126, %v1214
    %v1216 = vpop.f32.mrf.mxu0
    %v1217 = vadd.f32 %v1128, %v1216
    %1218 = vmatmul.bf16.gmra.mxu0 %v295
    %v1219 = vpop.f32.mrf.mxu0
    %v1220 = vadd.f32 %v1131, %v1219
    %v1221 = vpop.f32.mrf.mxu0
    %v1222 = vadd.f32 %v1133, %v1221
    %1223 = vmatmul.bf16.gmra.mxu0 %v302
    %v1224 = vpop.f32.mrf.mxu0
    %v1225 = vadd.f32 %v1136, %v1224
    %v1226 = vpop.f32.mrf.mxu0
    %v1227 = vadd.f32 %v1138, %v1226
    %1228 = vmatmul.bf16.gmra.mxu0 %v309
    %v1229 = vpop.f32.mrf.mxu0
    %v1230 = vadd.f32 %v1141, %v1229
    %v1231 = vpop.f32.mrf.mxu0
    %v1232 = vadd.f32 %v1143, %v1231
    %1233 = vmatmul.bf16.gmra.mxu0 %v316
    %v1234 = vpop.f32.mrf.mxu0
    %v1235 = vadd.f32 %v1146, %v1234
    %v1236 = vpop.f32.mrf.mxu0
    %v1237 = vadd.f32 %v1148, %v1236
    %1238 = vmatmul.bf16.gmra.mxu0 %v323
    %v1239 = vpop.f32.mrf.mxu0
    %v1240 = vadd.f32 %v1151, %v1239
    %v1241 = vpop.f32.mrf.mxu0
    %v1242 = vadd.f32 %v1153, %v1241
    %1243 = vmatmul.bf16.gmra.mxu0 %v330
    %v1244 = vpop.f32.mrf.mxu0
    %v1245 = vadd.f32 %v1156, %v1244
    %v1246 = vpop.f32.mrf.mxu0
    %v1247 = vadd.f32 %v1158, %v1246
    %1248 = vmatmul.bf16.gmra.mxu0 %v337
    %v1249 = vpop.f32.mrf.mxu0
    %v1250 = vadd.f32 %v1161, %v1249
    %v1251 = vpop.f32.mrf.mxu0
    %v1252 = vadd.f32 %v1163, %v1251
    %1253 = vmatmul.bf16.gmra.mxu0 %v344
    %v1254 = vpop.f32.mrf.mxu0
    %v1255 = vadd.f32 %v1166, %v1254
    %v1256 = vpop.f32.mrf.mxu0
    %v1257 = vadd.f32 %v1168, %v1256
    %1258 = vmatmul.bf16.gmra.mxu0 %v351
    %v1259 = vpop.f32.mrf.mxu0
    %v1260 = vadd.f32 %v1171, %v1259
    %v1261 = vpop.f32.mrf.mxu0
    %v1262 = vadd.f32 %v1173, %v1261
    %1263 = vmatmul.bf16.gmra.mxu0 %v358
    %v1264 = vpop.f32.mrf.mxu0
    %v1265 = vadd.f32 %v1176, %v1264
    %v1266 = vpop.f32.mrf.mxu0
    %v1267 = vadd.f32 %v1178, %v1266
    %1268 = vmatmul.bf16.gmra.mxu0 %v365
    %v1269 = vpop.f32.mrf.mxu0
    %v1270 = vadd.f32 %v1181, %v1269
    %v1271 = vpop.f32.mrf.mxu0
    %v1272 = vadd.f32 %v1183, %v1271
    %1273 = vdwg.mxu0
    %1274 = vmatpush.bf16.msra.mxu0 %v824
    %1275 = vmatpush.bf16.msra.mxu0 %v822
    %1276 = vmatpush.bf16.msra.mxu0 %v820
    %1277 = vmatpush.bf16.msra.mxu0 %v818
    %1278 = vmatpush.bf16.msra.mxu0 %v816
    %1279 = vmatpush.bf16.msra.mxu0 %v814
    %1280 = vmatpush.bf16.msra.mxu0 %v812
    %1281 = vmatpush.bf16.msra.mxu0 %v810
    %1282 = vmatmul.bf16.gmra.mxu0 %v261
    %v1283 = vpop.f32.mrf.mxu0
    %v1284 = vadd.f32 %v1195, %v1283
    %v1285 = vpop.f32.mrf.mxu0
    %v1286 = vadd.f32 %v1197, %v1285
    %1287 = vmatmul.bf16.gmra.mxu0 %v268
    %v1288 = vpop.f32.mrf.mxu0
    %v1289 = vadd.f32 %v1200, %v1288
    %v1290 = vpop.f32.mrf.mxu0
    %v1291 = vadd.f32 %v1202, %v1290
    %1292 = vmatmul.bf16.gmra.mxu0 %v275
    %v1293 = vpop.f32.mrf.mxu0
    %v1294 = vadd.f32 %v1205, %v1293
    %v1295 = vpop.f32.mrf.mxu0
    %v1296 = vadd.f32 %v1207, %v1295
    %1297 = vmatmul.bf16.gmra.mxu0 %v282
    %v1298 = vpop.f32.mrf.mxu0
    %v1299 = vadd.f32 %v1210, %v1298
    %v1300 = vpop.f32.mrf.mxu0
    %v1301 = vadd.f32 %v1212, %v1300
    %1302 = vmatmul.bf16.gmra.mxu0 %v289
    %v1303 = vpop.f32.mrf.mxu0
    %v1304 = vadd.f32 %v1215, %v1303
    %v1305 = vpop.f32.mrf.mxu0
    %v1306 = vadd.f32 %v1217, %v1305
    %1307 = vmatmul.bf16.gmra.mxu0 %v296
    %v1308 = vpop.f32.mrf.mxu0
    %v1309 = vadd.f32 %v1220, %v1308
    %v1310 = vpop.f32.mrf.mxu0
    %v1311 = vadd.f32 %v1222, %v1310
    %1312 = vmatmul.bf16.gmra.mxu0 %v303
    %v1313 = vpop.f32.mrf.mxu0
    %v1314 = vadd.f32 %v1225, %v1313
    %v1315 = vpop.f32.mrf.mxu0
    %v1316 = vadd.f32 %v1227, %v1315
    %1317 = vmatmul.bf16.gmra.mxu0 %v310
    %v1318 = vpop.f32.mrf.mxu0
    %v1319 = vadd.f32 %v1230, %v1318
    %v1320 = vpop.f32.mrf.mxu0
    %v1321 = vadd.f32 %v1232, %v1320
    %1322 = vmatmul.bf16.gmra.mxu0 %v317
    %v1323 = vpop.f32.mrf.mxu0
    %v1324 = vadd.f32 %v1235, %v1323
    %v1325 = vpop.f32.mrf.mxu0
    %v1326 = vadd.f32 %v1237, %v1325
    %1327 = vmatmul.bf16.gmra.mxu0 %v324
    %v1328 = vpop.f32.mrf.mxu0
    %v1329 = vadd.f32 %v1240, %v1328
    %v1330 = vpop.f32.mrf.mxu0
    %v1331 = vadd.f32 %v1242, %v1330
    %1332 = vmatmul.bf16.gmra.mxu0 %v331
    %v1333 = vpop.f32.mrf.mxu0
    %v1334 = vadd.f32 %v1245, %v1333
    %v1335 = vpop.f32.mrf.mxu0
    %v1336 = vadd.f32 %v1247, %v1335
    %1337 = vmatmul.bf16.gmra.mxu0 %v338
    %v1338 = vpop.f32.mrf.mxu0
    %v1339 = vadd.f32 %v1250, %v1338
    %v1340 = vpop.f32.mrf.mxu0
    %v1341 = vadd.f32 %v1252, %v1340
    %1342 = vmatmul.bf16.gmra.mxu0 %v345
    %v1343 = vpop.f32.mrf.mxu0
    %v1344 = vadd.f32 %v1255, %v1343
    %v1345 = vpop.f32.mrf.mxu0
    %v1346 = vadd.f32 %v1257, %v1345
    %1347 = vmatmul.bf16.gmra.mxu0 %v352
    %v1348 = vpop.f32.mrf.mxu0
    %v1349 = vadd.f32 %v1260, %v1348
    %v1350 = vpop.f32.mrf.mxu0
    %v1351 = vadd.f32 %v1262, %v1350
    %1352 = vmatmul.bf16.gmra.mxu0 %v359
    %v1353 = vpop.f32.mrf.mxu0
    %v1354 = vadd.f32 %v1265, %v1353
    %v1355 = vpop.f32.mrf.mxu0
    %v1356 = vadd.f32 %v1267, %v1355
    %1357 = vmatmul.bf16.gmra.mxu0 %v366
    %v1358 = vpop.f32.mrf.mxu0
    %v1359 = vadd.f32 %v1270, %v1358
    %v1360 = vpop.f32.mrf.mxu0
    %v1361 = vadd.f32 %v1272, %v1360
    %1362 = vdwg.mxu0
    %1363 = vmatpush.bf16.msra.mxu0 %v840
    %1364 = vmatpush.bf16.msra.mxu0 %v838
    %1365 = vmatpush.bf16.msra.mxu0 %v836
    %1366 = vmatpush.bf16.msra.mxu0 %v834
    %1367 = vmatpush.bf16.msra.mxu0 %v832
    %1368 = vmatpush.bf16.msra.mxu0 %v830
    %1369 = vmatpush.bf16.msra.mxu0 %v828
    %1370 = vmatpush.bf16.msra.mxu0 %v826
    %1371 = vmatmul.bf16.gmra.mxu0 %v262
    %v1372 = vpop.f32.mrf.mxu0
    %v1373 = vadd.f32 %v1284, %v1372
    %v1374 = vpop.f32.mrf.mxu0
    %v1375 = vadd.f32 %v1286, %v1374
    %1376 = vmatmul.bf16.gmra.mxu0 %v269
    %v1377 = vpop.f32.mrf.mxu0
    %v1378 = vadd.f32 %v1289, %v1377
    %v1379 = vpop.f32.mrf.mxu0
    %v1380 = vadd.f32 %v1291, %v1379
    %1381 = vmatmul.bf16.gmra.mxu0 %v276
    %v1382 = vpop.f32.mrf.mxu0
    %v1383 = vadd.f32 %v1294, %v1382
    %v1384 = vpop.f32.mrf.mxu0
    %v1385 = vadd.f32 %v1296, %v1384
    %1386 = vmatmul.bf16.gmra.mxu0 %v283
    %v1387 = vpop.f32.mrf.mxu0
    %v1388 = vadd.f32 %v1299, %v1387
    %v1389 = vpop.f32.mrf.mxu0
    %v1390 = vadd.f32 %v1301, %v1389
    %1391 = vmatmul.bf16.gmra.mxu0 %v290
    %v1392 = vpop.f32.mrf.mxu0
    %v1393 = vadd.f32 %v1304, %v1392
    %v1394 = vpop.f32.mrf.mxu0
    %v1395 = vadd.f32 %v1306, %v1394
    %1396 = vmatmul.bf16.gmra.mxu0 %v297
    %v1397 = vpop.f32.mrf.mxu0
    %v1398 = vadd.f32 %v1309, %v1397
    %v1399 = vpop.f32.mrf.mxu0
    %v1400 = vadd.f32 %v1311, %v1399
    %1401 = vmatmul.bf16.gmra.mxu0 %v304
    %v1402 = vpop.f32.mrf.mxu0
    %v1403 = vadd.f32 %v1314, %v1402
    %v1404 = vpop.f32.mrf.mxu0
    %v1405 = vadd.f32 %v1316, %v1404
    %1406 = vmatmul.bf16.gmra.mxu0 %v311
    %v1407 = vpop.f32.mrf.mxu0
    %v1408 = vadd.f32 %v1319, %v1407
    %v1409 = vpop.f32.mrf.mxu0
    %v1410 = vadd.f32 %v1321, %v1409
    %1411 = vmatmul.bf16.gmra.mxu0 %v318
    %v1412 = vpop.f32.mrf.mxu0
    %v1413 = vadd.f32 %v1324, %v1412
    %v1414 = vpop.f32.mrf.mxu0
    %v1415 = vadd.f32 %v1326, %v1414
    %1416 = vmatmul.bf16.gmra.mxu0 %v325
    %v1417 = vpop.f32.mrf.mxu0
    %v1418 = vadd.f32 %v1329, %v1417
    %v1419 = vpop.f32.mrf.mxu0
    %v1420 = vadd.f32 %v1331, %v1419
    %1421 = vmatmul.bf16.gmra.mxu0 %v332
    %v1422 = vpop.f32.mrf.mxu0
    %v1423 = vadd.f32 %v1334, %v1422
    %v1424 = vpop.f32.mrf.mxu0
    %v1425 = vadd.f32 %v1336, %v1424
    %1426 = vmatmul.bf16.gmra.mxu0 %v339
    %v1427 = vpop.f32.mrf.mxu0
    %v1428 = vadd.f32 %v1339, %v1427
    %v1429 = vpop.f32.mrf.mxu0
    %v1430 = vadd.f32 %v1341, %v1429
    %1431 = vmatmul.bf16.gmra.mxu0 %v346
    %v1432 = vpop.f32.mrf.mxu0
    %v1433 = vadd.f32 %v1344, %v1432
    %v1434 = vpop.f32.mrf.mxu0
    %v1435 = vadd.f32 %v1346, %v1434
    %1436 = vmatmul.bf16.gmra.mxu0 %v353
    %v1437 = vpop.f32.mrf.mxu0
    %v1438 = vadd.f32 %v1349, %v1437
    %v1439 = vpop.f32.mrf.mxu0
    %v1440 = vadd.f32 %v1351, %v1439
    %1441 = vmatmul.bf16.gmra.mxu0 %v360
    %v1442 = vpop.f32.mrf.mxu0
    %v1443 = vadd.f32 %v1354, %v1442
    %v1444 = vpop.f32.mrf.mxu0
    %v1445 = vadd.f32 %v1356, %v1444
    %1446 = vmatmul.bf16.gmra.mxu0 %v367
    %v1447 = vpop.f32.mrf.mxu0
    %v1448 = vadd.f32 %v1359, %v1447
    %v1449 = vpop.f32.mrf.mxu0
    %v1450 = vadd.f32 %v1361, %v1449
    %1451 = vdwg.mxu0
    %1452 = vmatpush.bf16.msra.mxu0 %v856
    %1453 = vmatpush.bf16.msra.mxu0 %v854
    %1454 = vmatpush.bf16.msra.mxu0 %v852
    %1455 = vmatpush.bf16.msra.mxu0 %v850
    %1456 = vmatpush.bf16.msra.mxu0 %v848
    %1457 = vmatpush.bf16.msra.mxu0 %v846
    %1458 = vmatpush.bf16.msra.mxu0 %v844
    %1459 = vmatpush.bf16.msra.mxu0 %v842
    %1460 = vmatmul.bf16.gmra.mxu0 %v263
    %v1461 = vpop.f32.mrf.mxu0
    %v1462 = vadd.f32 %v1373, %v1461
    %v1463 = vpop.f32.mrf.mxu0
    %v1464 = vadd.f32 %v1375, %v1463
    %1465 = vmatmul.bf16.gmra.mxu0 %v270
    %v1466 = vpop.f32.mrf.mxu0
    %v1467 = vadd.f32 %v1378, %v1466
    %v1468 = vpop.f32.mrf.mxu0
    %v1469 = vadd.f32 %v1380, %v1468
    %1470 = vmatmul.bf16.gmra.mxu0 %v277
    %v1471 = vpop.f32.mrf.mxu0
    %v1472 = vadd.f32 %v1383, %v1471
    %v1473 = vpop.f32.mrf.mxu0
    %v1474 = vadd.f32 %v1385, %v1473
    %1475 = vmatmul.bf16.gmra.mxu0 %v284
    %v1476 = vpop.f32.mrf.mxu0
    %v1477 = vadd.f32 %v1388, %v1476
    %v1478 = vpop.f32.mrf.mxu0
    %v1479 = vadd.f32 %v1390, %v1478
    %1480 = vmatmul.bf16.gmra.mxu0 %v291
    %v1481 = vpop.f32.mrf.mxu0
    %v1482 = vadd.f32 %v1393, %v1481
    %v1483 = vpop.f32.mrf.mxu0
    %v1484 = vadd.f32 %v1395, %v1483
    %1485 = vmatmul.bf16.gmra.mxu0 %v298
    %v1486 = vpop.f32.mrf.mxu0
    %v1487 = vadd.f32 %v1398, %v1486
    %v1488 = vpop.f32.mrf.mxu0
    %v1489 = vadd.f32 %v1400, %v1488
    %1490 = vmatmul.bf16.gmra.mxu0 %v305
    %v1491 = vpop.f32.mrf.mxu0
    %v1492 = vadd.f32 %v1403, %v1491
    %v1493 = vpop.f32.mrf.mxu0
    %v1494 = vadd.f32 %v1405, %v1493
    %1495 = vmatmul.bf16.gmra.mxu0 %v312
    %v1496 = vpop.f32.mrf.mxu0
    %v1497 = vadd.f32 %v1408, %v1496
    %v1498 = vpop.f32.mrf.mxu0
    %v1499 = vadd.f32 %v1410, %v1498
    %1500 = vmatmul.bf16.gmra.mxu0 %v319
    %v1501 = vpop.f32.mrf.mxu0
    %v1502 = vadd.f32 %v1413, %v1501
    %v1503 = vpop.f32.mrf.mxu0
    %v1504 = vadd.f32 %v1415, %v1503
    %1505 = vmatmul.bf16.gmra.mxu0 %v326
    %v1506 = vpop.f32.mrf.mxu0
    %v1507 = vadd.f32 %v1418, %v1506
    %v1508 = vpop.f32.mrf.mxu0
    %v1509 = vadd.f32 %v1420, %v1508
    %1510 = vmatmul.bf16.gmra.mxu0 %v333
    %v1511 = vpop.f32.mrf.mxu0
    %v1512 = vadd.f32 %v1423, %v1511
    %v1513 = vpop.f32.mrf.mxu0
    %v1514 = vadd.f32 %v1425, %v1513
    %1515 = vmatmul.bf16.gmra.mxu0 %v340
    %v1516 = vpop.f32.mrf.mxu0
    %v1517 = vadd.f32 %v1428, %v1516
    %v1518 = vpop.f32.mrf.mxu0
    %v1519 = vadd.f32 %v1430, %v1518
    %1520 = vmatmul.bf16.gmra.mxu0 %v347
    %v1521 = vpop.f32.mrf.mxu0
    %v1522 = vadd.f32 %v1433, %v1521
    %v1523 = vpop.f32.mrf.mxu0
    %v1524 = vadd.f32 %v1435, %v1523
    %1525 = vmatmul.bf16.gmra.mxu0 %v354
    %v1526 = vpop.f32.mrf.mxu0
    %v1527 = vadd.f32 %v1438, %v1526
    %v1528 = vpop.f32.mrf.mxu0
    %v1529 = vadd.f32 %v1440, %v1528
    %1530 = vmatmul.bf16.gmra.mxu0 %v361
    %v1531 = vpop.f32.mrf.mxu0
    %v1532 = vadd.f32 %v1443, %v1531
    %v1533 = vpop.f32.mrf.mxu0
    %v1534 = vadd.f32 %v1445, %v1533
    %1535 = vmatmul.bf16.gmra.mxu0 %v368
    %v1536 = vpop.f32.mrf.mxu0
    %v1537 = vadd.f32 %v1448, %v1536
    %v1538 = vpop.f32.mrf.mxu0
    %v1539 = vadd.f32 %v1450, %v1538
    %1540 = vdwg.mxu0
    %1541 = vmatpush.bf16.msra.mxu0 0
    %1542 = vmatpush.bf16.msra.mxu0 0
    %1543 = vmatpush.bf16.msra.mxu0 0
    %1544 = vmatpush.bf16.msra.mxu0 0
    %1545 = vmatpush.bf16.msra.mxu0 0
    %1546 = vmatpush.bf16.msra.mxu0 0
    %1547 = vmatpush.bf16.msra.mxu0 0
    %1548 = vmatpush.bf16.msra.mxu0 %v858
    %1549 = vmatmul.bf16.gmra.mxu0 %v960
    %v1550 = vpop.f32.mrf.mxu0
    %v1551 = vadd.f32 %v1462, %v1550
    %v1552 = vpop.f32.mrf.mxu0
    %v1553 = vadd.f32 %v1464, %v1552
    %1554 = vmatmul.bf16.gmra.mxu0 %v963
    %v1555 = vpop.f32.mrf.mxu0
    %v1556 = vadd.f32 %v1467, %v1555
    %v1557 = vpop.f32.mrf.mxu0
    %v1558 = vadd.f32 %v1469, %v1557
    %1559 = vmatmul.bf16.gmra.mxu0 %v966
    %v1560 = vpop.f32.mrf.mxu0
    %v1561 = vadd.f32 %v1472, %v1560
    %v1562 = vpop.f32.mrf.mxu0
    %v1563 = vadd.f32 %v1474, %v1562
    %1564 = vmatmul.bf16.gmra.mxu0 %v969
    %v1565 = vpop.f32.mrf.mxu0
    %v1566 = vadd.f32 %v1477, %v1565
    %v1567 = vpop.f32.mrf.mxu0
    %v1568 = vadd.f32 %v1479, %v1567
    %1569 = vmatmul.bf16.gmra.mxu0 %v972
    %v1570 = vpop.f32.mrf.mxu0
    %v1571 = vadd.f32 %v1482, %v1570
    %v1572 = vpop.f32.mrf.mxu0
    %v1573 = vadd.f32 %v1484, %v1572
    %1574 = vmatmul.bf16.gmra.mxu0 %v975
    %v1575 = vpop.f32.mrf.mxu0
    %v1576 = vadd.f32 %v1487, %v1575
    %v1577 = vpop.f32.mrf.mxu0
    %v1578 = vadd.f32 %v1489, %v1577
    %1579 = vmatmul.bf16.gmra.mxu0 %v978
    %v1580 = vpop.f32.mrf.mxu0
    %v1581 = vadd.f32 %v1492, %v1580
    %v1582 = vpop.f32.mrf.mxu0
    %v1583 = vadd.f32 %v1494, %v1582
    %1584 = vmatmul.bf16.gmra.mxu0 %v981
    %v1585 = vpop.f32.mrf.mxu0
    %v1586 = vadd.f32 %v1497, %v1585
    %v1587 = vpop.f32.mrf.mxu0
    %v1588 = vadd.f32 %v1499, %v1587
    %1589 = vmatmul.bf16.gmra.mxu0 %v984
    %v1590 = vpop.f32.mrf.mxu0
    %v1591 = vadd.f32 %v1502, %v1590
    %v1592 = vpop.f32.mrf.mxu0
    %v1593 = vadd.f32 %v1504, %v1592
    %1594 = vmatmul.bf16.gmra.mxu0 %v987
    %v1595 = vpop.f32.mrf.mxu0
    %v1596 = vadd.f32 %v1507, %v1595
    %v1597 = vpop.f32.mrf.mxu0
    %v1598 = vadd.f32 %v1509, %v1597
    %1599 = vmatmul.bf16.gmra.mxu0 %v990
    %v1600 = vpop.f32.mrf.mxu0
    %v1601 = vadd.f32 %v1512, %v1600
    %v1602 = vpop.f32.mrf.mxu0
    %v1603 = vadd.f32 %v1514, %v1602
    %1604 = vmatmul.bf16.gmra.mxu0 %v993
    %v1605 = vpop.f32.mrf.mxu0
    %v1606 = vadd.f32 %v1517, %v1605
    %v1607 = vpop.f32.mrf.mxu0
    %v1608 = vadd.f32 %v1519, %v1607
    %1609 = vmatmul.bf16.gmra.mxu0 %v996
    %v1610 = vpop.f32.mrf.mxu0
    %v1611 = vadd.f32 %v1522, %v1610
    %v1612 = vpop.f32.mrf.mxu0
    %v1613 = vadd.f32 %v1524, %v1612
    %1614 = vmatmul.bf16.gmra.mxu0 %v999
    %v1615 = vpop.f32.mrf.mxu0
    %v1616 = vadd.f32 %v1527, %v1615
    %v1617 = vpop.f32.mrf.mxu0
    %v1618 = vadd.f32 %v1529, %v1617
    %1619 = vmatmul.bf16.gmra.mxu0 %v1002
    %v1620 = vpop.f32.mrf.mxu0
    %v1621 = vadd.f32 %v1532, %v1620
    %v1622 = vpop.f32.mrf.mxu0
    %v1623 = vadd.f32 %v1534, %v1622
    %1624 = vmatmul.bf16.gmra.mxu0 %v1005
    %v1625 = vpop.f32.mrf.mxu0
    %v1626 = vadd.f32 %v1537, %v1625
    %v1627 = vpop.f32.mrf.mxu0
    %v1628 = vadd.f32 %v1539, %v1627
    %1629 = vdwg.mxu0
    %1630 = vmatpush.bf16.msra.mxu0 %v777
    %1631 = vmatpush.bf16.msra.mxu0 %v775
    %1632 = vmatpush.bf16.msra.mxu0 %v773
    %1633 = vmatpush.bf16.msra.mxu0 %v771
    %1634 = vmatpush.bf16.msra.mxu0 %v769
    %1635 = vmatpush.bf16.msra.mxu0 %v767
    %1636 = vmatpush.bf16.msra.mxu0 %v765
    %1637 = vmatpush.bf16.msra.mxu0 %v763
    %1638 = vmatmul.bf16.gmra.mxu0 %v258
    %v1639 = vpop.f32.mrf.mxu0
    %v1640 = vadd.f32 0.0, %v1639
    %v1641 = vpop.f32.mrf.mxu0
    %v1642 = vadd.f32 0.0, %v1641
    %1643 = vmatmul.bf16.gmra.mxu0 %v265
    %v1644 = vpop.f32.mrf.mxu0
    %v1645 = vadd.f32 0.0, %v1644
    %v1646 = vpop.f32.mrf.mxu0
    %v1647 = vadd.f32 0.0, %v1646
    %1648 = vmatmul.bf16.gmra.mxu0 %v272
    %v1649 = vpop.f32.mrf.mxu0
    %v1650 = vadd.f32 0.0, %v1649
    %v1651 = vpop.f32.mrf.mxu0
    %v1652 = vadd.f32 0.0, %v1651
    %1653 = vmatmul.bf16.gmra.mxu0 %v279
    %v1654 = vpop.f32.mrf.mxu0
    %v1655 = vadd.f32 0.0, %v1654
    %v1656 = vpop.f32.mrf.mxu0
    %v1657 = vadd.f32 0.0, %v1656
    %1658 = vmatmul.bf16.gmra.mxu0 %v286
    %v1659 = vpop.f32.mrf.mxu0
    %v1660 = vadd.f32 0.0, %v1659
    %v1661 = vpop.f32.mrf.mxu0
    %v1662 = vadd.f32 0.0, %v1661
    %1663 = vmatmul.bf16.gmra.mxu0 %v293
    %v1664 = vpop.f32.mrf.mxu0
    %v1665 = vadd.f32 0.0, %v1664
    %v1666 = vpop.f32.mrf.mxu0
    %v1667 = vadd.f32 0.0, %v1666
    %1668 = vmatmul.bf16.gmra.mxu0 %v300
    %v1669 = vpop.f32.mrf.mxu0
    %v1670 = vadd.f32 0.0, %v1669
    %v1671 = vpop.f32.mrf.mxu0
    %v1672 = vadd.f32 0.0, %v1671
    %1673 = vmatmul.bf16.gmra.mxu0 %v307
    %v1674 = vpop.f32.mrf.mxu0
    %v1675 = vadd.f32 0.0, %v1674
    %v1676 = vpop.f32.mrf.mxu0
    %v1677 = vadd.f32 0.0, %v1676
    %1678 = vmatmul.bf16.gmra.mxu0 %v314
    %v1679 = vpop.f32.mrf.mxu0
    %v1680 = vadd.f32 0.0, %v1679
    %v1681 = vpop.f32.mrf.mxu0
    %v1682 = vadd.f32 0.0, %v1681
    %1683 = vmatmul.bf16.gmra.mxu0 %v321
    %v1684 = vpop.f32.mrf.mxu0
    %v1685 = vadd.f32 0.0, %v1684
    %v1686 = vpop.f32.mrf.mxu0
    %v1687 = vadd.f32 0.0, %v1686
    %1688 = vmatmul.bf16.gmra.mxu0 %v328
    %v1689 = vpop.f32.mrf.mxu0
    %v1690 = vadd.f32 0.0, %v1689
    %v1691 = vpop.f32.mrf.mxu0
    %v1692 = vadd.f32 0.0, %v1691
    %1693 = vmatmul.bf16.gmra.mxu0 %v335
    %v1694 = vpop.f32.mrf.mxu0
    %v1695 = vadd.f32 0.0, %v1694
    %v1696 = vpop.f32.mrf.mxu0
    %v1697 = vadd.f32 0.0, %v1696
    %1698 = vmatmul.bf16.gmra.mxu0 %v342
    %v1699 = vpop.f32.mrf.mxu0
    %v1700 = vadd.f32 0.0, %v1699
    %v1701 = vpop.f32.mrf.mxu0
    %v1702 = vadd.f32 0.0, %v1701
    %1703 = vmatmul.bf16.gmra.mxu0 %v349
    %v1704 = vpop.f32.mrf.mxu0
    %v1705 = vadd.f32 0.0, %v1704
    %v1706 = vpop.f32.mrf.mxu0
    %v1707 = vadd.f32 0.0, %v1706
    %1708 = vmatmul.bf16.gmra.mxu0 %v356
    %v1709 = vpop.f32.mrf.mxu0
    %v1710 = vadd.f32 0.0, %v1709
    %v1711 = vpop.f32.mrf.mxu0
    %v1712 = vadd.f32 0.0, %v1711
    %1713 = vmatmul.bf16.gmra.mxu0 %v363
    %v1714 = vpop.f32.mrf.mxu0
    %v1715 = vadd.f32 0.0, %v1714
    %v1716 = vpop.f32.mrf.mxu0
    %v1717 = vadd.f32 0.0, %v1716
    %1718 = vdwg.mxu0
    %1719 = vmatpush.bf16.msra.mxu0 %v793
    %1720 = vmatpush.bf16.msra.mxu0 %v791
    %1721 = vmatpush.bf16.msra.mxu0 %v789
    %1722 = vmatpush.bf16.msra.mxu0 %v787
    %1723 = vmatpush.bf16.msra.mxu0 %v785
    %1724 = vmatpush.bf16.msra.mxu0 %v783
    %1725 = vmatpush.bf16.msra.mxu0 %v781
    %1726 = vmatpush.bf16.msra.mxu0 %v779
    %1727 = vmatmul.bf16.gmra.mxu0 %v259
    %v1728 = vpop.f32.mrf.mxu0
    %v1729 = vadd.f32 %v1640, %v1728
    %v1730 = vpop.f32.mrf.mxu0
    %v1731 = vadd.f32 %v1642, %v1730
    %1732 = vmatmul.bf16.gmra.mxu0 %v266
    %v1733 = vpop.f32.mrf.mxu0
    %v1734 = vadd.f32 %v1645, %v1733
    %v1735 = vpop.f32.mrf.mxu0
    %v1736 = vadd.f32 %v1647, %v1735
    %1737 = vmatmul.bf16.gmra.mxu0 %v273
    %v1738 = vpop.f32.mrf.mxu0
    %v1739 = vadd.f32 %v1650, %v1738
    %v1740 = vpop.f32.mrf.mxu0
    %v1741 = vadd.f32 %v1652, %v1740
    %1742 = vmatmul.bf16.gmra.mxu0 %v280
    %v1743 = vpop.f32.mrf.mxu0
    %v1744 = vadd.f32 %v1655, %v1743
    %v1745 = vpop.f32.mrf.mxu0
    %v1746 = vadd.f32 %v1657, %v1745
    %1747 = vmatmul.bf16.gmra.mxu0 %v287
    %v1748 = vpop.f32.mrf.mxu0
    %v1749 = vadd.f32 %v1660, %v1748
    %v1750 = vpop.f32.mrf.mxu0
    %v1751 = vadd.f32 %v1662, %v1750
    %1752 = vmatmul.bf16.gmra.mxu0 %v294
    %v1753 = vpop.f32.mrf.mxu0
    %v1754 = vadd.f32 %v1665, %v1753
    %v1755 = vpop.f32.mrf.mxu0
    %v1756 = vadd.f32 %v1667, %v1755
    %1757 = vmatmul.bf16.gmra.mxu0 %v301
    %v1758 = vpop.f32.mrf.mxu0
    %v1759 = vadd.f32 %v1670, %v1758
    %v1760 = vpop.f32.mrf.mxu0
    %v1761 = vadd.f32 %v1672, %v1760
    %1762 = vmatmul.bf16.gmra.mxu0 %v308
    %v1763 = vpop.f32.mrf.mxu0
    %v1764 = vadd.f32 %v1675, %v1763
    %v1765 = vpop.f32.mrf.mxu0
    %v1766 = vadd.f32 %v1677, %v1765
    %1767 = vmatmul.bf16.gmra.mxu0 %v315
    %v1768 = vpop.f32.mrf.mxu0
    %v1769 = vadd.f32 %v1680, %v1768
    %v1770 = vpop.f32.mrf.mxu0
    %v1771 = vadd.f32 %v1682, %v1770
    %1772 = vmatmul.bf16.gmra.mxu0 %v322
    %v1773 = vpop.f32.mrf.mxu0
    %v1774 = vadd.f32 %v1685, %v1773
    %v1775 = vpop.f32.mrf.mxu0
    %v1776 = vadd.f32 %v1687, %v1775
    %1777 = vmatmul.bf16.gmra.mxu0 %v329
    %v1778 = vpop.f32.mrf.mxu0
    %v1779 = vadd.f32 %v1690, %v1778
    %v1780 = vpop.f32.mrf.mxu0
    %v1781 = vadd.f32 %v1692, %v1780
    %1782 = vmatmul.bf16.gmra.mxu0 %v336
    %v1783 = vpop.f32.mrf.mxu0
    %v1784 = vadd.f32 %v1695, %v1783
    %v1785 = vpop.f32.mrf.mxu0
    %v1786 = vadd.f32 %v1697, %v1785
    %1787 = vmatmul.bf16.gmra.mxu0 %v343
    %v1788 = vpop.f32.mrf.mxu0
    %v1789 = vadd.f32 %v1700, %v1788
    %v1790 = vpop.f32.mrf.mxu0
    %v1791 = vadd.f32 %v1702, %v1790
    %1792 = vmatmul.bf16.gmra.mxu0 %v350
    %v1793 = vpop.f32.mrf.mxu0
    %v1794 = vadd.f32 %v1705, %v1793
    %v1795 = vpop.f32.mrf.mxu0
    %v1796 = vadd.f32 %v1707, %v1795
    %1797 = vmatmul.bf16.gmra.mxu0 %v357
    %v1798 = vpop.f32.mrf.mxu0
    %v1799 = vadd.f32 %v1710, %v1798
    %v1800 = vpop.f32.mrf.mxu0
    %v1801 = vadd.f32 %v1712, %v1800
    %1802 = vmatmul.bf16.gmra.mxu0 %v364
    %v1803 = vpop.f32.mrf.mxu0
    %v1804 = vadd.f32 %v1715, %v1803
    %v1805 = vpop.f32.mrf.mxu0
    %v1806 = vadd.f32 %v1717, %v1805
    %1807 = vdwg.mxu0
    %1808 = vmatpush.bf16.msra.mxu0 %v809
    %1809 = vmatpush.bf16.msra.mxu0 %v807
    %1810 = vmatpush.bf16.msra.mxu0 %v805
    %1811 = vmatpush.bf16.msra.mxu0 %v803
    %1812 = vmatpush.bf16.msra.mxu0 %v801
    %1813 = vmatpush.bf16.msra.mxu0 %v799
    %1814 = vmatpush.bf16.msra.mxu0 %v797
    %1815 = vmatpush.bf16.msra.mxu0 %v795
    %1816 = vmatmul.bf16.gmra.mxu0 %v260
    %v1817 = vpop.f32.mrf.mxu0
    %v1818 = vadd.f32 %v1729, %v1817
    %v1819 = vpop.f32.mrf.mxu0
    %v1820 = vadd.f32 %v1731, %v1819
    %1821 = vmatmul.bf16.gmra.mxu0 %v267
    %v1822 = vpop.f32.mrf.mxu0
    %v1823 = vadd.f32 %v1734, %v1822
    %v1824 = vpop.f32.mrf.mxu0
    %v1825 = vadd.f32 %v1736, %v1824
    %1826 = vmatmul.bf16.gmra.mxu0 %v274
    %v1827 = vpop.f32.mrf.mxu0
    %v1828 = vadd.f32 %v1739, %v1827
    %v1829 = vpop.f32.mrf.mxu0
    %v1830 = vadd.f32 %v1741, %v1829
    %1831 = vmatmul.bf16.gmra.mxu0 %v281
    %v1832 = vpop.f32.mrf.mxu0
    %v1833 = vadd.f32 %v1744, %v1832
    %v1834 = vpop.f32.mrf.mxu0
    %v1835 = vadd.f32 %v1746, %v1834
    %1836 = vmatmul.bf16.gmra.mxu0 %v288
    %v1837 = vpop.f32.mrf.mxu0
    %v1838 = vadd.f32 %v1749, %v1837
    %v1839 = vpop.f32.mrf.mxu0
    %v1840 = vadd.f32 %v1751, %v1839
    %1841 = vmatmul.bf16.gmra.mxu0 %v295
    %v1842 = vpop.f32.mrf.mxu0
    %v1843 = vadd.f32 %v1754, %v1842
    %v1844 = vpop.f32.mrf.mxu0
    %v1845 = vadd.f32 %v1756, %v1844
    %1846 = vmatmul.bf16.gmra.mxu0 %v302
    %v1847 = vpop.f32.mrf.mxu0
    %v1848 = vadd.f32 %v1759, %v1847
    %v1849 = vpop.f32.mrf.mxu0
    %v1850 = vadd.f32 %v1761, %v1849
    %1851 = vmatmul.bf16.gmra.mxu0 %v309
    %v1852 = vpop.f32.mrf.mxu0
    %v1853 = vadd.f32 %v1764, %v1852
    %v1854 = vpop.f32.mrf.mxu0
    %v1855 = vadd.f32 %v1766, %v1854
    %1856 = vmatmul.bf16.gmra.mxu0 %v316
    %v1857 = vpop.f32.mrf.mxu0
    %v1858 = vadd.f32 %v1769, %v1857
    %v1859 = vpop.f32.mrf.mxu0
    %v1860 = vadd.f32 %v1771, %v1859
    %1861 = vmatmul.bf16.gmra.mxu0 %v323
    %v1862 = vpop.f32.mrf.mxu0
    %v1863 = vadd.f32 %v1774, %v1862
    %v1864 = vpop.f32.mrf.mxu0
    %v1865 = vadd.f32 %v1776, %v1864
    %1866 = vmatmul.bf16.gmra.mxu0 %v330
    %v1867 = vpop.f32.mrf.mxu0
    %v1868 = vadd.f32 %v1779, %v1867
    %v1869 = vpop.f32.mrf.mxu0
    %v1870 = vadd.f32 %v1781, %v1869
    %1871 = vmatmul.bf16.gmra.mxu0 %v337
    %v1872 = vpop.f32.mrf.mxu0
    %v1873 = vadd.f32 %v1784, %v1872
    %v1874 = vpop.f32.mrf.mxu0
    %v1875 = vadd.f32 %v1786, %v1874
    %1876 = vmatmul.bf16.gmra.mxu0 %v344
    %v1877 = vpop.f32.mrf.mxu0
    %v1878 = vadd.f32 %v1789, %v1877
    %v1879 = vpop.f32.mrf.mxu0
    %v1880 = vadd.f32 %v1791, %v1879
    %1881 = vmatmul.bf16.gmra.mxu0 %v351
    %v1882 = vpop.f32.mrf.mxu0
    %v1883 = vadd.f32 %v1794, %v1882
    %v1884 = vpop.f32.mrf.mxu0
    %v1885 = vadd.f32 %v1796, %v1884
    %1886 = vmatmul.bf16.gmra.mxu0 %v358
    %v1887 = vpop.f32.mrf.mxu0
    %v1888 = vadd.f32 %v1799, %v1887
    %v1889 = vpop.f32.mrf.mxu0
    %v1890 = vadd.f32 %v1801, %v1889
    %1891 = vmatmul.bf16.gmra.mxu0 %v365
    %v1892 = vpop.f32.mrf.mxu0
    %v1893 = vadd.f32 %v1804, %v1892
    %v1894 = vpop.f32.mrf.mxu0
    %v1895 = vadd.f32 %v1806, %v1894
    %1896 = vdwg.mxu0
    %1897 = vmatpush.bf16.msra.mxu0 %v825
    %1898 = vmatpush.bf16.msra.mxu0 %v823
    %1899 = vmatpush.bf16.msra.mxu0 %v821
    %1900 = vmatpush.bf16.msra.mxu0 %v819
    %1901 = vmatpush.bf16.msra.mxu0 %v817
    %1902 = vmatpush.bf16.msra.mxu0 %v815
    %1903 = vmatpush.bf16.msra.mxu0 %v813
    %1904 = vmatpush.bf16.msra.mxu0 %v811
    %1905 = vmatmul.bf16.gmra.mxu0 %v261
    %v1906 = vpop.f32.mrf.mxu0
    %v1907 = vadd.f32 %v1818, %v1906
    %v1908 = vpop.f32.mrf.mxu0
    %v1909 = vadd.f32 %v1820, %v1908
    %1910 = vmatmul.bf16.gmra.mxu0 %v268
    %v1911 = vpop.f32.mrf.mxu0
    %v1912 = vadd.f32 %v1823, %v1911
    %v1913 = vpop.f32.mrf.mxu0
    %v1914 = vadd.f32 %v1825, %v1913
    %1915 = vmatmul.bf16.gmra.mxu0 %v275
    %v1916 = vpop.f32.mrf.mxu0
    %v1917 = vadd.f32 %v1828, %v1916
    %v1918 = vpop.f32.mrf.mxu0
    %v1919 = vadd.f32 %v1830, %v1918
    %1920 = vmatmul.bf16.gmra.mxu0 %v282
    %v1921 = vpop.f32.mrf.mxu0
    %v1922 = vadd.f32 %v1833, %v1921
    %v1923 = vpop.f32.mrf.mxu0
    %v1924 = vadd.f32 %v1835, %v1923
    %1925 = vmatmul.bf16.gmra.mxu0 %v289
    %v1926 = vpop.f32.mrf.mxu0
    %v1927 = vadd.f32 %v1838, %v1926
    %v1928 = vpop.f32.mrf.mxu0
    %v1929 = vadd.f32 %v1840, %v1928
    %1930 = vmatmul.bf16.gmra.mxu0 %v296
    %v1931 = vpop.f32.mrf.mxu0
    %v1932 = vadd.f32 %v1843, %v1931
    %v1933 = vpop.f32.mrf.mxu0
    %v1934 = vadd.f32 %v1845, %v1933
    %1935 = vmatmul.bf16.gmra.mxu0 %v303
    %v1936 = vpop.f32.mrf.mxu0
    %v1937 = vadd.f32 %v1848, %v1936
    %v1938 = vpop.f32.mrf.mxu0
    %v1939 = vadd.f32 %v1850, %v1938
    %1940 = vmatmul.bf16.gmra.mxu0 %v310
    %v1941 = vpop.f32.mrf.mxu0
    %v1942 = vadd.f32 %v1853, %v1941
    %v1943 = vpop.f32.mrf.mxu0
    %v1944 = vadd.f32 %v1855, %v1943
    %1945 = vmatmul.bf16.gmra.mxu0 %v317
    %v1946 = vpop.f32.mrf.mxu0
    %v1947 = vadd.f32 %v1858, %v1946
    %v1948 = vpop.f32.mrf.mxu0
    %v1949 = vadd.f32 %v1860, %v1948
    %1950 = vmatmul.bf16.gmra.mxu0 %v324
    %v1951 = vpop.f32.mrf.mxu0
    %v1952 = vadd.f32 %v1863, %v1951
    %v1953 = vpop.f32.mrf.mxu0
    %v1954 = vadd.f32 %v1865, %v1953
    %1955 = vmatmul.bf16.gmra.mxu0 %v331
    %v1956 = vpop.f32.mrf.mxu0
    %v1957 = vadd.f32 %v1868, %v1956
    %v1958 = vpop.f32.mrf.mxu0
    %v1959 = vadd.f32 %v1870, %v1958
    %1960 = vmatmul.bf16.gmra.mxu0 %v338
    %v1961 = vpop.f32.mrf.mxu0
    %v1962 = vadd.f32 %v1873, %v1961
    %v1963 = vpop.f32.mrf.mxu0
    %v1964 = vadd.f32 %v1875, %v1963
    %1965 = vmatmul.bf16.gmra.mxu0 %v345
    %v1966 = vpop.f32.mrf.mxu0
    %v1967 = vadd.f32 %v1878, %v1966
    %v1968 = vpop.f32.mrf.mxu0
    %v1969 = vadd.f32 %v1880, %v1968
    %1970 = vmatmul.bf16.gmra.mxu0 %v352
    %v1971 = vpop.f32.mrf.mxu0
    %v1972 = vadd.f32 %v1883, %v1971
    %v1973 = vpop.f32.mrf.mxu0
    %v1974 = vadd.f32 %v1885, %v1973
    %1975 = vmatmul.bf16.gmra.mxu0 %v359
    %v1976 = vpop.f32.mrf.mxu0
    %v1977 = vadd.f32 %v1888, %v1976
    %v1978 = vpop.f32.mrf.mxu0
    %v1979 = vadd.f32 %v1890, %v1978
    %1980 = vmatmul.bf16.gmra.mxu0 %v366
    %v1981 = vpop.f32.mrf.mxu0
    %v1982 = vadd.f32 %v1893, %v1981
    %v1983 = vpop.f32.mrf.mxu0
    %v1984 = vadd.f32 %v1895, %v1983
    %1985 = vdwg.mxu0
    %1986 = vmatpush.bf16.msra.mxu0 %v841
    %1987 = vmatpush.bf16.msra.mxu0 %v839
    %1988 = vmatpush.bf16.msra.mxu0 %v837
    %1989 = vmatpush.bf16.msra.mxu0 %v835
    %1990 = vmatpush.bf16.msra.mxu0 %v833
    %1991 = vmatpush.bf16.msra.mxu0 %v831
    %1992 = vmatpush.bf16.msra.mxu0 %v829
    %1993 = vmatpush.bf16.msra.mxu0 %v827
    %1994 = vmatmul.bf16.gmra.mxu0 %v262
    %v1995 = vpop.f32.mrf.mxu0
    %v1996 = vadd.f32 %v1907, %v1995
    %v1997 = vpop.f32.mrf.mxu0
    %v1998 = vadd.f32 %v1909, %v1997
    %1999 = vmatmul.bf16.gmra.mxu0 %v269
    %v2000 = vpop.f32.mrf.mxu0
    %v2001 = vadd.f32 %v1912, %v2000
    %v2002 = vpop.f32.mrf.mxu0
    %v2003 = vadd.f32 %v1914, %v2002
    %2004 = vmatmul.bf16.gmra.mxu0 %v276
    %v2005 = vpop.f32.mrf.mxu0
    %v2006 = vadd.f32 %v1917, %v2005
    %v2007 = vpop.f32.mrf.mxu0
    %v2008 = vadd.f32 %v1919, %v2007
    %2009 = vmatmul.bf16.gmra.mxu0 %v283
    %v2010 = vpop.f32.mrf.mxu0
    %v2011 = vadd.f32 %v1922, %v2010
    %v2012 = vpop.f32.mrf.mxu0
    %v2013 = vadd.f32 %v1924, %v2012
    %2014 = vmatmul.bf16.gmra.mxu0 %v290
    %v2015 = vpop.f32.mrf.mxu0
    %v2016 = vadd.f32 %v1927, %v2015
    %v2017 = vpop.f32.mrf.mxu0
    %v2018 = vadd.f32 %v1929, %v2017
    %2019 = vmatmul.bf16.gmra.mxu0 %v297
    %v2020 = vpop.f32.mrf.mxu0
    %v2021 = vadd.f32 %v1932, %v2020
    %v2022 = vpop.f32.mrf.mxu0
    %v2023 = vadd.f32 %v1934, %v2022
    %2024 = vmatmul.bf16.gmra.mxu0 %v304
    %v2025 = vpop.f32.mrf.mxu0
    %v2026 = vadd.f32 %v1937, %v2025
    %v2027 = vpop.f32.mrf.mxu0
    %v2028 = vadd.f32 %v1939, %v2027
    %2029 = vmatmul.bf16.gmra.mxu0 %v311
    %v2030 = vpop.f32.mrf.mxu0
    %v2031 = vadd.f32 %v1942, %v2030
    %v2032 = vpop.f32.mrf.mxu0
    %v2033 = vadd.f32 %v1944, %v2032
    %2034 = vmatmul.bf16.gmra.mxu0 %v318
    %v2035 = vpop.f32.mrf.mxu0
    %v2036 = vadd.f32 %v1947, %v2035
    %v2037 = vpop.f32.mrf.mxu0
    %v2038 = vadd.f32 %v1949, %v2037
    %2039 = vmatmul.bf16.gmra.mxu0 %v325
    %v2040 = vpop.f32.mrf.mxu0
    %v2041 = vadd.f32 %v1952, %v2040
    %v2042 = vpop.f32.mrf.mxu0
    %v2043 = vadd.f32 %v1954, %v2042
    %2044 = vmatmul.bf16.gmra.mxu0 %v332
    %v2045 = vpop.f32.mrf.mxu0
    %v2046 = vadd.f32 %v1957, %v2045
    %v2047 = vpop.f32.mrf.mxu0
    %v2048 = vadd.f32 %v1959, %v2047
    %2049 = vmatmul.bf16.gmra.mxu0 %v339
    %v2050 = vpop.f32.mrf.mxu0
    %v2051 = vadd.f32 %v1962, %v2050
    %v2052 = vpop.f32.mrf.mxu0
    %v2053 = vadd.f32 %v1964, %v2052
    %2054 = vmatmul.bf16.gmra.mxu0 %v346
    %v2055 = vpop.f32.mrf.mxu0
    %v2056 = vadd.f32 %v1967, %v2055
    %v2057 = vpop.f32.mrf.mxu0
    %v2058 = vadd.f32 %v1969, %v2057
    %2059 = vmatmul.bf16.gmra.mxu0 %v353
    %v2060 = vpop.f32.mrf.mxu0
    %v2061 = vadd.f32 %v1972, %v2060
    %v2062 = vpop.f32.mrf.mxu0
    %v2063 = vadd.f32 %v1974, %v2062
    %2064 = vmatmul.bf16.gmra.mxu0 %v360
    %v2065 = vpop.f32.mrf.mxu0
    %v2066 = vadd.f32 %v1977, %v2065
    %v2067 = vpop.f32.mrf.mxu0
    %v2068 = vadd.f32 %v1979, %v2067
    %2069 = vmatmul.bf16.gmra.mxu0 %v367
    %v2070 = vpop.f32.mrf.mxu0
    %v2071 = vadd.f32 %v1982, %v2070
    %v2072 = vpop.f32.mrf.mxu0
    %v2073 = vadd.f32 %v1984, %v2072
    %2074 = vdwg.mxu0
    %2075 = vmatpush.bf16.msra.mxu0 %v857
    %2076 = vmatpush.bf16.msra.mxu0 %v855
    %2077 = vmatpush.bf16.msra.mxu0 %v853
    %2078 = vmatpush.bf16.msra.mxu0 %v851
    %2079 = vmatpush.bf16.msra.mxu0 %v849
    %2080 = vmatpush.bf16.msra.mxu0 %v847
    %2081 = vmatpush.bf16.msra.mxu0 %v845
    %2082 = vmatpush.bf16.msra.mxu0 %v843
    %2083 = vmatmul.bf16.gmra.mxu0 %v263
    %v2084 = vpop.f32.mrf.mxu0
    %v2085 = vadd.f32 %v1996, %v2084
    %v2086 = vpop.f32.mrf.mxu0
    %v2087 = vadd.f32 %v1998, %v2086
    %2088 = vmatmul.bf16.gmra.mxu0 %v270
    %v2089 = vpop.f32.mrf.mxu0
    %v2090 = vadd.f32 %v2001, %v2089
    %v2091 = vpop.f32.mrf.mxu0
    %v2092 = vadd.f32 %v2003, %v2091
    %2093 = vmatmul.bf16.gmra.mxu0 %v277
    %v2094 = vpop.f32.mrf.mxu0
    %v2095 = vadd.f32 %v2006, %v2094
    %v2096 = vpop.f32.mrf.mxu0
    %v2097 = vadd.f32 %v2008, %v2096
    %2098 = vmatmul.bf16.gmra.mxu0 %v284
    %v2099 = vpop.f32.mrf.mxu0
    %v2100 = vadd.f32 %v2011, %v2099
    %v2101 = vpop.f32.mrf.mxu0
    %v2102 = vadd.f32 %v2013, %v2101
    %2103 = vmatmul.bf16.gmra.mxu0 %v291
    %v2104 = vpop.f32.mrf.mxu0
    %v2105 = vadd.f32 %v2016, %v2104
    %v2106 = vpop.f32.mrf.mxu0
    %v2107 = vadd.f32 %v2018, %v2106
    %2108 = vmatmul.bf16.gmra.mxu0 %v298
    %v2109 = vpop.f32.mrf.mxu0
    %v2110 = vadd.f32 %v2021, %v2109
    %v2111 = vpop.f32.mrf.mxu0
    %v2112 = vadd.f32 %v2023, %v2111
    %2113 = vmatmul.bf16.gmra.mxu0 %v305
    %v2114 = vpop.f32.mrf.mxu0
    %v2115 = vadd.f32 %v2026, %v2114
    %v2116 = vpop.f32.mrf.mxu0
    %v2117 = vadd.f32 %v2028, %v2116
    %2118 = vmatmul.bf16.gmra.mxu0 %v312
    %v2119 = vpop.f32.mrf.mxu0
    %v2120 = vadd.f32 %v2031, %v2119
    %v2121 = vpop.f32.mrf.mxu0
    %v2122 = vadd.f32 %v2033, %v2121
    %2123 = vmatmul.bf16.gmra.mxu0 %v319
    %v2124 = vpop.f32.mrf.mxu0
    %v2125 = vadd.f32 %v2036, %v2124
    %v2126 = vpop.f32.mrf.mxu0
    %v2127 = vadd.f32 %v2038, %v2126
    %2128 = vmatmul.bf16.gmra.mxu0 %v326
    %v2129 = vpop.f32.mrf.mxu0
    %v2130 = vadd.f32 %v2041, %v2129
    %v2131 = vpop.f32.mrf.mxu0
    %v2132 = vadd.f32 %v2043, %v2131
    %2133 = vmatmul.bf16.gmra.mxu0 %v333
    %v2134 = vpop.f32.mrf.mxu0
    %v2135 = vadd.f32 %v2046, %v2134
    %v2136 = vpop.f32.mrf.mxu0
    %v2137 = vadd.f32 %v2048, %v2136
    %2138 = vmatmul.bf16.gmra.mxu0 %v340
    %v2139 = vpop.f32.mrf.mxu0
    %v2140 = vadd.f32 %v2051, %v2139
    %v2141 = vpop.f32.mrf.mxu0
    %v2142 = vadd.f32 %v2053, %v2141
    %2143 = vmatmul.bf16.gmra.mxu0 %v347
    %v2144 = vpop.f32.mrf.mxu0
    %v2145 = vadd.f32 %v2056, %v2144
    %v2146 = vpop.f32.mrf.mxu0
    %v2147 = vadd.f32 %v2058, %v2146
    %2148 = vmatmul.bf16.gmra.mxu0 %v354
    %v2149 = vpop.f32.mrf.mxu0
    %v2150 = vadd.f32 %v2061, %v2149
    %v2151 = vpop.f32.mrf.mxu0
    %v2152 = vadd.f32 %v2063, %v2151
    %2153 = vmatmul.bf16.gmra.mxu0 %v361
    %v2154 = vpop.f32.mrf.mxu0
    %v2155 = vadd.f32 %v2066, %v2154
    %v2156 = vpop.f32.mrf.mxu0
    %v2157 = vadd.f32 %v2068, %v2156
    %2158 = vmatmul.bf16.gmra.mxu0 %v368
    %v2159 = vpop.f32.mrf.mxu0
    %v2160 = vadd.f32 %v2071, %v2159
    %v2161 = vpop.f32.mrf.mxu0
    %v2162 = vadd.f32 %v2073, %v2161
    %2163 = vdwg.mxu0
    %2164 = vmatpush.bf16.msra.mxu0 0
    %2165 = vmatpush.bf16.msra.mxu0 0
    %2166 = vmatpush.bf16.msra.mxu0 0
    %2167 = vmatpush.bf16.msra.mxu0 0
    %2168 = vmatpush.bf16.msra.mxu0 0
    %2169 = vmatpush.bf16.msra.mxu0 0
    %2170 = vmatpush.bf16.msra.mxu0 0
    %2171 = vmatpush.bf16.msra.mxu0 %v859
    %2172 = vmatmul.bf16.gmra.mxu0 %v960
    %v2173 = vpop.f32.mrf.mxu0
    %v2174 = vadd.f32 %v2085, %v2173
    %v2175 = vpop.f32.mrf.mxu0
    %v2176 = vadd.f32 %v2087, %v2175
    %2177 = vmatmul.bf16.gmra.mxu0 %v963
    %v2178 = vpop.f32.mrf.mxu0
    %v2179 = vadd.f32 %v2090, %v2178
    %v2180 = vpop.f32.mrf.mxu0
    %v2181 = vadd.f32 %v2092, %v2180
    %2182 = vmatmul.bf16.gmra.mxu0 %v966
    %v2183 = vpop.f32.mrf.mxu0
    %v2184 = vadd.f32 %v2095, %v2183
    %v2185 = vpop.f32.mrf.mxu0
    %v2186 = vadd.f32 %v2097, %v2185
    %2187 = vmatmul.bf16.gmra.mxu0 %v969
    %v2188 = vpop.f32.mrf.mxu0
    %v2189 = vadd.f32 %v2100, %v2188
    %v2190 = vpop.f32.mrf.mxu0
    %v2191 = vadd.f32 %v2102, %v2190
    %2192 = vmatmul.bf16.gmra.mxu0 %v972
    %v2193 = vpop.f32.mrf.mxu0
    %v2194 = vadd.f32 %v2105, %v2193
    %v2195 = vpop.f32.mrf.mxu0
    %v2196 = vadd.f32 %v2107, %v2195
    %2197 = vmatmul.bf16.gmra.mxu0 %v975
    %v2198 = vpop.f32.mrf.mxu0
    %v2199 = vadd.f32 %v2110, %v2198
    %v2200 = vpop.f32.mrf.mxu0
    %v2201 = vadd.f32 %v2112, %v2200
    %2202 = vmatmul.bf16.gmra.mxu0 %v978
    %v2203 = vpop.f32.mrf.mxu0
    %v2204 = vadd.f32 %v2115, %v2203
    %v2205 = vpop.f32.mrf.mxu0
    %v2206 = vadd.f32 %v2117, %v2205
    %2207 = vmatmul.bf16.gmra.mxu0 %v981
    %v2208 = vpop.f32.mrf.mxu0
    %v2209 = vadd.f32 %v2120, %v2208
    %v2210 = vpop.f32.mrf.mxu0
    %v2211 = vadd.f32 %v2122, %v2210
    %2212 = vmatmul.bf16.gmra.mxu0 %v984
    %v2213 = vpop.f32.mrf.mxu0
    %v2214 = vadd.f32 %v2125, %v2213
    %v2215 = vpop.f32.mrf.mxu0
    %v2216 = vadd.f32 %v2127, %v2215
    %2217 = vmatmul.bf16.gmra.mxu0 %v987
    %v2218 = vpop.f32.mrf.mxu0
    %v2219 = vadd.f32 %v2130, %v2218
    %v2220 = vpop.f32.mrf.mxu0
    %v2221 = vadd.f32 %v2132, %v2220
    %2222 = vmatmul.bf16.gmra.mxu0 %v990
    %v2223 = vpop.f32.mrf.mxu0
    %v2224 = vadd.f32 %v2135, %v2223
    %v2225 = vpop.f32.mrf.mxu0
    %v2226 = vadd.f32 %v2137, %v2225
    %2227 = vmatmul.bf16.gmra.mxu0 %v993
    %v2228 = vpop.f32.mrf.mxu0
    %v2229 = vadd.f32 %v2140, %v2228
    %v2230 = vpop.f32.mrf.mxu0
    %v2231 = vadd.f32 %v2142, %v2230
    %2232 = vmatmul.bf16.gmra.mxu0 %v996
    %v2233 = vpop.f32.mrf.mxu0
    %v2234 = vadd.f32 %v2145, %v2233
    %v2235 = vpop.f32.mrf.mxu0
    %v2236 = vadd.f32 %v2147, %v2235
    %2237 = vmatmul.bf16.gmra.mxu0 %v999
    %v2238 = vpop.f32.mrf.mxu0
    %v2239 = vadd.f32 %v2150, %v2238
    %v2240 = vpop.f32.mrf.mxu0
    %v2241 = vadd.f32 %v2152, %v2240
    %2242 = vmatmul.bf16.gmra.mxu0 %v1002
    %v2243 = vpop.f32.mrf.mxu0
    %v2244 = vadd.f32 %v2155, %v2243
    %v2245 = vpop.f32.mrf.mxu0
    %v2246 = vadd.f32 %v2157, %v2245
    %2247 = vmatmul.bf16.gmra.mxu0 %v1005
    %v2248 = vpop.f32.mrf.mxu0
    %v2249 = vadd.f32 %v2160, %v2248
    %v2250 = vpop.f32.mrf.mxu0
    %v2251 = vadd.f32 %v2162, %v2250
    %2252 = vdwg.mxu0
    %v2253 = vadd.f32 %v1551, %v1553
    %v2254 = vadd.f32 %v2253, %v1556
    %v2255 = vadd.f32 %v2254, %v1558
    %v2256 = vadd.f32 %v2255, %v1561
    %v2257 = vadd.f32 %v2256, %v1563
    %v2258 = vadd.f32 %v2257, %v1566
    %v2259 = vadd.f32 %v2258, %v1568
    %v2260 = vadd.f32 %v2259, %v1571
    %v2261 = vadd.f32 %v2260, %v1573
    %v2262 = vadd.f32 %v2261, %v1576
    %v2263 = vadd.f32 %v2262, %v1578
    %v2264 = vadd.f32 %v2263, %v1581
    %v2265 = vadd.f32 %v2264, %v1583
    %v2266 = vadd.f32 %v2265, %v1586
    %v2267 = vadd.f32 %v2266, %v1588
    %v2268 = vadd.f32 %v2267, %v1591
    %v2269 = vadd.f32 %v2268, %v1593
    %v2270 = vadd.f32 %v2269, %v1596
    %v2271 = vadd.f32 %v2270, %v1598
    %v2272 = vadd.f32 %v2271, %v1601
    %v2273 = vadd.f32 %v2272, %v1603
    %v2274 = vadd.f32 %v2273, %v1606
    %v2275 = vadd.f32 %v2274, %v1608
    %v2276 = vadd.f32 %v2275, %v1611
    %v2277 = vadd.f32 %v2276, %v1613
    %v2278 = vadd.f32 %v2277, %v1616
    %v2279 = vadd.f32 %v2278, %v1618
    %v2280 = vadd.f32 %v2279, %v1621
    %v2281 = vadd.f32 %v2280, %v1623
    %v2282 = vadd.f32 %v2281, %v1626
    %v2283 = vadd.f32 %v2282, %v1628
    %v2284 = vrot.slane %v2283, 4
    %v2285 = vadd.f32 %v2283, %v2284
    %v2286 = vrot.slane %v2285, 2
    %v2287 = vadd.f32 %v2285, %v2286
    %v2288 = vrot.slane %v2287, 1
    %v2289 = vadd.f32 %v2287, %v2288
    %v2290 = vadd.f32 %v2174, %v2176
    %v2291 = vadd.f32 %v2290, %v2179
    %v2292 = vadd.f32 %v2291, %v2181
    %v2293 = vadd.f32 %v2292, %v2184
    %v2294 = vadd.f32 %v2293, %v2186
    %v2295 = vadd.f32 %v2294, %v2189
    %v2296 = vadd.f32 %v2295, %v2191
    %v2297 = vadd.f32 %v2296, %v2194
    %v2298 = vadd.f32 %v2297, %v2196
    %v2299 = vadd.f32 %v2298, %v2199
    %v2300 = vadd.f32 %v2299, %v2201
    %v2301 = vadd.f32 %v2300, %v2204
    %v2302 = vadd.f32 %v2301, %v2206
    %v2303 = vadd.f32 %v2302, %v2209
    %v2304 = vadd.f32 %v2303, %v2211
    %v2305 = vadd.f32 %v2304, %v2214
    %v2306 = vadd.f32 %v2305, %v2216
    %v2307 = vadd.f32 %v2306, %v2219
    %v2308 = vadd.f32 %v2307, %v2221
    %v2309 = vadd.f32 %v2308, %v2224
    %v2310 = vadd.f32 %v2309, %v2226
    %v2311 = vadd.f32 %v2310, %v2229
    %v2312 = vadd.f32 %v2311, %v2231
    %v2313 = vadd.f32 %v2312, %v2234
    %v2314 = vadd.f32 %v2313, %v2236
    %v2315 = vadd.f32 %v2314, %v2239
    %v2316 = vadd.f32 %v2315, %v2241
    %v2317 = vadd.f32 %v2316, %v2244
    %v2318 = vadd.f32 %v2317, %v2246
    %v2319 = vadd.f32 %v2318, %v2249
    %v2320 = vadd.f32 %v2319, %v2251
    %v2321 = vrot.slane %v2320, 4
    %v2322 = vadd.f32 %v2320, %v2321
    %v2323 = vrot.slane %v2322, 2
    %v2324 = vadd.f32 %v2322, %v2323
    %v2325 = vrot.slane %v2324, 1
    %v2326 = vadd.f32 %v2324, %v2325
    %v2327 = vmul.f32 %v2289, 0.00390625
    %v2328 = vmul.f32 %v2326, 0.00390625
    %v2329 = vsub.f32 %v1551, %v2327
    %v2330 = vsub.f32 %v2174, %v2328
    %v2331 = vsub.f32 %v1553, %v2327
    %v2332 = vsub.f32 %v2176, %v2328
    %v2333 = vsub.f32 %v1556, %v2327
    %v2334 = vsub.f32 %v2179, %v2328
    %v2335 = vsub.f32 %v1558, %v2327
    %v2336 = vsub.f32 %v2181, %v2328
    %v2337 = vsub.f32 %v1561, %v2327
    %v2338 = vsub.f32 %v2184, %v2328
    %v2339 = vsub.f32 %v1563, %v2327
    %v2340 = vsub.f32 %v2186, %v2328
    %v2341 = vsub.f32 %v1566, %v2327
    %v2342 = vsub.f32 %v2189, %v2328
    %v2343 = vsub.f32 %v1568, %v2327
    %v2344 = vsub.f32 %v2191, %v2328
    %v2345 = vsub.f32 %v1571, %v2327
    %v2346 = vsub.f32 %v2194, %v2328
    %v2347 = vsub.f32 %v1573, %v2327
    %v2348 = vsub.f32 %v2196, %v2328
    %v2349 = vsub.f32 %v1576, %v2327
    %v2350 = vsub.f32 %v2199, %v2328
    %v2351 = vsub.f32 %v1578, %v2327
    %v2352 = vsub.f32 %v2201, %v2328
    %v2353 = vsub.f32 %v1581, %v2327
    %v2354 = vsub.f32 %v2204, %v2328
    %v2355 = vsub.f32 %v1583, %v2327
    %v2356 = vsub.f32 %v2206, %v2328
    %v2357 = vsub.f32 %v1586, %v2327
    %v2358 = vsub.f32 %v2209, %v2328
    %v2359 = vsub.f32 %v1588, %v2327
    %v2360 = vsub.f32 %v2211, %v2328
    %v2361 = vsub.f32 %v1591, %v2327
    %v2362 = vsub.f32 %v2214, %v2328
    %v2363 = vsub.f32 %v1593, %v2327
    %v2364 = vsub.f32 %v2216, %v2328
    %v2365 = vsub.f32 %v1596, %v2327
    %v2366 = vsub.f32 %v2219, %v2328
    %v2367 = vsub.f32 %v1598, %v2327
    %v2368 = vsub.f32 %v2221, %v2328
    %v2369 = vsub.f32 %v1601, %v2327
    %v2370 = vsub.f32 %v2224, %v2328
    %v2371 = vsub.f32 %v1603, %v2327
    %v2372 = vsub.f32 %v2226, %v2328
    %v2373 = vsub.f32 %v1606, %v2327
    %v2374 = vsub.f32 %v2229, %v2328
    %v2375 = vsub.f32 %v1608, %v2327
    %v2376 = vsub.f32 %v2231, %v2328
    %v2377 = vsub.f32 %v1611, %v2327
    %v2378 = vsub.f32 %v2234, %v2328
    %v2379 = vsub.f32 %v1613, %v2327
    %v2380 = vsub.f32 %v2236, %v2328
    %v2381 = vsub.f32 %v1616, %v2327
    %v2382 = vsub.f32 %v2239, %v2328
    %v2383 = vsub.f32 %v1618, %v2327
    %v2384 = vsub.f32 %v2241, %v2328
    %v2385 = vsub.f32 %v1621, %v2327
    %v2386 = vsub.f32 %v2244, %v2328
    %v2387 = vsub.f32 %v1623, %v2327
    %v2388 = vsub.f32 %v2246, %v2328
    %v2389 = vsub.f32 %v1626, %v2327
    %v2390 = vsub.f32 %v2249, %v2328
    %v2391 = vsub.f32 %v1628, %v2327
    %v2392 = vsub.f32 %v2251, %v2328
    %v2393 = vmul.f32 %v2329, %v2329
    %v2394 = vmul.f32 %v2330, %v2330
    %v2395 = vmul.f32 %v2331, %v2331
    %v2396 = vmul.f32 %v2332, %v2332
    %v2397 = vmul.f32 %v2333, %v2333
    %v2398 = vmul.f32 %v2334, %v2334
    %v2399 = vmul.f32 %v2335, %v2335
    %v2400 = vmul.f32 %v2336, %v2336
    %v2401 = vmul.f32 %v2337, %v2337
    %v2402 = vmul.f32 %v2338, %v2338
    %v2403 = vmul.f32 %v2339, %v2339
    %v2404 = vmul.f32 %v2340, %v2340
    %v2405 = vmul.f32 %v2341, %v2341
    %v2406 = vmul.f32 %v2342, %v2342
    %v2407 = vmul.f32 %v2343, %v2343
    %v2408 = vmul.f32 %v2344, %v2344
    %v2409 = vmul.f32 %v2345, %v2345
    %v2410 = vmul.f32 %v2346, %v2346
    %v2411 = vmul.f32 %v2347, %v2347
    %v2412 = vmul.f32 %v2348, %v2348
    %v2413 = vmul.f32 %v2349, %v2349
    %v2414 = vmul.f32 %v2350, %v2350
    %v2415 = vmul.f32 %v2351, %v2351
    %v2416 = vmul.f32 %v2352, %v2352
    %v2417 = vmul.f32 %v2353, %v2353
    %v2418 = vmul.f32 %v2354, %v2354
    %v2419 = vmul.f32 %v2355, %v2355
    %v2420 = vmul.f32 %v2356, %v2356
    %v2421 = vmul.f32 %v2357, %v2357
    %v2422 = vmul.f32 %v2358, %v2358
    %v2423 = vmul.f32 %v2359, %v2359
    %v2424 = vmul.f32 %v2360, %v2360
    %v2425 = vmul.f32 %v2361, %v2361
    %v2426 = vmul.f32 %v2362, %v2362
    %v2427 = vmul.f32 %v2363, %v2363
    %v2428 = vmul.f32 %v2364, %v2364
    %v2429 = vmul.f32 %v2365, %v2365
    %v2430 = vmul.f32 %v2366, %v2366
    %v2431 = vmul.f32 %v2367, %v2367
    %v2432 = vmul.f32 %v2368, %v2368
    %v2433 = vmul.f32 %v2369, %v2369
    %v2434 = vmul.f32 %v2370, %v2370
    %v2435 = vmul.f32 %v2371, %v2371
    %v2436 = vmul.f32 %v2372, %v2372
    %v2437 = vmul.f32 %v2373, %v2373
    %v2438 = vmul.f32 %v2374, %v2374
    %v2439 = vmul.f32 %v2375, %v2375
    %v2440 = vmul.f32 %v2376, %v2376
    %v2441 = vmul.f32 %v2377, %v2377
    %v2442 = vmul.f32 %v2378, %v2378
    %v2443 = vmul.f32 %v2379, %v2379
    %v2444 = vmul.f32 %v2380, %v2380
    %v2445 = vmul.f32 %v2381, %v2381
    %v2446 = vmul.f32 %v2382, %v2382
    %v2447 = vmul.f32 %v2383, %v2383
    %v2448 = vmul.f32 %v2384, %v2384
    %v2449 = vmul.f32 %v2385, %v2385
    %v2450 = vmul.f32 %v2386, %v2386
    %v2451 = vmul.f32 %v2387, %v2387
    %v2452 = vmul.f32 %v2388, %v2388
    %v2453 = vmul.f32 %v2389, %v2389
    %v2454 = vmul.f32 %v2390, %v2390
    %v2455 = vmul.f32 %v2391, %v2391
    %v2456 = vmul.f32 %v2392, %v2392
    %v2457 = vadd.f32 %v2393, %v2395
    %v2458 = vadd.f32 %v2457, %v2397
    %v2459 = vadd.f32 %v2458, %v2399
    %v2460 = vadd.f32 %v2459, %v2401
    %v2461 = vadd.f32 %v2460, %v2403
    %v2462 = vadd.f32 %v2461, %v2405
    %v2463 = vadd.f32 %v2462, %v2407
    %v2464 = vadd.f32 %v2463, %v2409
    %v2465 = vadd.f32 %v2464, %v2411
    %v2466 = vadd.f32 %v2465, %v2413
    %v2467 = vadd.f32 %v2466, %v2415
    %v2468 = vadd.f32 %v2467, %v2417
    %v2469 = vadd.f32 %v2468, %v2419
    %v2470 = vadd.f32 %v2469, %v2421
    %v2471 = vadd.f32 %v2470, %v2423
    %v2472 = vadd.f32 %v2471, %v2425
    %v2473 = vadd.f32 %v2472, %v2427
    %v2474 = vadd.f32 %v2473, %v2429
    %v2475 = vadd.f32 %v2474, %v2431
    %v2476 = vadd.f32 %v2475, %v2433
    %v2477 = vadd.f32 %v2476, %v2435
    %v2478 = vadd.f32 %v2477, %v2437
    %v2479 = vadd.f32 %v2478, %v2439
    %v2480 = vadd.f32 %v2479, %v2441
    %v2481 = vadd.f32 %v2480, %v2443
    %v2482 = vadd.f32 %v2481, %v2445
    %v2483 = vadd.f32 %v2482, %v2447
    %v2484 = vadd.f32 %v2483, %v2449
    %v2485 = vadd.f32 %v2484, %v2451
    %v2486 = vadd.f32 %v2485, %v2453
    %v2487 = vadd.f32 %v2486, %v2455
    %v2488 = vrot.slane %v2487, 4
    %v2489 = vadd.f32 %v2487, %v2488
    %v2490 = vrot.slane %v2489, 2
    %v2491 = vadd.f32 %v2489, %v2490
    %v2492 = vrot.slane %v2491, 1
    %v2493 = vadd.f32 %v2491, %v2492
    %v2494 = vadd.f32 %v2394, %v2396
    %v2495 = vadd.f32 %v2494, %v2398
    %v2496 = vadd.f32 %v2495, %v2400
    %v2497 = vadd.f32 %v2496, %v2402
    %v2498 = vadd.f32 %v2497, %v2404
    %v2499 = vadd.f32 %v2498, %v2406
    %v2500 = vadd.f32 %v2499, %v2408
    %v2501 = vadd.f32 %v2500, %v2410
    %v2502 = vadd.f32 %v2501, %v2412
    %v2503 = vadd.f32 %v2502, %v2414
    %v2504 = vadd.f32 %v2503, %v2416
    %v2505 = vadd.f32 %v2504, %v2418
    %v2506 = vadd.f32 %v2505, %v2420
    %v2507 = vadd.f32 %v2506, %v2422
    %v2508 = vadd.f32 %v2507, %v2424
    %v2509 = vadd.f32 %v2508, %v2426
    %v2510 = vadd.f32 %v2509, %v2428
    %v2511 = vadd.f32 %v2510, %v2430
    %v2512 = vadd.f32 %v2511, %v2432
    %v2513 = vadd.f32 %v2512, %v2434
    %v2514 = vadd.f32 %v2513, %v2436
    %v2515 = vadd.f32 %v2514, %v2438
    %v2516 = vadd.f32 %v2515, %v2440
    %v2517 = vadd.f32 %v2516, %v2442
    %v2518 = vadd.f32 %v2517, %v2444
    %v2519 = vadd.f32 %v2518, %v2446
    %v2520 = vadd.f32 %v2519, %v2448
    %v2521 = vadd.f32 %v2520, %v2450
    %v2522 = vadd.f32 %v2521, %v2452
    %v2523 = vadd.f32 %v2522, %v2454
    %v2524 = vadd.f32 %v2523, %v2456
    %v2525 = vrot.slane %v2524, 4
    %v2526 = vadd.f32 %v2524, %v2525
    %v2527 = vrot.slane %v2526, 2
    %v2528 = vadd.f32 %v2526, %v2527
    %v2529 = vrot.slane %v2528, 1
    %v2530 = vadd.f32 %v2528, %v2529
    %v2531 = vmul.f32 %v2493, 0.00390625
    %v2532 = vmul.f32 %v2530, 0.00390625
    %v2533 = vld [vmem:[%s2] sm:$0x3]
    %v2534 = vadd.f32 %v2531, 1e-05
    %v2535 = vadd.f32 %v2532, 1e-05
    %v2536 = vrsqrt.pop %v2534
    %v2537 = vmul.f32 %v2536, %v2534
    %v2538 = vmul.f32 %v2537, %v2536
    %v2539 = vmul.f32 0.5, %v2538
    %v2540 = vsub.f32 1.5, %v2539
    %v2541 = vmul.f32 %v2536, %v2540
    %vm2542 = vweird.f32 %v2534
    %vm2543 = vweird.f32 %v2536
    %vm2544 = vmor %vm2542, %vm2543
    %v2545 = vsel %vm2544, %v2536, %v2541
    %v2546 = vrsqrt.pop %v2535
    %v2547 = vmul.f32 %v2546, %v2535
    %v2548 = vmul.f32 %v2547, %v2546
    %v2549 = vmul.f32 0.5, %v2548
    %v2550 = vsub.f32 1.5, %v2549
    %v2551 = vmul.f32 %v2546, %v2550
    %vm2552 = vweird.f32 %v2535
    %vm2553 = vweird.f32 %v2546
    %vm2554 = vmor %vm2552, %vm2553
    %v2555 = vsel %vm2554, %v2546, %v2551
    %v2558 = vrot.slane %v2555, 7
    %vm2559 = vcmask 1040384
    %v2560 = vsel %vm2559, %v2545, %v2558
    %v2562 = vmul.f32 %v2533, %v2560
    %v2564 = vperm.slane %v2562, 0
    %v2565 = vperm.slane %v2562, 1
    %v2568 = vmul.f32 %v2329, %v2564
    %v2569 = vmul.f32 %v2330, %v2565
    %v2570 = vmul.f32 %v2331, %v2564
    %v2571 = vmul.f32 %v2332, %v2565
    %v2572 = vmul.f32 %v2333, %v2564
    %v2573 = vmul.f32 %v2334, %v2565
    %v2574 = vmul.f32 %v2335, %v2564
    %v2575 = vmul.f32 %v2336, %v2565
    %v2576 = vmul.f32 %v2337, %v2564
    %v2577 = vmul.f32 %v2338, %v2565
    %v2578 = vmul.f32 %v2339, %v2564
    %v2579 = vmul.f32 %v2340, %v2565
    %v2580 = vmul.f32 %v2341, %v2564
    %v2581 = vmul.f32 %v2342, %v2565
    %v2582 = vmul.f32 %v2343, %v2564
    %v2583 = vmul.f32 %v2344, %v2565
    %v2584 = vmul.f32 %v2345, %v2564
    %v2585 = vmul.f32 %v2346, %v2565
    %v2586 = vmul.f32 %v2347, %v2564
    %v2587 = vmul.f32 %v2348, %v2565
    %v2588 = vmul.f32 %v2349, %v2564
    %v2589 = vmul.f32 %v2350, %v2565
    %v2590 = vmul.f32 %v2351, %v2564
    %v2591 = vmul.f32 %v2352, %v2565
    %v2592 = vmul.f32 %v2353, %v2564
    %v2593 = vmul.f32 %v2354, %v2565
    %v2594 = vmul.f32 %v2355, %v2564
    %v2595 = vmul.f32 %v2356, %v2565
    %v2596 = vmul.f32 %v2357, %v2564
    %v2597 = vmul.f32 %v2358, %v2565
    %v2598 = vmul.f32 %v2359, %v2564
    %v2599 = vmul.f32 %v2360, %v2565
    %v2600 = vmul.f32 %v2361, %v2564
    %v2601 = vmul.f32 %v2362, %v2565
    %v2602 = vmul.f32 %v2363, %v2564
    %v2603 = vmul.f32 %v2364, %v2565
    %v2604 = vmul.f32 %v2365, %v2564
    %v2605 = vmul.f32 %v2366, %v2565
    %v2606 = vmul.f32 %v2367, %v2564
    %v2607 = vmul.f32 %v2368, %v2565
    %v2608 = vmul.f32 %v2369, %v2564
    %v2609 = vmul.f32 %v2370, %v2565
    %v2610 = vmul.f32 %v2371, %v2564
    %v2611 = vmul.f32 %v2372, %v2565
    %v2612 = vmul.f32 %v2373, %v2564
    %v2613 = vmul.f32 %v2374, %v2565
    %v2614 = vmul.f32 %v2375, %v2564
    %v2615 = vmul.f32 %v2376, %v2565
    %v2616 = vmul.f32 %v2377, %v2564
    %v2617 = vmul.f32 %v2378, %v2565
    %v2618 = vmul.f32 %v2379, %v2564
    %v2619 = vmul.f32 %v2380, %v2565
    %v2620 = vmul.f32 %v2381, %v2564
    %v2621 = vmul.f32 %v2382, %v2565
    %v2622 = vmul.f32 %v2383, %v2564
    %v2623 = vmul.f32 %v2384, %v2565
    %v2624 = vmul.f32 %v2385, %v2564
    %v2625 = vmul.f32 %v2386, %v2565
    %v2626 = vmul.f32 %v2387, %v2564
    %v2627 = vmul.f32 %v2388, %v2565
    %v2628 = vmul.f32 %v2389, %v2564
    %v2629 = vmul.f32 %v2390, %v2565
    %v2630 = vmul.f32 %v2391, %v2564
    %v2631 = vmul.f32 %v2392, %v2565
    %v2632 = vld [vmem:[%s3] sm:$0x3]
    %v2634 = vperm.slane %v2632, 0
    %v2635 = vperm.slane %v2632, 1
    %v2638 = vadd.f32 %v2568, %v2634
    %v2639 = vadd.f32 %v2569, %v2635
    %v2640 = vadd.f32 %v2570, %v2634
    %v2641 = vadd.f32 %v2571, %v2635
    %v2642 = vadd.f32 %v2572, %v2634
    %v2643 = vadd.f32 %v2573, %v2635
    %v2644 = vadd.f32 %v2574, %v2634
    %v2645 = vadd.f32 %v2575, %v2635
    %v2646 = vadd.f32 %v2576, %v2634
    %v2647 = vadd.f32 %v2577, %v2635
    %v2648 = vadd.f32 %v2578, %v2634
    %v2649 = vadd.f32 %v2579, %v2635
    %v2650 = vadd.f32 %v2580, %v2634
    %v2651 = vadd.f32 %v2581, %v2635
    %v2652 = vadd.f32 %v2582, %v2634
    %v2653 = vadd.f32 %v2583, %v2635
    %v2654 = vadd.f32 %v2584, %v2634
    %v2655 = vadd.f32 %v2585, %v2635
    %v2656 = vadd.f32 %v2586, %v2634
    %v2657 = vadd.f32 %v2587, %v2635
    %v2658 = vadd.f32 %v2588, %v2634
    %v2659 = vadd.f32 %v2589, %v2635
    %v2660 = vadd.f32 %v2590, %v2634
    %v2661 = vadd.f32 %v2591, %v2635
    %v2662 = vadd.f32 %v2592, %v2634
    %v2663 = vadd.f32 %v2593, %v2635
    %v2664 = vadd.f32 %v2594, %v2634
    %v2665 = vadd.f32 %v2595, %v2635
    %v2666 = vadd.f32 %v2596, %v2634
    %v2667 = vadd.f32 %v2597, %v2635
    %v2668 = vadd.f32 %v2598, %v2634
    %v2669 = vadd.f32 %v2599, %v2635
    %v2670 = vadd.f32 %v2600, %v2634
    %v2671 = vadd.f32 %v2601, %v2635
    %v2672 = vadd.f32 %v2602, %v2634
    %v2673 = vadd.f32 %v2603, %v2635
    %v2674 = vadd.f32 %v2604, %v2634
    %v2675 = vadd.f32 %v2605, %v2635
    %v2676 = vadd.f32 %v2606, %v2634
    %v2677 = vadd.f32 %v2607, %v2635
    %v2678 = vadd.f32 %v2608, %v2634
    %v2679 = vadd.f32 %v2609, %v2635
    %v2680 = vadd.f32 %v2610, %v2634
    %v2681 = vadd.f32 %v2611, %v2635
    %v2682 = vadd.f32 %v2612, %v2634
    %v2683 = vadd.f32 %v2613, %v2635
    %v2684 = vadd.f32 %v2614, %v2634
    %v2685 = vadd.f32 %v2615, %v2635
    %v2686 = vadd.f32 %v2616, %v2634
    %v2687 = vadd.f32 %v2617, %v2635
    %v2688 = vadd.f32 %v2618, %v2634
    %v2689 = vadd.f32 %v2619, %v2635
    %v2690 = vadd.f32 %v2620, %v2634
    %v2691 = vadd.f32 %v2621, %v2635
    %v2692 = vadd.f32 %v2622, %v2634
    %v2693 = vadd.f32 %v2623, %v2635
    %v2694 = vadd.f32 %v2624, %v2634
    %v2695 = vadd.f32 %v2625, %v2635
    %v2696 = vadd.f32 %v2626, %v2634
    %v2697 = vadd.f32 %v2627, %v2635
    %v2698 = vadd.f32 %v2628, %v2634
    %v2699 = vadd.f32 %v2629, %v2635
    %v2700 = vadd.f32 %v2630, %v2634
    %v2701 = vadd.f32 %v2631, %v2635
    %v2702 = vmax.f32 %v2638, 0.0
    %v2703 = vmax.f32 %v2639, 0.0
    %v2704 = vmax.f32 %v2640, 0.0
    %v2705 = vmax.f32 %v2641, 0.0
    %v2706 = vmax.f32 %v2642, 0.0
    %v2707 = vmax.f32 %v2643, 0.0
    %v2708 = vmax.f32 %v2644, 0.0
    %v2709 = vmax.f32 %v2645, 0.0
    %v2710 = vmax.f32 %v2646, 0.0
    %v2711 = vmax.f32 %v2647, 0.0
    %v2712 = vmax.f32 %v2648, 0.0
    %v2713 = vmax.f32 %v2649, 0.0
    %v2714 = vmax.f32 %v2650, 0.0
    %v2715 = vmax.f32 %v2651, 0.0
    %v2716 = vmax.f32 %v2652, 0.0
    %v2717 = vmax.f32 %v2653, 0.0
    %v2718 = vmax.f32 %v2654, 0.0
    %v2719 = vmax.f32 %v2655, 0.0
    %v2720 = vmax.f32 %v2656, 0.0
    %v2721 = vmax.f32 %v2657, 0.0
    %v2722 = vmax.f32 %v2658, 0.0
    %v2723 = vmax.f32 %v2659, 0.0
    %v2724 = vmax.f32 %v2660, 0.0
    %v2725 = vmax.f32 %v2661, 0.0
    %v2726 = vmax.f32 %v2662, 0.0
    %v2727 = vmax.f32 %v2663, 0.0
    %v2728 = vmax.f32 %v2664, 0.0
    %v2729 = vmax.f32 %v2665, 0.0
    %v2730 = vmax.f32 %v2666, 0.0
    %v2731 = vmax.f32 %v2667, 0.0
    %v2732 = vmax.f32 %v2668, 0.0
    %v2733 = vmax.f32 %v2669, 0.0
    %v2734 = vmax.f32 %v2670, 0.0
    %v2735 = vmax.f32 %v2671, 0.0
    %v2736 = vmax.f32 %v2672, 0.0
    %v2737 = vmax.f32 %v2673, 0.0
    %v2738 = vmax.f32 %v2674, 0.0
    %v2739 = vmax.f32 %v2675, 0.0
    %v2740 = vmax.f32 %v2676, 0.0
    %v2741 = vmax.f32 %v2677, 0.0
    %v2742 = vmax.f32 %v2678, 0.0
    %v2743 = vmax.f32 %v2679, 0.0
    %v2744 = vmax.f32 %v2680, 0.0
    %v2745 = vmax.f32 %v2681, 0.0
    %v2746 = vmax.f32 %v2682, 0.0
    %v2747 = vmax.f32 %v2683, 0.0
    %v2748 = vmax.f32 %v2684, 0.0
    %v2749 = vmax.f32 %v2685, 0.0
    %v2750 = vmax.f32 %v2686, 0.0
    %v2751 = vmax.f32 %v2687, 0.0
    %v2752 = vmax.f32 %v2688, 0.0
    %v2753 = vmax.f32 %v2689, 0.0
    %v2754 = vmax.f32 %v2690, 0.0
    %v2755 = vmax.f32 %v2691, 0.0
    %v2756 = vmax.f32 %v2692, 0.0
    %v2757 = vmax.f32 %v2693, 0.0
    %v2758 = vmax.f32 %v2694, 0.0
    %v2759 = vmax.f32 %v2695, 0.0
    %v2760 = vmax.f32 %v2696, 0.0
    %v2761 = vmax.f32 %v2697, 0.0
    %v2762 = vmax.f32 %v2698, 0.0
    %v2763 = vmax.f32 %v2699, 0.0
    %v2764 = vmax.f32 %v2700, 0.0
    %v2765 = vmax.f32 %v2701, 0.0
    %v2766 = vpack.c.bf16 %v2704, %v2702
    %v2767 = vpack.c.bf16 %v2705, %v2703
    %v2768 = vpack.c.bf16 %v2708, %v2706
    %v2769 = vpack.c.bf16 %v2709, %v2707
    %v2770 = vpack.c.bf16 %v2712, %v2710
    %v2771 = vpack.c.bf16 %v2713, %v2711
    %v2772 = vpack.c.bf16 %v2716, %v2714
    %v2773 = vpack.c.bf16 %v2717, %v2715
    %v2774 = vpack.c.bf16 %v2720, %v2718
    %v2775 = vpack.c.bf16 %v2721, %v2719
    %v2776 = vpack.c.bf16 %v2724, %v2722
    %v2777 = vpack.c.bf16 %v2725, %v2723
    %v2778 = vpack.c.bf16 %v2728, %v2726
    %v2779 = vpack.c.bf16 %v2729, %v2727
    %v2780 = vpack.c.bf16 %v2732, %v2730
    %v2781 = vpack.c.bf16 %v2733, %v2731
    %v2782 = vpack.c.bf16 %v2736, %v2734
    %v2783 = vpack.c.bf16 %v2737, %v2735
    %v2784 = vpack.c.bf16 %v2740, %v2738
    %v2785 = vpack.c.bf16 %v2741, %v2739
    %v2786 = vpack.c.bf16 %v2744, %v2742
    %v2787 = vpack.c.bf16 %v2745, %v2743
    %v2788 = vpack.c.bf16 %v2748, %v2746
    %v2789 = vpack.c.bf16 %v2749, %v2747
    %v2790 = vpack.c.bf16 %v2752, %v2750
    %v2791 = vpack.c.bf16 %v2753, %v2751
    %v2792 = vpack.c.bf16 %v2756, %v2754
    %v2793 = vpack.c.bf16 %v2757, %v2755
    %v2794 = vpack.c.bf16 %v2760, %v2758
    %v2795 = vpack.c.bf16 %v2761, %v2759
    %v2796 = vpack.c.bf16 %v2764, %v2762
    %v2797 = vpack.c.bf16 %v2765, %v2763
    %v2798 = vld [vmem:[%s4] sm:$0xf]
    %v2799 = vld [vmem:[%s4 + $0x4] sm:$0xf]
    %v2800 = vld [vmem:[%s4 + $0x8] sm:$0xf]
    %v2801 = vld [vmem:[%s4 + $0xc] sm:$0xf]
    %v2802 = vld [vmem:[%s4 + $0x10] sm:$0xf]
    %v2803 = vld [vmem:[%s4 + $0x14] sm:$0xf]
    %v2804 = vld [vmem:[%s4 + $0x18] sm:$0xf]
    %v2805 = vld [vmem:[%s4 + $0x1c] sm:$0xf]
    %v2806 = vld [vmem:[%s4 + $0x20] sm:$0xf]
    %v2807 = vld [vmem:[%s4 + $0x24] sm:$0xf]
    %v2808 = vld [vmem:[%s4 + $0x28] sm:$0xf]
    %v2809 = vld [vmem:[%s4 + $0x2c] sm:$0xf]
    %v2810 = vld [vmem:[%s4 + $0x30] sm:$0xf]
    %v2811 = vld [vmem:[%s4 + $0x34] sm:$0xf]
    %v2812 = vld [vmem:[%s4 + $0x38] sm:$0xf]
    %v2813 = vld [vmem:[%s4 + $0x3c] sm:$0xf]
    %v2814 = vld [vmem:[%s4 + $0x40] sm:$0xf]
    %v2815 = vld [vmem:[%s4 + $0x44] sm:$0xf]
    %v2816 = vld [vmem:[%s4 + $0x48] sm:$0xf]
    %v2817 = vld [vmem:[%s4 + $0x4c] sm:$0xf]
    %v2818 = vld [vmem:[%s4 + $0x50] sm:$0xf]
    %v2819 = vld [vmem:[%s4 + $0x54] sm:$0xf]
    %v2820 = vld [vmem:[%s4 + $0x58] sm:$0xf]
    %v2821 = vld [vmem:[%s4 + $0x5c] sm:$0xf]
    %v2822 = vld [vmem:[%s4 + $0x60] sm:$0xf]
    %v2823 = vld [vmem:[%s4 + $0x64] sm:$0xf]
    %v2824 = vld [vmem:[%s4 + $0x68] sm:$0xf]
    %v2825 = vld [vmem:[%s4 + $0x6c] sm:$0xf]
    %v2826 = vld [vmem:[%s4 + $0x70] sm:$0xf]
    %v2827 = vld [vmem:[%s4 + $0x74] sm:$0xf]
    %v2828 = vld [vmem:[%s4 + $0x78] sm:$0xf]
    %v2829 = vld [vmem:[%s4 + $0x7c] sm:$0xf]
    %v2862 = vunpack.c.l.b16 %v2798
    %v2863 = vunpack.c.l.b16 %v2799
    %v2864 = vunpack.c.l.b16 %v2800
    %v2865 = vunpack.c.l.b16 %v2801
    %v2866 = vunpack.c.l.b16 %v2802
    %v2867 = vunpack.c.l.b16 %v2803
    %v2868 = vunpack.c.l.b16 %v2804
    %v2869 = vunpack.c.l.b16 %v2805
    %v2870 = vunpack.c.l.b16 %v2806
    %v2871 = vunpack.c.l.b16 %v2807
    %v2872 = vunpack.c.l.b16 %v2808
    %v2873 = vunpack.c.l.b16 %v2809
    %v2874 = vunpack.c.l.b16 %v2810
    %v2875 = vunpack.c.l.b16 %v2811
    %v2876 = vunpack.c.l.b16 %v2812
    %v2877 = vunpack.c.l.b16 %v2813
    %v2878 = vunpack.c.l.b16 %v2814
    %v2879 = vunpack.c.l.b16 %v2815
    %v2880 = vunpack.c.l.b16 %v2816
    %v2881 = vunpack.c.l.b16 %v2817
    %v2882 = vunpack.c.l.b16 %v2818
    %v2883 = vunpack.c.l.b16 %v2819
    %v2884 = vunpack.c.l.b16 %v2820
    %v2885 = vunpack.c.l.b16 %v2821
    %v2886 = vunpack.c.l.b16 %v2822
    %v2887 = vunpack.c.l.b16 %v2823
    %v2888 = vunpack.c.l.b16 %v2824
    %v2889 = vunpack.c.l.b16 %v2825
    %v2890 = vunpack.c.l.b16 %v2826
    %v2891 = vunpack.c.l.b16 %v2827
    %v2892 = vunpack.c.l.b16 %v2828
    %v2893 = vunpack.c.l.b16 %v2829
    %v2894 = vpack.c.b16 %v2863, %v2862
    %v2895 = vpack.c.b16 %v2865, %v2864
    %v2896 = vpack.c.b16 %v2867, %v2866
    %v2897 = vpack.c.b16 %v2869, %v2868
    %v2898 = vpack.c.b16 %v2871, %v2870
    %v2899 = vpack.c.b16 %v2873, %v2872
    %v2900 = vpack.c.b16 %v2875, %v2874
    %v2901 = vpack.c.b16 %v2877, %v2876
    %v2902 = vpack.c.b16 %v2879, %v2878
    %v2903 = vpack.c.b16 %v2881, %v2880
    %v2904 = vpack.c.b16 %v2883, %v2882
    %v2905 = vpack.c.b16 %v2885, %v2884
    %v2906 = vpack.c.b16 %v2887, %v2886
    %v2907 = vpack.c.b16 %v2889, %v2888
    %v2908 = vpack.c.b16 %v2891, %v2890
    %v2909 = vpack.c.b16 %v2893, %v2892
    %2926 = vmatpush.bf16.msra.mxu0 %v2901
    %2927 = vmatpush.bf16.msra.mxu0 %v2900
    %2928 = vmatpush.bf16.msra.mxu0 %v2899
    %2929 = vmatpush.bf16.msra.mxu0 %v2898
    %2930 = vmatpush.bf16.msra.mxu0 %v2897
    %2931 = vmatpush.bf16.msra.mxu0 %v2896
    %2932 = vmatpush.bf16.msra.mxu0 %v2895
    %2933 = vmatpush.bf16.msra.mxu0 %v2894
    %2934 = vmatmul.bf16.gmra.mxu0 %v2766
    %v2935 = vpop.f32.mrf.mxu0
    %v2936 = vadd.f32 0.0, %v2935
    %v2937 = vpop.f32.mrf.mxu0
    %v2938 = vadd.f32 0.0, %v2937
    %2939 = vmatmul.bf16.gmra.mxu0 %v2768
    %v2940 = vpop.f32.mrf.mxu0
    %v2941 = vadd.f32 0.0, %v2940
    %v2942 = vpop.f32.mrf.mxu0
    %v2943 = vadd.f32 0.0, %v2942
    %2944 = vmatmul.bf16.gmra.mxu0 %v2770
    %v2945 = vpop.f32.mrf.mxu0
    %v2946 = vadd.f32 0.0, %v2945
    %v2947 = vpop.f32.mrf.mxu0
    %v2948 = vadd.f32 0.0, %v2947
    %2949 = vmatmul.bf16.gmra.mxu0 %v2772
    %v2950 = vpop.f32.mrf.mxu0
    %v2951 = vadd.f32 0.0, %v2950
    %v2952 = vpop.f32.mrf.mxu0
    %v2953 = vadd.f32 0.0, %v2952
    %2954 = vmatmul.bf16.gmra.mxu0 %v2774
    %v2955 = vpop.f32.mrf.mxu0
    %v2956 = vadd.f32 0.0, %v2955
    %v2957 = vpop.f32.mrf.mxu0
    %v2958 = vadd.f32 0.0, %v2957
    %2959 = vmatmul.bf16.gmra.mxu0 %v2776
    %v2960 = vpop.f32.mrf.mxu0
    %v2961 = vadd.f32 0.0, %v2960
    %v2962 = vpop.f32.mrf.mxu0
    %v2963 = vadd.f32 0.0, %v2962
    %2964 = vmatmul.bf16.gmra.mxu0 %v2778
    %v2965 = vpop.f32.mrf.mxu0
    %v2966 = vadd.f32 0.0, %v2965
    %v2967 = vpop.f32.mrf.mxu0
    %v2968 = vadd.f32 0.0, %v2967
    %2969 = vmatmul.bf16.gmra.mxu0 %v2780
    %v2970 = vpop.f32.mrf.mxu0
    %v2971 = vadd.f32 0.0, %v2970
    %v2972 = vpop.f32.mrf.mxu0
    %v2973 = vadd.f32 0.0, %v2972
    %2974 = vmatmul.bf16.gmra.mxu0 %v2782
    %v2975 = vpop.f32.mrf.mxu0
    %v2976 = vadd.f32 0.0, %v2975
    %v2977 = vpop.f32.mrf.mxu0
    %v2978 = vadd.f32 0.0, %v2977
    %2979 = vmatmul.bf16.gmra.mxu0 %v2784
    %v2980 = vpop.f32.mrf.mxu0
    %v2981 = vadd.f32 0.0, %v2980
    %v2982 = vpop.f32.mrf.mxu0
    %v2983 = vadd.f32 0.0, %v2982
    %2984 = vmatmul.bf16.gmra.mxu0 %v2786
    %v2985 = vpop.f32.mrf.mxu0
    %v2986 = vadd.f32 0.0, %v2985
    %v2987 = vpop.f32.mrf.mxu0
    %v2988 = vadd.f32 0.0, %v2987
    %2989 = vmatmul.bf16.gmra.mxu0 %v2788
    %v2990 = vpop.f32.mrf.mxu0
    %v2991 = vadd.f32 0.0, %v2990
    %v2992 = vpop.f32.mrf.mxu0
    %v2993 = vadd.f32 0.0, %v2992
    %2994 = vmatmul.bf16.gmra.mxu0 %v2790
    %v2995 = vpop.f32.mrf.mxu0
    %v2996 = vadd.f32 0.0, %v2995
    %v2997 = vpop.f32.mrf.mxu0
    %v2998 = vadd.f32 0.0, %v2997
    %2999 = vmatmul.bf16.gmra.mxu0 %v2792
    %v3000 = vpop.f32.mrf.mxu0
    %v3001 = vadd.f32 0.0, %v3000
    %v3002 = vpop.f32.mrf.mxu0
    %v3003 = vadd.f32 0.0, %v3002
    %3004 = vmatmul.bf16.gmra.mxu0 %v2794
    %v3005 = vpop.f32.mrf.mxu0
    %v3006 = vadd.f32 0.0, %v3005
    %v3007 = vpop.f32.mrf.mxu0
    %v3008 = vadd.f32 0.0, %v3007
    %3009 = vmatmul.bf16.gmra.mxu0 %v2796
    %v3010 = vpop.f32.mrf.mxu0
    %v3011 = vadd.f32 0.0, %v3010
    %v3012 = vpop.f32.mrf.mxu0
    %v3013 = vadd.f32 0.0, %v3012
    %3014 = vdwg.mxu0
    %3015 = vmatpush.bf16.msra.mxu0 %v2909
    %3016 = vmatpush.bf16.msra.mxu0 %v2908
    %3017 = vmatpush.bf16.msra.mxu0 %v2907
    %3018 = vmatpush.bf16.msra.mxu0 %v2906
    %3019 = vmatpush.bf16.msra.mxu0 %v2905
    %3020 = vmatpush.bf16.msra.mxu0 %v2904
    %3021 = vmatpush.bf16.msra.mxu0 %v2903
    %3022 = vmatpush.bf16.msra.mxu0 %v2902
    %3023 = vmatmul.bf16.gmra.mxu0 %v2767
    %v3024 = vpop.f32.mrf.mxu0
    %v3025 = vadd.f32 %v2936, %v3024
    %v3026 = vpop.f32.mrf.mxu0
    %v3027 = vadd.f32 %v2938, %v3026
    %3028 = vmatmul.bf16.gmra.mxu0 %v2769
    %v3029 = vpop.f32.mrf.mxu0
    %v3030 = vadd.f32 %v2941, %v3029
    %v3031 = vpop.f32.mrf.mxu0
    %v3032 = vadd.f32 %v2943, %v3031
    %3033 = vmatmul.bf16.gmra.mxu0 %v2771
    %v3034 = vpop.f32.mrf.mxu0
    %v3035 = vadd.f32 %v2946, %v3034
    %v3036 = vpop.f32.mrf.mxu0
    %v3037 = vadd.f32 %v2948, %v3036
    %3038 = vmatmul.bf16.gmra.mxu0 %v2773
    %v3039 = vpop.f32.mrf.mxu0
    %v3040 = vadd.f32 %v2951, %v3039
    %v3041 = vpop.f32.mrf.mxu0
    %v3042 = vadd.f32 %v2953, %v3041
    %3043 = vmatmul.bf16.gmra.mxu0 %v2775
    %v3044 = vpop.f32.mrf.mxu0
    %v3045 = vadd.f32 %v2956, %v3044
    %v3046 = vpop.f32.mrf.mxu0
    %v3047 = vadd.f32 %v2958, %v3046
    %3048 = vmatmul.bf16.gmra.mxu0 %v2777
    %v3049 = vpop.f32.mrf.mxu0
    %v3050 = vadd.f32 %v2961, %v3049
    %v3051 = vpop.f32.mrf.mxu0
    %v3052 = vadd.f32 %v2963, %v3051
    %3053 = vmatmul.bf16.gmra.mxu0 %v2779
    %v3054 = vpop.f32.mrf.mxu0
    %v3055 = vadd.f32 %v2966, %v3054
    %v3056 = vpop.f32.mrf.mxu0
    %v3057 = vadd.f32 %v2968, %v3056
    %3058 = vmatmul.bf16.gmra.mxu0 %v2781
    %v3059 = vpop.f32.mrf.mxu0
    %v3060 = vadd.f32 %v2971, %v3059
    %v3061 = vpop.f32.mrf.mxu0
    %v3062 = vadd.f32 %v2973, %v3061
    %3063 = vmatmul.bf16.gmra.mxu0 %v2783
    %v3064 = vpop.f32.mrf.mxu0
    %v3065 = vadd.f32 %v2976, %v3064
    %v3066 = vpop.f32.mrf.mxu0
    %v3067 = vadd.f32 %v2978, %v3066
    %3068 = vmatmul.bf16.gmra.mxu0 %v2785
    %v3069 = vpop.f32.mrf.mxu0
    %v3070 = vadd.f32 %v2981, %v3069
    %v3071 = vpop.f32.mrf.mxu0
    %v3072 = vadd.f32 %v2983, %v3071
    %3073 = vmatmul.bf16.gmra.mxu0 %v2787
    %v3074 = vpop.f32.mrf.mxu0
    %v3075 = vadd.f32 %v2986, %v3074
    %v3076 = vpop.f32.mrf.mxu0
    %v3077 = vadd.f32 %v2988, %v3076
    %3078 = vmatmul.bf16.gmra.mxu0 %v2789
    %v3079 = vpop.f32.mrf.mxu0
    %v3080 = vadd.f32 %v2991, %v3079
    %v3081 = vpop.f32.mrf.mxu0
    %v3082 = vadd.f32 %v2993, %v3081
    %3083 = vmatmul.bf16.gmra.mxu0 %v2791
    %v3084 = vpop.f32.mrf.mxu0
    %v3085 = vadd.f32 %v2996, %v3084
    %v3086 = vpop.f32.mrf.mxu0
    %v3087 = vadd.f32 %v2998, %v3086
    %3088 = vmatmul.bf16.gmra.mxu0 %v2793
    %v3089 = vpop.f32.mrf.mxu0
    %v3090 = vadd.f32 %v3001, %v3089
    %v3091 = vpop.f32.mrf.mxu0
    %v3092 = vadd.f32 %v3003, %v3091
    %3093 = vmatmul.bf16.gmra.mxu0 %v2795
    %v3094 = vpop.f32.mrf.mxu0
    %v3095 = vadd.f32 %v3006, %v3094
    %v3096 = vpop.f32.mrf.mxu0
    %v3097 = vadd.f32 %v3008, %v3096
    %3098 = vmatmul.bf16.gmra.mxu0 %v2797
    %v3099 = vpop.f32.mrf.mxu0
    %v3100 = vadd.f32 %v3011, %v3099
    %v3101 = vpop.f32.mrf.mxu0
    %v3102 = vadd.f32 %v3013, %v3101
    %3103 = vdwg.mxu0
    %v3104 = vadd.f32 %v3025, %v3027
    %v3105 = vadd.f32 %v3104, %v3030
    %v3106 = vadd.f32 %v3105, %v3032
    %v3107 = vadd.f32 %v3106, %v3035
    %v3108 = vadd.f32 %v3107, %v3037
    %v3109 = vadd.f32 %v3108, %v3040
    %v3110 = vadd.f32 %v3109, %v3042
    %v3111 = vadd.f32 %v3110, %v3045
    %v3112 = vadd.f32 %v3111, %v3047
    %v3113 = vadd.f32 %v3112, %v3050
    %v3114 = vadd.f32 %v3113, %v3052
    %v3115 = vadd.f32 %v3114, %v3055
    %v3116 = vadd.f32 %v3115, %v3057
    %v3117 = vadd.f32 %v3116, %v3060
    %v3118 = vadd.f32 %v3117, %v3062
    %v3119 = vadd.f32 %v3118, %v3065
    %v3120 = vadd.f32 %v3119, %v3067
    %v3121 = vadd.f32 %v3120, %v3070
    %v3122 = vadd.f32 %v3121, %v3072
    %v3123 = vadd.f32 %v3122, %v3075
    %v3124 = vadd.f32 %v3123, %v3077
    %v3125 = vadd.f32 %v3124, %v3080
    %v3126 = vadd.f32 %v3125, %v3082
    %v3127 = vadd.f32 %v3126, %v3085
    %v3128 = vadd.f32 %v3127, %v3087
    %v3129 = vadd.f32 %v3128, %v3090
    %v3130 = vadd.f32 %v3129, %v3092
    %v3131 = vadd.f32 %v3130, %v3095
    %v3132 = vadd.f32 %v3131, %v3097
    %v3133 = vadd.f32 %v3132, %v3100
    %v3134 = vadd.f32 %v3133, %v3102
    %v3135 = vrot.slane %v3134, 4
    %v3136 = vadd.f32 %v3134, %v3135
    %v3137 = vrot.slane %v3136, 2
    %v3138 = vadd.f32 %v3136, %v3137
    %v3139 = vrot.slane %v3138, 1
    %v3140 = vadd.f32 %v3138, %v3139
    %v3141 = vmul.f32 %v3140, 0.00390625
    %v3142 = vsub.f32 %v3025, %v3141
    %v3143 = vsub.f32 %v3027, %v3141
    %v3144 = vsub.f32 %v3030, %v3141
    %v3145 = vsub.f32 %v3032, %v3141
    %v3146 = vsub.f32 %v3035, %v3141
    %v3147 = vsub.f32 %v3037, %v3141
    %v3148 = vsub.f32 %v3040, %v3141
    %v3149 = vsub.f32 %v3042, %v3141
    %v3150 = vsub.f32 %v3045, %v3141
    %v3151 = vsub.f32 %v3047, %v3141
    %v3152 = vsub.f32 %v3050, %v3141
    %v3153 = vsub.f32 %v3052, %v3141
    %v3154 = vsub.f32 %v3055, %v3141
    %v3155 = vsub.f32 %v3057, %v3141
    %v3156 = vsub.f32 %v3060, %v3141
    %v3157 = vsub.f32 %v3062, %v3141
    %v3158 = vsub.f32 %v3065, %v3141
    %v3159 = vsub.f32 %v3067, %v3141
    %v3160 = vsub.f32 %v3070, %v3141
    %v3161 = vsub.f32 %v3072, %v3141
    %v3162 = vsub.f32 %v3075, %v3141
    %v3163 = vsub.f32 %v3077, %v3141
    %v3164 = vsub.f32 %v3080, %v3141
    %v3165 = vsub.f32 %v3082, %v3141
    %v3166 = vsub.f32 %v3085, %v3141
    %v3167 = vsub.f32 %v3087, %v3141
    %v3168 = vsub.f32 %v3090, %v3141
    %v3169 = vsub.f32 %v3092, %v3141
    %v3170 = vsub.f32 %v3095, %v3141
    %v3171 = vsub.f32 %v3097, %v3141
    %v3172 = vsub.f32 %v3100, %v3141
    %v3173 = vsub.f32 %v3102, %v3141
    %v3174 = vmul.f32 %v3142, %v3142
    %v3175 = vmul.f32 %v3143, %v3143
    %v3176 = vmul.f32 %v3144, %v3144
    %v3177 = vmul.f32 %v3145, %v3145
    %v3178 = vmul.f32 %v3146, %v3146
    %v3179 = vmul.f32 %v3147, %v3147
    %v3180 = vmul.f32 %v3148, %v3148
    %v3181 = vmul.f32 %v3149, %v3149
    %v3182 = vmul.f32 %v3150, %v3150
    %v3183 = vmul.f32 %v3151, %v3151
    %v3184 = vmul.f32 %v3152, %v3152
    %v3185 = vmul.f32 %v3153, %v3153
    %v3186 = vmul.f32 %v3154, %v3154
    %v3187 = vmul.f32 %v3155, %v3155
    %v3188 = vmul.f32 %v3156, %v3156
    %v3189 = vmul.f32 %v3157, %v3157
    %v3190 = vmul.f32 %v3158, %v3158
    %v3191 = vmul.f32 %v3159, %v3159
    %v3192 = vmul.f32 %v3160, %v3160
    %v3193 = vmul.f32 %v3161, %v3161
    %v3194 = vmul.f32 %v3162, %v3162
    %v3195 = vmul.f32 %v3163, %v3163
    %v3196 = vmul.f32 %v3164, %v3164
    %v3197 = vmul.f32 %v3165, %v3165
    %v3198 = vmul.f32 %v3166, %v3166
    %v3199 = vmul.f32 %v3167, %v3167
    %v3200 = vmul.f32 %v3168, %v3168
    %v3201 = vmul.f32 %v3169, %v3169
    %v3202 = vmul.f32 %v3170, %v3170
    %v3203 = vmul.f32 %v3171, %v3171
    %v3204 = vmul.f32 %v3172, %v3172
    %v3205 = vmul.f32 %v3173, %v3173
    %v3206 = vadd.f32 %v3174, %v3175
    %v3207 = vadd.f32 %v3206, %v3176
    %v3208 = vadd.f32 %v3207, %v3177
    %v3209 = vadd.f32 %v3208, %v3178
    %v3210 = vadd.f32 %v3209, %v3179
    %v3211 = vadd.f32 %v3210, %v3180
    %v3212 = vadd.f32 %v3211, %v3181
    %v3213 = vadd.f32 %v3212, %v3182
    %v3214 = vadd.f32 %v3213, %v3183
    %v3215 = vadd.f32 %v3214, %v3184
    %v3216 = vadd.f32 %v3215, %v3185
    %v3217 = vadd.f32 %v3216, %v3186
    %v3218 = vadd.f32 %v3217, %v3187
    %v3219 = vadd.f32 %v3218, %v3188
    %v3220 = vadd.f32 %v3219, %v3189
    %v3221 = vadd.f32 %v3220, %v3190
    %v3222 = vadd.f32 %v3221, %v3191
    %v3223 = vadd.f32 %v3222, %v3192
    %v3224 = vadd.f32 %v3223, %v3193
    %v3225 = vadd.f32 %v3224, %v3194
    %v3226 = vadd.f32 %v3225, %v3195
    %v3227 = vadd.f32 %v3226, %v3196
    %v3228 = vadd.f32 %v3227, %v3197
    %v3229 = vadd.f32 %v3228, %v3198
    %v3230 = vadd.f32 %v3229, %v3199
    %v3231 = vadd.f32 %v3230, %v3200
    %v3232 = vadd.f32 %v3231, %v3201
    %v3233 = vadd.f32 %v3232, %v3202
    %v3234 = vadd.f32 %v3233, %v3203
    %v3235 = vadd.f32 %v3234, %v3204
    %v3236 = vadd.f32 %v3235, %v3205
    %v3237 = vrot.slane %v3236, 4
    %v3238 = vadd.f32 %v3236, %v3237
    %v3239 = vrot.slane %v3238, 2
    %v3240 = vadd.f32 %v3238, %v3239
    %v3241 = vrot.slane %v3240, 1
    %v3242 = vadd.f32 %v3240, %v3241
    %v3243 = vmul.f32 %v3242, 0.00390625
    %v3244 = vld [vmem:[%s5] sm:$0x1]
    %v3245 = vadd.f32 %v3243, 1e-05
    %v3246 = vrsqrt.pop %v3245
    %v3247 = vmul.f32 %v3246, %v3245
    %v3248 = vmul.f32 %v3247, %v3246
    %v3249 = vmul.f32 0.5, %v3248
    %v3250 = vsub.f32 1.5, %v3249
    %v3251 = vmul.f32 %v3246, %v3250
    %vm3252 = vweird.f32 %v3245
    %vm3253 = vweird.f32 %v3246
    %vm3254 = vmor %vm3252, %vm3253
    %v3255 = vsel %vm3254, %v3246, %v3251
    %v3256 = vmul.f32 %v3244, %v3255
    %v3258 = vperm.slane %v3256, 0
    %v3260 = vmul.f32 %v3142, %v3258
    %v3261 = vmul.f32 %v3143, %v3258
    %v3262 = vmul.f32 %v3144, %v3258
    %v3263 = vmul.f32 %v3145, %v3258
    %v3264 = vmul.f32 %v3146, %v3258
    %v3265 = vmul.f32 %v3147, %v3258
    %v3266 = vmul.f32 %v3148, %v3258
    %v3267 = vmul.f32 %v3149, %v3258
    %v3268 = vmul.f32 %v3150, %v3258
    %v3269 = vmul.f32 %v3151, %v3258
    %v3270 = vmul.f32 %v3152, %v3258
    %v3271 = vmul.f32 %v3153, %v3258
    %v3272 = vmul.f32 %v3154, %v3258
    %v3273 = vmul.f32 %v3155, %v3258
    %v3274 = vmul.f32 %v3156, %v3258
    %v3275 = vmul.f32 %v3157, %v3258
    %v3276 = vmul.f32 %v3158, %v3258
    %v3277 = vmul.f32 %v3159, %v3258
    %v3278 = vmul.f32 %v3160, %v3258
    %v3279 = vmul.f32 %v3161, %v3258
    %v3280 = vmul.f32 %v3162, %v3258
    %v3281 = vmul.f32 %v3163, %v3258
    %v3282 = vmul.f32 %v3164, %v3258
    %v3283 = vmul.f32 %v3165, %v3258
    %v3284 = vmul.f32 %v3166, %v3258
    %v3285 = vmul.f32 %v3167, %v3258
    %v3286 = vmul.f32 %v3168, %v3258
    %v3287 = vmul.f32 %v3169, %v3258
    %v3288 = vmul.f32 %v3170, %v3258
    %v3289 = vmul.f32 %v3171, %v3258
    %v3290 = vmul.f32 %v3172, %v3258
    %v3291 = vmul.f32 %v3173, %v3258
    %v3292 = vld [vmem:[%s6] sm:$0x1]
    %v3294 = vperm.slane %v3292, 0
    %v3296 = vadd.f32 %v3260, %v3294
    %v3297 = vadd.f32 %v3261, %v3294
    %v3298 = vadd.f32 %v3262, %v3294
    %v3299 = vadd.f32 %v3263, %v3294
    %v3300 = vadd.f32 %v3264, %v3294
    %v3301 = vadd.f32 %v3265, %v3294
    %v3302 = vadd.f32 %v3266, %v3294
    %v3303 = vadd.f32 %v3267, %v3294
    %v3304 = vadd.f32 %v3268, %v3294
    %v3305 = vadd.f32 %v3269, %v3294
    %v3306 = vadd.f32 %v3270, %v3294
    %v3307 = vadd.f32 %v3271, %v3294
    %v3308 = vadd.f32 %v3272, %v3294
    %v3309 = vadd.f32 %v3273, %v3294
    %v3310 = vadd.f32 %v3274, %v3294
    %v3311 = vadd.f32 %v3275, %v3294
    %v3312 = vadd.f32 %v3276, %v3294
    %v3313 = vadd.f32 %v3277, %v3294
    %v3314 = vadd.f32 %v3278, %v3294
    %v3315 = vadd.f32 %v3279, %v3294
    %v3316 = vadd.f32 %v3280, %v3294
    %v3317 = vadd.f32 %v3281, %v3294
    %v3318 = vadd.f32 %v3282, %v3294
    %v3319 = vadd.f32 %v3283, %v3294
    %v3320 = vadd.f32 %v3284, %v3294
    %v3321 = vadd.f32 %v3285, %v3294
    %v3322 = vadd.f32 %v3286, %v3294
    %v3323 = vadd.f32 %v3287, %v3294
    %v3324 = vadd.f32 %v3288, %v3294
    %v3325 = vadd.f32 %v3289, %v3294
    %v3326 = vadd.f32 %v3290, %v3294
    %v3327 = vadd.f32 %v3291, %v3294
    %v3328 = vmax.f32 %v3296, 0.0
    %v3329 = vmax.f32 %v3297, 0.0
    %v3330 = vmax.f32 %v3298, 0.0
    %v3331 = vmax.f32 %v3299, 0.0
    %v3332 = vmax.f32 %v3300, 0.0
    %v3333 = vmax.f32 %v3301, 0.0
    %v3334 = vmax.f32 %v3302, 0.0
    %v3335 = vmax.f32 %v3303, 0.0
    %v3336 = vmax.f32 %v3304, 0.0
    %v3337 = vmax.f32 %v3305, 0.0
    %v3338 = vmax.f32 %v3306, 0.0
    %v3339 = vmax.f32 %v3307, 0.0
    %v3340 = vmax.f32 %v3308, 0.0
    %v3341 = vmax.f32 %v3309, 0.0
    %v3342 = vmax.f32 %v3310, 0.0
    %v3343 = vmax.f32 %v3311, 0.0
    %v3344 = vmax.f32 %v3312, 0.0
    %v3345 = vmax.f32 %v3313, 0.0
    %v3346 = vmax.f32 %v3314, 0.0
    %v3347 = vmax.f32 %v3315, 0.0
    %v3348 = vmax.f32 %v3316, 0.0
    %v3349 = vmax.f32 %v3317, 0.0
    %v3350 = vmax.f32 %v3318, 0.0
    %v3351 = vmax.f32 %v3319, 0.0
    %v3352 = vmax.f32 %v3320, 0.0
    %v3353 = vmax.f32 %v3321, 0.0
    %v3354 = vmax.f32 %v3322, 0.0
    %v3355 = vmax.f32 %v3323, 0.0
    %v3356 = vmax.f32 %v3324, 0.0
    %v3357 = vmax.f32 %v3325, 0.0
    %v3358 = vmax.f32 %v3326, 0.0
    %v3359 = vmax.f32 %v3327, 0.0
    %v3360 = vpack.c.bf16 %v3329, %v3328
    %v3361 = vpack.c.bf16 %v3331, %v3330
    %v3362 = vpack.c.bf16 %v3333, %v3332
    %v3363 = vpack.c.bf16 %v3335, %v3334
    %v3364 = vpack.c.bf16 %v3337, %v3336
    %v3365 = vpack.c.bf16 %v3339, %v3338
    %v3366 = vpack.c.bf16 %v3341, %v3340
    %v3367 = vpack.c.bf16 %v3343, %v3342
    %v3368 = vpack.c.bf16 %v3345, %v3344
    %v3369 = vpack.c.bf16 %v3347, %v3346
    %v3370 = vpack.c.bf16 %v3349, %v3348
    %v3371 = vpack.c.bf16 %v3351, %v3350
    %v3372 = vpack.c.bf16 %v3353, %v3352
    %v3373 = vpack.c.bf16 %v3355, %v3354
    %v3374 = vpack.c.bf16 %v3357, %v3356
    %v3375 = vpack.c.bf16 %v3359, %v3358
    %v3376 = vld [vmem:[%s7] sm:$0xf]
    %v3377 = vld [vmem:[%s7 + $0x4] sm:$0xf]
    %v3378 = vld [vmem:[%s7 + $0x8] sm:$0xf]
    %v3379 = vld [vmem:[%s7 + $0xc] sm:$0xf]
    %v3380 = vld [vmem:[%s7 + $0x10] sm:$0xf]
    %v3381 = vld [vmem:[%s7 + $0x14] sm:$0xf]
    %v3382 = vld [vmem:[%s7 + $0x18] sm:$0xf]
    %v3383 = vld [vmem:[%s7 + $0x1c] sm:$0xf]
    %v3384 = vld [vmem:[%s7 + $0x20] sm:$0xf]
    %v3385 = vld [vmem:[%s7 + $0x24] sm:$0xf]
    %v3386 = vld [vmem:[%s7 + $0x28] sm:$0xf]
    %v3387 = vld [vmem:[%s7 + $0x2c] sm:$0xf]
    %v3388 = vld [vmem:[%s7 + $0x30] sm:$0xf]
    %v3389 = vld [vmem:[%s7 + $0x34] sm:$0xf]
    %v3390 = vld [vmem:[%s7 + $0x38] sm:$0xf]
    %v3391 = vld [vmem:[%s7 + $0x3c] sm:$0xf]
    %v3392 = vld [vmem:[%s8] sm:$0x1]
    %v3394 = vperm.slane %v3392, 0
    %v3412 = vunpack.c.l.b16 %v3376
    %v3413 = vunpack.c.l.b16 %v3377
    %v3414 = vunpack.c.l.b16 %v3378
    %v3415 = vunpack.c.l.b16 %v3379
    %v3416 = vunpack.c.l.b16 %v3380
    %v3417 = vunpack.c.l.b16 %v3381
    %v3418 = vunpack.c.l.b16 %v3382
    %v3419 = vunpack.c.l.b16 %v3383
    %v3420 = vunpack.c.l.b16 %v3384
    %v3421 = vunpack.c.l.b16 %v3385
    %v3422 = vunpack.c.l.b16 %v3386
    %v3423 = vunpack.c.l.b16 %v3387
    %v3424 = vunpack.c.l.b16 %v3388
    %v3425 = vunpack.c.l.b16 %v3389
    %v3426 = vunpack.c.l.b16 %v3390
    %v3427 = vunpack.c.l.b16 %v3391
    %v3428 = vpack.c.b16 %v3413, %v3412
    %v3429 = vpack.c.b16 %v3415, %v3414
    %v3430 = vpack.c.b16 %v3417, %v3416
    %v3431 = vpack.c.b16 %v3419, %v3418
    %v3432 = vpack.c.b16 %v3421, %v3420
    %v3433 = vpack.c.b16 %v3423, %v3422
    %v3434 = vpack.c.b16 %v3425, %v3424
    %v3435 = vpack.c.b16 %v3427, %v3426
    %3444 = vmatpush.bf16.msra.mxu0 %v3435
    %3445 = vmatpush.bf16.msra.mxu0 %v3434
    %3446 = vmatpush.bf16.msra.mxu0 %v3433
    %3447 = vmatpush.bf16.msra.mxu0 %v3432
    %3448 = vmatpush.bf16.msra.mxu0 %v3431
    %3449 = vmatpush.bf16.msra.mxu0 %v3430
    %3450 = vmatpush.bf16.msra.mxu0 %v3429
    %3451 = vmatpush.bf16.msra.mxu0 %v3428
    %3452 = vmatmul.bf16.gmra.mxu0 %v3360
    %v3453 = vpop.f32.mrf.mxu0
    %v3454 = vadd.f32 %v3394, %v3453
    %v3455 = vpop.f32.mrf.mxu0
    %v3456 = vadd.f32 %v3394, %v3455
    %3457 = vmatmul.bf16.gmra.mxu0 %v3361
    %v3458 = vpop.f32.mrf.mxu0
    %v3459 = vadd.f32 %v3394, %v3458
    %v3460 = vpop.f32.mrf.mxu0
    %v3461 = vadd.f32 %v3394, %v3460
    %3462 = vmatmul.bf16.gmra.mxu0 %v3362
    %v3463 = vpop.f32.mrf.mxu0
    %v3464 = vadd.f32 %v3394, %v3463
    %v3465 = vpop.f32.mrf.mxu0
    %v3466 = vadd.f32 %v3394, %v3465
    %3467 = vmatmul.bf16.gmra.mxu0 %v3363
    %v3468 = vpop.f32.mrf.mxu0
    %v3469 = vadd.f32 %v3394, %v3468
    %v3470 = vpop.f32.mrf.mxu0
    %v3471 = vadd.f32 %v3394, %v3470
    %3472 = vmatmul.bf16.gmra.mxu0 %v3364
    %v3473 = vpop.f32.mrf.mxu0
    %v3474 = vadd.f32 %v3394, %v3473
    %v3475 = vpop.f32.mrf.mxu0
    %v3476 = vadd.f32 %v3394, %v3475
    %3477 = vmatmul.bf16.gmra.mxu0 %v3365
    %v3478 = vpop.f32.mrf.mxu0
    %v3479 = vadd.f32 %v3394, %v3478
    %v3480 = vpop.f32.mrf.mxu0
    %v3481 = vadd.f32 %v3394, %v3480
    %3482 = vmatmul.bf16.gmra.mxu0 %v3366
    %v3483 = vpop.f32.mrf.mxu0
    %v3484 = vadd.f32 %v3394, %v3483
    %v3485 = vpop.f32.mrf.mxu0
    %v3486 = vadd.f32 %v3394, %v3485
    %3487 = vmatmul.bf16.gmra.mxu0 %v3367
    %v3488 = vpop.f32.mrf.mxu0
    %v3489 = vadd.f32 %v3394, %v3488
    %v3490 = vpop.f32.mrf.mxu0
    %v3491 = vadd.f32 %v3394, %v3490
    %3492 = vmatmul.bf16.gmra.mxu0 %v3368
    %v3493 = vpop.f32.mrf.mxu0
    %v3494 = vadd.f32 %v3394, %v3493
    %v3495 = vpop.f32.mrf.mxu0
    %v3496 = vadd.f32 %v3394, %v3495
    %3497 = vmatmul.bf16.gmra.mxu0 %v3369
    %v3498 = vpop.f32.mrf.mxu0
    %v3499 = vadd.f32 %v3394, %v3498
    %v3500 = vpop.f32.mrf.mxu0
    %v3501 = vadd.f32 %v3394, %v3500
    %3502 = vmatmul.bf16.gmra.mxu0 %v3370
    %v3503 = vpop.f32.mrf.mxu0
    %v3504 = vadd.f32 %v3394, %v3503
    %v3505 = vpop.f32.mrf.mxu0
    %v3506 = vadd.f32 %v3394, %v3505
    %3507 = vmatmul.bf16.gmra.mxu0 %v3371
    %v3508 = vpop.f32.mrf.mxu0
    %v3509 = vadd.f32 %v3394, %v3508
    %v3510 = vpop.f32.mrf.mxu0
    %v3511 = vadd.f32 %v3394, %v3510
    %3512 = vmatmul.bf16.gmra.mxu0 %v3372
    %v3513 = vpop.f32.mrf.mxu0
    %v3514 = vadd.f32 %v3394, %v3513
    %v3515 = vpop.f32.mrf.mxu0
    %v3516 = vadd.f32 %v3394, %v3515
    %3517 = vmatmul.bf16.gmra.mxu0 %v3373
    %v3518 = vpop.f32.mrf.mxu0
    %v3519 = vadd.f32 %v3394, %v3518
    %v3520 = vpop.f32.mrf.mxu0
    %v3521 = vadd.f32 %v3394, %v3520
    %3522 = vmatmul.bf16.gmra.mxu0 %v3374
    %v3523 = vpop.f32.mrf.mxu0
    %v3524 = vadd.f32 %v3394, %v3523
    %v3525 = vpop.f32.mrf.mxu0
    %v3526 = vadd.f32 %v3394, %v3525
    %3527 = vmatmul.bf16.gmra.mxu0 %v3375
    %v3528 = vpop.f32.mrf.mxu0
    %v3529 = vadd.f32 %v3394, %v3528
    %v3530 = vpop.f32.mrf.mxu0
    %v3531 = vadd.f32 %v3394, %v3530
    %3532 = vdwg.mxu0
    %3533 = vst [vmem:[#allocation2] sm:$0xff] %v3454
    %3534 = vst [vmem:[#allocation2 + $0x8] sm:$0xff] %v3456
    %3535 = vst [vmem:[#allocation2 + $0x10] sm:$0xff] %v3459
    %3536 = vst [vmem:[#allocation2 + $0x18] sm:$0xff] %v3461
    %3537 = vst [vmem:[#allocation2 + $0x20] sm:$0xff] %v3464
    %3538 = vst [vmem:[#allocation2 + $0x28] sm:$0xff] %v3466
    %3539 = vst [vmem:[#allocation2 + $0x30] sm:$0xff] %v3469
    %3540 = vst [vmem:[#allocation2 + $0x38] sm:$0xff] %v3471
    %3541 = vst [vmem:[#allocation2 + $0x40] sm:$0xff] %v3474
    %3542 = vst [vmem:[#allocation2 + $0x48] sm:$0xff] %v3476
    %3543 = vst [vmem:[#allocation2 + $0x50] sm:$0xff] %v3479
    %3544 = vst [vmem:[#allocation2 + $0x58] sm:$0xff] %v3481
    %3545 = vst [vmem:[#allocation2 + $0x60] sm:$0xff] %v3484
    %3546 = vst [vmem:[#allocation2 + $0x68] sm:$0xff] %v3486
    %3547 = vst [vmem:[#allocation2 + $0x70] sm:$0xff] %v3489
    %3548 = vst [vmem:[#allocation2 + $0x78] sm:$0xff] %v3491
    %3549 = vst [vmem:[#allocation2 + $0x80] sm:$0xff] %v3494
    %3550 = vst [vmem:[#allocation2 + $0x88] sm:$0xff] %v3496
    %3551 = vst [vmem:[#allocation2 + $0x90] sm:$0xff] %v3499
    %3552 = vst [vmem:[#allocation2 + $0x98] sm:$0xff] %v3501
    %3553 = vst [vmem:[#allocation2 + $0xa0] sm:$0xff] %v3504
    %3554 = vst [vmem:[#allocation2 + $0xa8] sm:$0xff] %v3506
    %3555 = vst [vmem:[#allocation2 + $0xb0] sm:$0xff] %v3509
    %3556 = vst [vmem:[#allocation2 + $0xb8] sm:$0xff] %v3511
    %3557 = vst [vmem:[#allocation2 + $0xc0] sm:$0xff] %v3514
    %3558 = vst [vmem:[#allocation2 + $0xc8] sm:$0xff] %v3516
    %3559 = vst [vmem:[#allocation2 + $0xd0] sm:$0xff] %v3519
    %3560 = vst [vmem:[#allocation2 + $0xd8] sm:$0xff] %v3521
    %3561 = vst [vmem:[#allocation2 + $0xe0] sm:$0xff] %v3524
    %3562 = vst [vmem:[#allocation2 + $0xe8] sm:$0xff] %v3526
    %3563 = vst [vmem:[#allocation2 + $0xf0] sm:$0xff] %v3529
    %3564 = vst [vmem:[#allocation2 + $0xf8] sm:$0xff] %v3531
    // Predicated region
    $region38: #{tpu_custom_call.1} parent=1 // pred_check
      _
    $region39: #{tpu_custom_call.1} parent=1 // pred_check_branch
      %3566 = sbr.rel (0) target = $region41
    $region40: #{tpu_custom_call.1} parent=1 // pred_region
      %3568 = vsyncadd [#allocation3], 0
      %s3569 = sshll.u32 [#allocation2], 4
      %s3570 = int_to_ptr.vmem [resolvable:$true] %s3569
      %s3571 = sshll.u32 %s9, 4
      %s3572 = int_to_ptr.hbm [resolvable:$true] %s3571
      %3577 = dma.vmem_to_hbm [thread:$0]  %s3570, 4096, %s3572, [#allocation3], 128, 128, 8
    $region41: #{tpu_custom_call.1} parent=1 // pred_fallthru
      _
    // Predicated region
    $region42: #{tpu_custom_call.1} parent=1 // pred_check
      _
    $region43: #{tpu_custom_call.1} parent=1 // pred_check_branch
      %3579 = sbr.rel (0) target = $region45
    $region44: #{tpu_custom_call.1} parent=1 // pred_region
      %3581 = dma.done [#allocation3], 4096
    $region45: #{tpu_custom_call.1} parent=1 // pred_fallthru
      _
    %3582 = vsyncpa [#allocation3], 1

</llo_original>
